<compile_context>
chip_gen: v5e
topology: v5e:2x2
jax: 0.10.0
libtpu: 0.0.40
codegen_flags: <defaults>
</compile_context>

<pallas_src>
import functools

import jax
import jax.numpy as jnp
from jax.experimental import pallas as pl
from jax.experimental.pallas import tpu as pltpu

EPS = 1e-5
_MIB = 1024 * 1024
SPLIT = 2          # point-range split factor (megacore utilization for small B)


def _ceil_div(a, b):
    return -(-a // b)


def _hw_config():
    """Generation-aware (TN_MAX, scoped-VMEM budget)."""
    tn_max, vmem_limit = 1024, 32 * _MIB                  # v7x-safe default
    try:
        cap = getattr(pltpu.get_tpu_info(), "vmem_capacity_bytes", None)
        if cap is not None and cap >= 96 * _MIB:          # v5e / v6e (128 MiB)
            tn_max, vmem_limit = 2048, 64 * _MIB
    except Exception:
        pass
    return tn_max, vmem_limit


# ----------------------------------------------------------------------------
# Fused trunk kernel: conv1+relu -> conv2+relu -> conv3 -> running max over
# points.  BN scales are pre-folded into the weights; bn3 shift (+relu) is
# deferred to the last-step epilogue.
# grid = (split, B, tiles_per_split); first two axes "parallel", last
# "arbitrary" (reduction over point tiles).
# ----------------------------------------------------------------------------
def _trunk_max_kernel(x_ref, w1_ref, b1_ref, w2_ref, b2_ref, w3_ref, b3_ref,
                      o_ref, acc_ref, *, relu3, per_batch_w1):
    j = pl.program_id(2)

    @pl.when(j == 0)
    def _():
        acc_ref[...] = jnp.full_like(acc_ref, -jnp.inf)

    x = x_ref[0].astype(jnp.bfloat16)                       # (TN, Cin)
    w1 = w1_ref[0] if per_batch_w1 else w1_ref[...]         # (Cin, 64)

    # conv1 (+ folded BN scale, + folded 2x2 transform on the encoder pass)
    h = jnp.dot(x, w1, preferred_element_type=jnp.float32)
    h = jnp.maximum(h + b1_ref[...], 0.0)

    # conv2 (+ folded BN scale)
    h = jnp.dot(h.astype(jnp.bfloat16), w2_ref[...],
                preferred_element_type=jnp.float32)
    h = jnp.maximum(h + b2_ref[...], 0.0)

    # conv3 with the BN scale folded into w3; shift / ReLU deferred past max.
    h = jnp.dot(h.astype(jnp.bfloat16), w3_ref[...],
                preferred_element_type=jnp.float32)          # (TN, 1024)

    # Cross-vreg VPU maxes into 8 sublane rows; sublane collapse only at end.
    tn, cout = h.shape
    acc_ref[...] = jnp.maximum(acc_ref[...],
                               jnp.max(h.reshape(tn // 8, 8, cout), axis=0))

    @pl.when(j == pl.num_programs(2) - 1)
    def _():
        m = jnp.max(acc_ref[...], axis=0, keepdims=True) + b3_ref[...]
        if relu3:
            m = jnp.maximum(m, 0.0)
        o_ref[0] = m.astype(o_ref.dtype)


def trunk_max_pallas(x, w1, b1, w2, b2, w3, b3, *, relu3, tn, split, vmem_limit):
    """x: (B, Npad, Cin) f32.  w1: (Cin, 64) bf16 shared OR (B, Cin, 64) bf16
    per-batch (encoder pass with the 2x2 transform folded in).  w2: (64, 128)
    bf16, w3: (128, 1024) bf16, all with BN scales folded into their columns.
    b*: (1, C) f32 shifts.  Returns max-pooled features (B, 1024) f32."""
    bsz, n_pad, cin = x.shape
    per_batch_w1 = (w1.ndim == 3)
    c1 = w1.shape[-1]
    c2 = w2.shape[1]
    cout = w3.shape[1]
    tiles_per_split = n_pad // (tn * split)
    grid = (split, bsz, tiles_per_split)

    if per_batch_w1:
        w1_spec = pl.BlockSpec((1, cin, c1), lambda s, b, j: (b, 0, 0))
    else:
        w1_spec = pl.BlockSpec((cin, c1), lambda s, b, j: (0, 0))

    out = pl.pallas_call(
        functools.partial(_trunk_max_kernel, relu3=relu3,
                          per_batch_w1=per_batch_w1),
        out_shape=jax.ShapeDtypeStruct((bsz * split, 1, cout), jnp.float32),
        grid_spec=pltpu.PrefetchScalarGridSpec(
            num_scalar_prefetch=0,
            grid=grid,
            in_specs=[
                pl.BlockSpec((1, tn, cin),
                             lambda s, b, j, t=tiles_per_split: (b, s * t + j, 0)),
                w1_spec,                                        # conv1
                pl.BlockSpec((1, c1), lambda s, b, j: (0, 0)),  # bn1 shift
                pl.BlockSpec((c1, c2), lambda s, b, j: (0, 0)),  # conv2 (resident)
                pl.BlockSpec((1, c2), lambda s, b, j: (0, 0)),  # bn2 shift
                pl.BlockSpec((c2, cout), lambda s, b, j: (0, 0)),  # conv3 (resident)
                pl.BlockSpec((1, cout), lambda s, b, j: (0, 0)),  # bn3 shift
            ],
            out_specs=pl.BlockSpec((1, 1, cout),
                                   lambda s, b, j, sp=split: (b * sp + s, 0, 0)),
            scratch_shapes=[pltpu.VMEM((8, cout), jnp.float32)],
        ),
        compiler_params=pltpu.CompilerParams(
            dimension_semantics=("parallel", "parallel", "arbitrary"),
            vmem_limit_bytes=vmem_limit,
        ),
    )(x, w1, b1, w2, b2, w3, b3)

    if split > 1:
        return jnp.max(out.reshape(bsz, split, cout), axis=1)
    return out.reshape(bsz, cout)


# ----------------------------------------------------------------------------
# Fused STN FC tail: fc1+relu -> fc2+relu -> fc3 (+iden folded into its bias).
# BN4/BN5 scales are pre-folded into the weights.  Single pallas_call.
# ----------------------------------------------------------------------------
def _stn_fc_kernel(g_ref, w1_ref, b1_ref, w2_ref, b2_ref, w3_ref, b3_ref, o_ref):
    h = jnp.dot(g_ref[...].astype(jnp.bfloat16), w1_ref[...],
                preferred_element_type=jnp.float32)
    h = jnp.maximum(h + b1_ref[...], 0.0)
    h = jnp.dot(h.astype(jnp.bfloat16), w2_ref[...],
                preferred_element_type=jnp.float32)
    h = jnp.maximum(h + b2_ref[...], 0.0)
    h = jnp.dot(h.astype(jnp.bfloat16), w3_ref[...],
                preferred_element_type=jnp.float32)
    o_ref[...] = (h + b3_ref[...]).astype(o_ref.dtype)


def stn_fc_pallas(g, w1, b1, w2, b2, w3, b3, *, vmem_limit):
    # TODO(synk): if B ever gets large, tile over B rows and lane-pad the 4-wide
    # output; negligible at small batch.
    bsz = g.shape[0]
    kout = w3.shape[1]
    return pl.pallas_call(
        _stn_fc_kernel,
        out_shape=jax.ShapeDtypeStruct((bsz, kout), jnp.float32),
        compiler_params=pltpu.CompilerParams(vmem_limit_bytes=vmem_limit),
    )(g, w1, b1, w2, b2, w3, b3)


# ----------------------------------------------------------------------------
# Parameters (deterministic, synthetic) and eval-mode BN folding
# ----------------------------------------------------------------------------
def _dense_init(key, cin, cout, scale=0.1):
    kw, kb = jax.random.split(key)
    w = scale * jax.random.normal(kw, (cin, cout), jnp.float32)
    b = scale * jax.random.normal(kb, (cout,), jnp.float32)
    return (w, b)


def _bn_init(key, c):
    k1, k2, k3, k4 = jax.random.split(key, 4)
    gamma = 1.0 + 0.1 * jax.random.normal(k1, (c,), jnp.float32)
    beta = 0.1 * jax.random.normal(k2, (c,), jnp.float32)
    mean = 0.1 * jax.random.normal(k3, (c,), jnp.float32)
    var = 0.5 + jax.random.uniform(k4, (c,), jnp.float32)
    return (gamma, beta, mean, var)


def init_params(key, channel):
    keys = jax.random.split(key, 18)
    p = {}
    # STN3d
    p["stn_conv1"] = _dense_init(keys[0], channel, 64)
    p["stn_conv2"] = _dense_init(keys[1], 64, 128)
    p["stn_conv3"] = _dense_init(keys[2], 128, 1024)
    p["stn_fc1"] = _dense_init(keys[3], 1024, 512)
    p["stn_fc2"] = _dense_init(keys[4], 512, 256)
    p["stn_fc3"] = _dense_init(keys[5], 256, 4)
    p["stn_bn1"] = _bn_init(keys[6], 64)
    p["stn_bn2"] = _bn_init(keys[7], 128)
    p["stn_bn3"] = _bn_init(keys[8], 1024)
    p["stn_bn4"] = _bn_init(keys[9], 512)
    p["stn_bn5"] = _bn_init(keys[10], 256)
    # PointNetEncoder trunk
    p["conv1"] = _dense_init(keys[11], channel, 64)
    p["conv2"] = _dense_init(keys[12], 64, 128)
    p["conv3"] = _dense_init(keys[13], 128, 1024)
    p["bn1"] = _bn_init(keys[14], 64)
    p["bn2"] = _bn_init(keys[15], 128)
    p["bn3"] = _bn_init(keys[16], 1024)
    return p


def _fold_bn_into_weight(wb, bn):
    """Fold conv/linear bias + eval-mode BN *scale* into the weight columns.
    Returns (w_eff (Cin, Cout) f32, shift (1, Cout) f32); the kernel epilogue
    is then just +shift (and ReLU)."""
    w, b = wb
    c = w.shape[1]
    if bn is None:
        return w, b.reshape(1, c)
    gamma, beta, mean, var = bn
    s = gamma / jnp.sqrt(var + EPS)
    w_eff = w * s.reshape(1, c)
    shift = (beta + (b - mean) * s).reshape(1, c)
    return w_eff, shift


def _prepare_points(xt, tn_max, split_max):
    """xt: (B, N, C).  Pick a balanced points tile (multiple of 8), choose the
    point-range split factor, and pad N (repeating the last point; max-pool is
    invariant to duplicates) so that Npad = split * tiles_per_split * tn."""
    bsz, n, c = xt.shape
    n_tiles = max(1, _ceil_div(n, tn_max))
    tn = _ceil_div(_ceil_div(n, n_tiles), 8) * 8
    n_tiles = _ceil_div(n, tn)
    split = split_max if n_tiles >= split_max else 1
    n_tiles = _ceil_div(n_tiles, split) * split
    n_pad = n_tiles * tn
    if n_pad != n:
        pad = jnp.broadcast_to(xt[:, -1:, :], (bsz, n_pad - n, c))
        xt = jnp.concatenate([xt, pad], axis=1)
    return xt, tn, split


# ----------------------------------------------------------------------------
# Forward (glue in plain JAX; heavy lifting in two fused Pallas kernels)
# ----------------------------------------------------------------------------
def pointnet_encoder(x, p):
    # x: (B, D, N) PyTorch NCW layout; global_feat=True, feature_transform=False.
    bsz, d, n = x.shape
    xt = jnp.transpose(x, (0, 2, 1))                        # (B, N, D)

    tn_max, vmem_limit = _hw_config()
    xt_pad, tn, split = _prepare_points(xt, tn_max, SPLIT)

    bf16 = jnp.bfloat16

    # ---------------- STN3d conv trunk + global max (shared conv1 weight) ----
    w1, b1 = _fold_bn_into_weight(p["stn_conv1"], p["stn_bn1"])
    w2, b2 = _fold_bn_into_weight(p["stn_conv2"], p["stn_bn2"])
    w3, b3 = _fold_bn_into_weight(p["stn_conv3"], p["stn_bn3"])
    g = trunk_max_pallas(xt_pad, w1.astype(bf16), b1,
                         w2.astype(bf16), b2, w3.astype(bf16), b3,
                         relu3=True, tn=tn, split=split,
                         vmem_limit=vmem_limit)             # (B, 1024)

    # ---------------- STN3d FC tail (iden folded into fc3 bias) --------------
    wf1, bf1 = _fold_bn_into_weight(p["stn_fc1"], p["stn_bn4"])
    wf2, bf2 = _fold_bn_into_weight(p["stn_fc2"], p["stn_bn5"])
    wf3, bias3 = p["stn_fc3"]
    iden = jnp.array([1.0, 0.0, 0.0, 1.0], jnp.float32)
    bias3 = (bias3 + iden).reshape(1, 4)
    trans = stn_fc_pallas(g, wf1.astype(bf16), bf1, wf2.astype(bf16), bf2,
                          wf3.astype(bf16), bias3,
                          vmem_limit=vmem_limit).reshape(bsz, 2, 2)

    # ---------------- encoder trunk: 2x2 transform folded into conv1 ---------
    # D == 2 here, so the "D > 3" feature-split branch of the reference is not
    # taken; torch.bmm(x, trans) followed by conv1 equals conv1 with per-batch
    # weights trans[b] @ W1.
    v1, u1 = _fold_bn_into_weight(p["conv1"], p["bn1"])
    v2, u2 = _fold_bn_into_weight(p["conv2"], p["bn2"])
    v3, u3 = _fold_bn_into_weight(p["conv3"], p["bn3"])
    v1_eff = jnp.einsum("bij,jk->bik", trans, v1).astype(bf16)   # (B, D, 64)
    gfeat = trunk_max_pallas(xt_pad, v1_eff, u1,
                             v2.astype(bf16), u2, v3.astype(bf16), u3,
                             relu3=False, tn=tn, split=split,
                             vmem_limit=vmem_limit)          # (B, 1024)

    return gfeat, trans, None                                # trans_feat is None


# ----------------------------------------------------------------------------
# Pure-JAX f32 reference (eval-mode BN), for a loose numeric sanity check.
# ----------------------------------------------------------------------------
def _bn_eval(h, bn):
    gamma, beta, mean, var = bn
    return (h - mean) / jnp.sqrt(var + EPS) * gamma + beta


def _reference_forward(x, p):
    bsz, d, n = x.shape
    xt = jnp.transpose(x, (0, 2, 1))

    def lin(h, wb):
        w, b = wb
        return h @ w + b

    h = jax.nn.relu(_bn_eval(lin(xt, p["stn_conv1"]), p["stn_bn1"]))
    h = jax.nn.relu(_bn_eval(lin(h, p["stn_conv2"]), p["stn_bn2"]))
    h = jax.nn.relu(_bn_eval(lin(h, p["stn_conv3"]), p["stn_bn3"]))
    g = jnp.max(h, axis=1)
    h = jax.nn.relu(_bn_eval(lin(g, p["stn_fc1"]), p["stn_bn4"]))
    h = jax.nn.relu(_bn_eval(lin(h, p["stn_fc2"]), p["stn_bn5"]))
    h = lin(h, p["stn_fc3"]) + jnp.array([1.0, 0.0, 0.0, 1.0], jnp.float32)
    trans = h.reshape(bsz, 2, 2)

    xt2 = jnp.einsum("bnd,bde->bne", xt, trans)
    h = jax.nn.relu(_bn_eval(lin(xt2, p["conv1"]), p["bn1"]))
    h = jax.nn.relu(_bn_eval(lin(h, p["conv2"]), p["bn2"]))
    h = _bn_eval(lin(h, p["conv3"]), p["bn3"])
    gfeat = jnp.max(h, axis=1)
    return gfeat, trans


# ----------------------------------------------------------------------------
if __name__ == "__main__":
    key = jax.random.PRNGKey(0)
    kx, kp = jax.random.split(key)

    B, C, N = 2, 2, 16
    x = jax.random.normal(kx, (B, C, N), jnp.float32)
    params = init_params(kp, channel=C)

    fwd = jax.jit(pointnet_encoder)
    global_feat, trans, trans_feat = fwd(x, params)
    jax.block_until_ready((global_feat, trans))

    assert global_feat.shape == (B, 1024) and global_feat.dtype == jnp.float32
    assert trans.shape == (B, 2, 2)
    assert trans_feat is None
    assert bool(jnp.all(jnp.isfinite(global_feat)))
    assert bool(jnp.all(jnp.isfinite(trans)))

    # Loose check vs f32 reference (kernels use bf16 matmuls, f32 accumulation).
    ref_g, ref_t = _reference_forward(x, params)
    assert jnp.allclose(trans, ref_t, atol=2e-1, rtol=1e-1), "trans mismatch"
    assert jnp.allclose(global_feat, ref_g, atol=2e-1, rtol=1e-1), "feat mismatch"

    print("KERNEL_OK")
</pallas_src>

<mosaic_0001>
module attributes {stable_mosaic.version = 11 : i64} {
  func.func @_trunk_max_kernel(%arg0: i32, %arg1: i32, %arg2: i32, %arg3: memref<1x16x2xf32, #tpu.memory_space<vmem>>, %arg4: memref<2x64xbf16, #tpu.memory_space<vmem>>, %arg5: memref<1x64xf32, #tpu.memory_space<vmem>>, %arg6: memref<64x128xbf16, #tpu.memory_space<vmem>>, %arg7: memref<1x128xf32, #tpu.memory_space<vmem>>, %arg8: memref<128x1024xbf16, #tpu.memory_space<vmem>>, %arg9: memref<1x1024xf32, #tpu.memory_space<vmem>>, %arg10: memref<1x1x1024xf32, #tpu.memory_space<vmem>>, %arg11: memref<8x1024xf32, #tpu.memory_space<vmem>>) attributes {dimension_semantics = [#tpu.dimension_semantics<parallel>, #tpu.dimension_semantics<parallel>, #tpu.dimension_semantics<arbitrary>], iteration_bounds = array<i64: 1, 2, 1>, scalar_prefetch = 0 : i64, scratch_operands = 1 : i64, tpu.core_type = #tpu.core_type<tc>, window_params = [{transform_indices = @transform_0, window_bounds = array<i64: 1, 16, 2>}, {pipeline_mode = #tpu.pipeline_mode<synchronous>, transform_indices = @transform_1, window_bounds = array<i64: 2, 64>}, {pipeline_mode = #tpu.pipeline_mode<synchronous>, transform_indices = @transform_2, window_bounds = array<i64: 1, 64>}, {pipeline_mode = #tpu.pipeline_mode<synchronous>, transform_indices = @transform_3, window_bounds = array<i64: 64, 128>}, {pipeline_mode = #tpu.pipeline_mode<synchronous>, transform_indices = @transform_4, window_bounds = array<i64: 1, 128>}, {pipeline_mode = #tpu.pipeline_mode<synchronous>, transform_indices = @transform_5, window_bounds = array<i64: 128, 1024>}, {pipeline_mode = #tpu.pipeline_mode<synchronous>, transform_indices = @transform_6, window_bounds = array<i64: 1, 1024>}, {transform_indices = @transform_7, window_bounds = array<i64: 1, 1, 1024>}]} {
    %c0_i32 = arith.constant 0 : i32
    %0 = arith.cmpi eq, %arg2, %c0_i32 : i32
    %1 = arith.extui %0 : i1 to i32
    %c0_i32_0 = arith.constant 0 : i32
    %2 = arith.cmpi ne, %1, %c0_i32_0 : i32
    scf.if %2 {
      %cst_24 = arith.constant 0xFF800000 : f32
      %32 = vector.broadcast %cst_24 : f32 to vector<8x1024xf32>
      %c0_25 = arith.constant 0 : index
      %c0_26 = arith.constant 0 : index
      %33 = vector.load %arg11[%c0_25, %c0_26] : memref<8x1024xf32, #tpu.memory_space<vmem>>, vector<8x1024xf32>
      tpu.vector_store %arg11[%c0_25, %c0_26], %32 {strides = array<i32>} : memref<8x1024xf32, #tpu.memory_space<vmem>>, vector<8x1024xf32>,
    } else {
    }
    %c0 = arith.constant 0 : index
    %c0_1 = arith.constant 0 : index
    %c0_2 = arith.constant 0 : index
    %3 = vector.load %arg3[%c0, %c0_1, %c0_2] : memref<1x16x2xf32, #tpu.memory_space<vmem>>, vector<1x16x2xf32>
    %4 = vector.shape_cast %3 : vector<1x16x2xf32> to vector<16x2xf32>
    %5 = arith.truncf %4 : vector<16x2xf32> to vector<16x2xbf16>
    %c0_3 = arith.constant 0 : index
    %c0_4 = arith.constant 0 : index
    %6 = vector.load %arg4[%c0_3, %c0_4] : memref<2x64xbf16, #tpu.memory_space<vmem>>, vector<2x64xbf16>
    %cst = arith.constant dense<0.000000e+00> : vector<16x64xf32>
    %7 = tpu.matmul %5, %6, %cst {dimension_numbers = #tpu.dot_dimension_numbers<[1], [0], [0], [1], [0, 0, 1, 1], [], []>} : vector<16x2xbf16>, vector<2x64xbf16>, vector<16x64xf32> -> vector<16x64xf32>
    %c0_5 = arith.constant 0 : index
    %c0_6 = arith.constant 0 : index
    %8 = vector.load %arg5[%c0_5, %c0_6] : memref<1x64xf32, #tpu.memory_space<vmem>>, vector<1x64xf32>
    %9 = vector.broadcast %8 : vector<1x64xf32> to vector<16x64xf32>
    %10 = arith.addf %7, %9 : vector<16x64xf32>
    %cst_7 = arith.constant 0.000000e+00 : f32
    %11 = vector.broadcast %cst_7 : f32 to vector<16x64xf32>
    %12 = arith.maximumf %10, %11 : vector<16x64xf32>
    %13 = arith.truncf %12 : vector<16x64xf32> to vector<16x64xbf16>
    %c0_8 = arith.constant 0 : index
    %c0_9 = arith.constant 0 : index
    %14 = vector.load %arg6[%c0_8, %c0_9] : memref<64x128xbf16, #tpu.memory_space<vmem>>, vector<64x128xbf16>
    %cst_10 = arith.constant dense<0.000000e+00> : vector<16x128xf32>
    %15 = tpu.matmul %13, %14, %cst_10 {dimension_numbers = #tpu.dot_dimension_numbers<[1], [0], [0], [1], [0, 0, 1, 1], [], []>} : vector<16x64xbf16>, vector<64x128xbf16>, vector<16x128xf32> -> vector<16x128xf32>
    %c0_11 = arith.constant 0 : index
    %c0_12 = arith.constant 0 : index
    %16 = vector.load %arg7[%c0_11, %c0_12] : memref<1x128xf32, #tpu.memory_space<vmem>>, vector<1x128xf32>
    %17 = vector.broadcast %16 : vector<1x128xf32> to vector<16x128xf32>
    %18 = arith.addf %15, %17 : vector<16x128xf32>
    %cst_13 = arith.constant 0.000000e+00 : f32
    %19 = vector.broadcast %cst_13 : f32 to vector<16x128xf32>
    %20 = arith.maximumf %18, %19 : vector<16x128xf32>
    %21 = arith.truncf %20 : vector<16x128xf32> to vector<16x128xbf16>
    %c0_14 = arith.constant 0 : index
    %c0_15 = arith.constant 0 : index
    %22 = vector.load %arg8[%c0_14, %c0_15] : memref<128x1024xbf16, #tpu.memory_space<vmem>>, vector<128x1024xbf16>
    %cst_16 = arith.constant dense<0.000000e+00> : vector<16x1024xf32>
    %23 = tpu.matmul %21, %22, %cst_16 {dimension_numbers = #tpu.dot_dimension_numbers<[1], [0], [0], [1], [0, 0, 1, 1], [], []>} : vector<16x128xbf16>, vector<128x1024xbf16>, vector<16x1024xf32> -> vector<16x1024xf32>
    %c0_17 = arith.constant 0 : index
    %c0_18 = arith.constant 0 : index
    %24 = vector.load %arg11[%c0_17, %c0_18] : memref<8x1024xf32, #tpu.memory_space<vmem>>, vector<8x1024xf32>
    %25 = vector.shape_cast %23 : vector<16x1024xf32> to vector<2x8x1024xf32>
    %cst_19 = arith.constant dense<0xFF800000> : vector<8x1024xf32>
    %26 = vector.multi_reduction <maximumf>, %25, %cst_19 [0] : vector<2x8x1024xf32> to vector<8x1024xf32>
    %27 = arith.maximumf %24, %26 : vector<8x1024xf32>
    %c0_20 = arith.constant 0 : index
    %c0_21 = arith.constant 0 : index
    %28 = vector.load %arg11[%c0_20, %c0_21] : memref<8x1024xf32, #tpu.memory_space<vmem>>, vector<8x1024xf32>
    tpu.vector_store %arg11[%c0_20, %c0_21], %27 {strides = array<i32>} : memref<8x1024xf32, #tpu.memory_space<vmem>>, vector<8x1024xf32>,
    %c0_i32_22 = arith.constant 0 : i32
    %29 = arith.cmpi eq, %arg2, %c0_i32_22 : i32
    %30 = arith.extui %29 : i1 to i32
    %c0_i32_23 = arith.constant 0 : i32
    %31 = arith.cmpi ne, %30, %c0_i32_23 : i32
    scf.if %31 {
      %c0_24 = arith.constant 0 : index
      %c0_25 = arith.constant 0 : index
      %32 = vector.load %arg11[%c0_24, %c0_25] : memref<8x1024xf32, #tpu.memory_space<vmem>>, vector<8x1024xf32>
      %cst_26 = arith.constant dense<0xFF800000> : vector<1024xf32>
      %33 = vector.multi_reduction <maximumf>, %32, %cst_26 [0] : vector<8x1024xf32> to vector<1024xf32>
      %34 = vector.shape_cast %33 : vector<1024xf32> to vector<1x1024xf32>
      %c0_27 = arith.constant 0 : index
      %c0_28 = arith.constant 0 : index
      %35 = vector.load %arg9[%c0_27, %c0_28] : memref<1x1024xf32, #tpu.memory_space<vmem>>, vector<1x1024xf32>
      %36 = arith.addf %34, %35 : vector<1x1024xf32>
      %cst_29 = arith.constant 0.000000e+00 : f32
      %37 = vector.broadcast %cst_29 : f32 to vector<1x1024xf32>
      %38 = arith.maximumf %36, %37 : vector<1x1024xf32>
      %c0_30 = arith.constant 0 : index
      %c0_31 = arith.constant 0 : index
      %c0_32 = arith.constant 0 : index
      %39 = vector.load %arg10[%c0_30, %c0_31, %c0_32] : memref<1x1x1024xf32, #tpu.memory_space<vmem>>, vector<1x1x1024xf32>
      %40 = vector.shape_cast %39 : vector<1x1x1024xf32> to vector<1x1024xf32>
      %41 = vector.shape_cast %38 : vector<1x1024xf32> to vector<1x1x1024xf32>
      tpu.vector_store %arg10[%c0_30, %c0_31, %c0_32], %41 {strides = array<i32>} : memref<1x1x1024xf32, #tpu.memory_space<vmem>>, vector<1x1x1024xf32>,
    } else {
    }
    return
  }
  func.func @transform_0(%arg0: i32, %arg1: i32, %arg2: i32) -> (i32, i32, i32) {
    %c1_i32 = arith.constant 1 : i32
    %0 = arith.muli %arg0, %c1_i32 : i32
    %1 = arith.addi %0, %arg2 : i32
    %c0_i32 = arith.constant 0 : i32
    %c0_i32_0 = arith.constant 0 : i32
    return %arg1, %1, %c0_i32 : i32, i32, i32
  }
  func.func @transform_1(%arg0: i32, %arg1: i32, %arg2: i32) -> (i32, i32) {
    %c0_i32 = arith.constant 0 : i32
    %c0_i32_0 = arith.constant 0 : i32
    %c0_i32_1 = arith.constant 0 : i32
    return %c0_i32, %c0_i32_0 : i32, i32
  }
  func.func @transform_2(%arg0: i32, %arg1: i32, %arg2: i32) -> (i32, i32) {
    %c0_i32 = arith.constant 0 : i32
    %c0_i32_0 = arith.constant 0 : i32
    %c0_i32_1 = arith.constant 0 : i32
    return %c0_i32, %c0_i32_0 : i32, i32
  }
  func.func @transform_3(%arg0: i32, %arg1: i32, %arg2: i32) -> (i32, i32) {
    %c0_i32 = arith.constant 0 : i32
    %c0_i32_0 = arith.constant 0 : i32
    %c0_i32_1 = arith.constant 0 : i32
    return %c0_i32, %c0_i32_0 : i32, i32
  }
  func.func @transform_4(%arg0: i32, %arg1: i32, %arg2: i32) -> (i32, i32) {
    %c0_i32 = arith.constant 0 : i32
    %c0_i32_0 = arith.constant 0 : i32
    %c0_i32_1 = arith.constant 0 : i32
    return %c0_i32, %c0_i32_0 : i32, i32
  }
  func.func @transform_5(%arg0: i32, %arg1: i32, %arg2: i32) -> (i32, i32) {
    %c0_i32 = arith.constant 0 : i32
    %c0_i32_0 = arith.constant 0 : i32
    %c0_i32_1 = arith.constant 0 : i32
    return %c0_i32, %c0_i32_0 : i32, i32
  }
  func.func @transform_6(%arg0: i32, %arg1: i32, %arg2: i32) -> (i32, i32) {
    %c0_i32 = arith.constant 0 : i32
    %c0_i32_0 = arith.constant 0 : i32
    %c0_i32_1 = arith.constant 0 : i32
    return %c0_i32, %c0_i32_0 : i32, i32
  }
  func.func @transform_7(%arg0: i32, %arg1: i32, %arg2: i32) -> (i32, i32, i32) {
    %c1_i32 = arith.constant 1 : i32
    %0 = arith.muli %arg1, %c1_i32 : i32
    %1 = arith.addi %0, %arg0 : i32
    %c0_i32 = arith.constant 0 : i32
    %c0_i32_0 = arith.constant 0 : i32
    %c0_i32_1 = arith.constant 0 : i32
    return %1, %c0_i32, %c0_i32_0 : i32, i32, i32
  }
}

module attributes {stable_mosaic.version = 11 : i64} {
  func.func @_stn_fc_kernel(%arg0: memref<2x1024xf32, #tpu.memory_space<vmem>>, %arg1: memref<1024x512xbf16, #tpu.memory_space<vmem>>, %arg2: memref<1x512xf32, #tpu.memory_space<vmem>>, %arg3: memref<512x256xbf16, #tpu.memory_space<vmem>>, %arg4: memref<1x256xf32, #tpu.memory_space<vmem>>, %arg5: memref<256x4xbf16, #tpu.memory_space<vmem>>, %arg6: memref<1x4xf32, #tpu.memory_space<vmem>>, %arg7: memref<2x4xf32, #tpu.memory_space<vmem>>) attributes {dimension_semantics = [], scalar_prefetch = 0 : i64, scratch_operands = 0 : i64, tpu.core_type = #tpu.core_type<tc>} {
    %c0 = arith.constant 0 : index
    %c0_0 = arith.constant 0 : index
    %0 = vector.load %arg0[%c0, %c0_0] : memref<2x1024xf32, #tpu.memory_space<vmem>>, vector<2x1024xf32>
    %1 = arith.truncf %0 : vector<2x1024xf32> to vector<2x1024xbf16>
    %c0_1 = arith.constant 0 : index
    %c0_2 = arith.constant 0 : index
    %2 = vector.load %arg1[%c0_1, %c0_2] : memref<1024x512xbf16, #tpu.memory_space<vmem>>, vector<1024x512xbf16>
    %cst = arith.constant dense<0.000000e+00> : vector<2x512xf32>
    %3 = tpu.matmul %1, %2, %cst {dimension_numbers = #tpu.dot_dimension_numbers<[1], [0], [0], [1], [0, 0, 1, 1], [], []>} : vector<2x1024xbf16>, vector<1024x512xbf16>, vector<2x512xf32> -> vector<2x512xf32>
    %c0_3 = arith.constant 0 : index
    %c0_4 = arith.constant 0 : index
    %4 = vector.load %arg2[%c0_3, %c0_4] : memref<1x512xf32, #tpu.memory_space<vmem>>, vector<1x512xf32>
    %5 = vector.broadcast %4 : vector<1x512xf32> to vector<2x512xf32>
    %6 = arith.addf %3, %5 : vector<2x512xf32>
    %cst_5 = arith.constant 0.000000e+00 : f32
    %7 = vector.broadcast %cst_5 : f32 to vector<2x512xf32>
    %8 = arith.maximumf %6, %7 : vector<2x512xf32>
    %9 = arith.truncf %8 : vector<2x512xf32> to vector<2x512xbf16>
    %c0_6 = arith.constant 0 : index
    %c0_7 = arith.constant 0 : index
    %10 = vector.load %arg3[%c0_6, %c0_7] : memref<512x256xbf16, #tpu.memory_space<vmem>>, vector<512x256xbf16>
    %cst_8 = arith.constant dense<0.000000e+00> : vector<2x256xf32>
    %11 = tpu.matmul %9, %10, %cst_8 {dimension_numbers = #tpu.dot_dimension_numbers<[1], [0], [0], [1], [0, 0, 1, 1], [], []>} : vector<2x512xbf16>, vector<512x256xbf16>, vector<2x256xf32> -> vector<2x256xf32>
    %c0_9 = arith.constant 0 : index
    %c0_10 = arith.constant 0 : index
    %12 = vector.load %arg4[%c0_9, %c0_10] : memref<1x256xf32, #tpu.memory_space<vmem>>, vector<1x256xf32>
    %13 = vector.broadcast %12 : vector<1x256xf32> to vector<2x256xf32>
    %14 = arith.addf %11, %13 : vector<2x256xf32>
    %cst_11 = arith.constant 0.000000e+00 : f32
    %15 = vector.broadcast %cst_11 : f32 to vector<2x256xf32>
    %16 = arith.maximumf %14, %15 : vector<2x256xf32>
    %17 = arith.truncf %16 : vector<2x256xf32> to vector<2x256xbf16>
    %c0_12 = arith.constant 0 : index
    %c0_13 = arith.constant 0 : index
    %18 = vector.load %arg5[%c0_12, %c0_13] : memref<256x4xbf16, #tpu.memory_space<vmem>>, vector<256x4xbf16>
    %cst_14 = arith.constant dense<0.000000e+00> : vector<2x4xf32>
    %19 = tpu.matmul %17, %18, %cst_14 {dimension_numbers = #tpu.dot_dimension_numbers<[1], [0], [0], [1], [0, 0, 1, 1], [], []>} : vector<2x256xbf16>, vector<256x4xbf16>, vector<2x4xf32> -> vector<2x4xf32>
    %c0_15 = arith.constant 0 : index
    %c0_16 = arith.constant 0 : index
    %20 = vector.load %arg6[%c0_15, %c0_16] : memref<1x4xf32, #tpu.memory_space<vmem>>, vector<1x4xf32>
    %21 = vector.broadcast %20 : vector<1x4xf32> to vector<2x4xf32>
    %22 = arith.addf %19, %21 : vector<2x4xf32>
    %c0_17 = arith.constant 0 : index
    %c0_18 = arith.constant 0 : index
    %23 = vector.load %arg7[%c0_17, %c0_18] : memref<2x4xf32, #tpu.memory_space<vmem>>, vector<2x4xf32>
    tpu.vector_store %arg7[%c0_17, %c0_18], %22 {strides = array<i32>} : memref<2x4xf32, #tpu.memory_space<vmem>>, vector<2x4xf32>,
    return
  }
}

module attributes {stable_mosaic.version = 11 : i64} {
  func.func @_trunk_max_kernel(%arg0: i32, %arg1: i32, %arg2: i32, %arg3: memref<1x16x2xf32, #tpu.memory_space<vmem>>, %arg4: memref<1x2x64xbf16, #tpu.memory_space<vmem>>, %arg5: memref<1x64xf32, #tpu.memory_space<vmem>>, %arg6: memref<64x128xbf16, #tpu.memory_space<vmem>>, %arg7: memref<1x128xf32, #tpu.memory_space<vmem>>, %arg8: memref<128x1024xbf16, #tpu.memory_space<vmem>>, %arg9: memref<1x1024xf32, #tpu.memory_space<vmem>>, %arg10: memref<1x1x1024xf32, #tpu.memory_space<vmem>>, %arg11: memref<8x1024xf32, #tpu.memory_space<vmem>>) attributes {dimension_semantics = [#tpu.dimension_semantics<parallel>, #tpu.dimension_semantics<parallel>, #tpu.dimension_semantics<arbitrary>], iteration_bounds = array<i64: 1, 2, 1>, scalar_prefetch = 0 : i64, scratch_operands = 1 : i64, tpu.core_type = #tpu.core_type<tc>, window_params = [{transform_indices = @transform_0, window_bounds = array<i64: 1, 16, 2>}, {transform_indices = @transform_1, window_bounds = array<i64: 1, 2, 64>}, {pipeline_mode = #tpu.pipeline_mode<synchronous>, transform_indices = @transform_2, window_bounds = array<i64: 1, 64>}, {pipeline_mode = #tpu.pipeline_mode<synchronous>, transform_indices = @transform_3, window_bounds = array<i64: 64, 128>}, {pipeline_mode = #tpu.pipeline_mode<synchronous>, transform_indices = @transform_4, window_bounds = array<i64: 1, 128>}, {pipeline_mode = #tpu.pipeline_mode<synchronous>, transform_indices = @transform_5, window_bounds = array<i64: 128, 1024>}, {pipeline_mode = #tpu.pipeline_mode<synchronous>, transform_indices = @transform_6, window_bounds = array<i64: 1, 1024>}, {transform_indices = @transform_7, window_bounds = array<i64: 1, 1, 1024>}]} {
    %c0_i32 = arith.constant 0 : i32
    %0 = arith.cmpi eq, %arg2, %c0_i32 : i32
    %1 = arith.extui %0 : i1 to i32
    %c0_i32_0 = arith.constant 0 : i32
    %2 = arith.cmpi ne, %1, %c0_i32_0 : i32
    scf.if %2 {
      %cst_25 = arith.constant 0xFF800000 : f32
      %33 = vector.broadcast %cst_25 : f32 to vector<8x1024xf32>
      %c0_26 = arith.constant 0 : index
      %c0_27 = arith.constant 0 : index
      %34 = vector.load %arg11[%c0_26, %c0_27] : memref<8x1024xf32, #tpu.memory_space<vmem>>, vector<8x1024xf32>
      tpu.vector_store %arg11[%c0_26, %c0_27], %33 {strides = array<i32>} : memref<8x1024xf32, #tpu.memory_space<vmem>>, vector<8x1024xf32>,
    } else {
    }
    %c0 = arith.constant 0 : index
    %c0_1 = arith.constant 0 : index
    %c0_2 = arith.constant 0 : index
    %3 = vector.load %arg3[%c0, %c0_1, %c0_2] : memref<1x16x2xf32, #tpu.memory_space<vmem>>, vector<1x16x2xf32>
    %4 = vector.shape_cast %3 : vector<1x16x2xf32> to vector<16x2xf32>
    %5 = arith.truncf %4 : vector<16x2xf32> to vector<16x2xbf16>
    %c0_3 = arith.constant 0 : index
    %c0_4 = arith.constant 0 : index
    %c0_5 = arith.constant 0 : index
    %6 = vector.load %arg4[%c0_3, %c0_4, %c0_5] : memref<1x2x64xbf16, #tpu.memory_space<vmem>>, vector<1x2x64xbf16>
    %7 = vector.shape_cast %6 : vector<1x2x64xbf16> to vector<2x64xbf16>
    %cst = arith.constant dense<0.000000e+00> : vector<16x64xf32>
    %8 = tpu.matmul %5, %7, %cst {dimension_numbers = #tpu.dot_dimension_numbers<[1], [0], [0], [1], [0, 0, 1, 1], [], []>} : vector<16x2xbf16>, vector<2x64xbf16>, vector<16x64xf32> -> vector<16x64xf32>
    %c0_6 = arith.constant 0 : index
    %c0_7 = arith.constant 0 : index
    %9 = vector.load %arg5[%c0_6, %c0_7] : memref<1x64xf32, #tpu.memory_space<vmem>>, vector<1x64xf32>
    %10 = vector.broadcast %9 : vector<1x64xf32> to vector<16x64xf32>
    %11 = arith.addf %8, %10 : vector<16x64xf32>
    %cst_8 = arith.constant 0.000000e+00 : f32
    %12 = vector.broadcast %cst_8 : f32 to vector<16x64xf32>
    %13 = arith.maximumf %11, %12 : vector<16x64xf32>
    %14 = arith.truncf %13 : vector<16x64xf32> to vector<16x64xbf16>
    %c0_9 = arith.constant 0 : index
    %c0_10 = arith.constant 0 : index
    %15 = vector.load %arg6[%c0_9, %c0_10] : memref<64x128xbf16, #tpu.memory_space<vmem>>, vector<64x128xbf16>
    %cst_11 = arith.constant dense<0.000000e+00> : vector<16x128xf32>
    %16 = tpu.matmul %14, %15, %cst_11 {dimension_numbers = #tpu.dot_dimension_numbers<[1], [0], [0], [1], [0, 0, 1, 1], [], []>} : vector<16x64xbf16>, vector<64x128xbf16>, vector<16x128xf32> -> vector<16x128xf32>
    %c0_12 = arith.constant 0 : index
    %c0_13 = arith.constant 0 : index
    %17 = vector.load %arg7[%c0_12, %c0_13] : memref<1x128xf32, #tpu.memory_space<vmem>>, vector<1x128xf32>
    %18 = vector.broadcast %17 : vector<1x128xf32> to vector<16x128xf32>
    %19 = arith.addf %16, %18 : vector<16x128xf32>
    %cst_14 = arith.constant 0.000000e+00 : f32
    %20 = vector.broadcast %cst_14 : f32 to vector<16x128xf32>
    %21 = arith.maximumf %19, %20 : vector<16x128xf32>
    %22 = arith.truncf %21 : vector<16x128xf32> to vector<16x128xbf16>
    %c0_15 = arith.constant 0 : index
    %c0_16 = arith.constant 0 : index
    %23 = vector.load %arg8[%c0_15, %c0_16] : memref<128x1024xbf16, #tpu.memory_space<vmem>>, vector<128x1024xbf16>
    %cst_17 = arith.constant dense<0.000000e+00> : vector<16x1024xf32>
    %24 = tpu.matmul %22, %23, %cst_17 {dimension_numbers = #tpu.dot_dimension_numbers<[1], [0], [0], [1], [0, 0, 1, 1], [], []>} : vector<16x128xbf16>, vector<128x1024xbf16>, vector<16x1024xf32> -> vector<16x1024xf32>
    %c0_18 = arith.constant 0 : index
    %c0_19 = arith.constant 0 : index
    %25 = vector.load %arg11[%c0_18, %c0_19] : memref<8x1024xf32, #tpu.memory_space<vmem>>, vector<8x1024xf32>
    %26 = vector.shape_cast %24 : vector<16x1024xf32> to vector<2x8x1024xf32>
    %cst_20 = arith.constant dense<0xFF800000> : vector<8x1024xf32>
    %27 = vector.multi_reduction <maximumf>, %26, %cst_20 [0] : vector<2x8x1024xf32> to vector<8x1024xf32>
    %28 = arith.maximumf %25, %27 : vector<8x1024xf32>
    %c0_21 = arith.constant 0 : index
    %c0_22 = arith.constant 0 : index
    %29 = vector.load %arg11[%c0_21, %c0_22] : memref<8x1024xf32, #tpu.memory_space<vmem>>, vector<8x1024xf32>
    tpu.vector_store %arg11[%c0_21, %c0_22], %28 {strides = array<i32>} : memref<8x1024xf32, #tpu.memory_space<vmem>>, vector<8x1024xf32>,
    %c0_i32_23 = arith.constant 0 : i32
    %30 = arith.cmpi eq, %arg2, %c0_i32_23 : i32
    %31 = arith.extui %30 : i1 to i32
    %c0_i32_24 = arith.constant 0 : i32
    %32 = arith.cmpi ne, %31, %c0_i32_24 : i32
    scf.if %32 {
      %c0_25 = arith.constant 0 : index
      %c0_26 = arith.constant 0 : index
      %33 = vector.load %arg11[%c0_25, %c0_26] : memref<8x1024xf32, #tpu.memory_space<vmem>>, vector<8x1024xf32>
      %cst_27 = arith.constant dense<0xFF800000> : vector<1024xf32>
      %34 = vector.multi_reduction <maximumf>, %33, %cst_27 [0] : vector<8x1024xf32> to vector<1024xf32>
      %35 = vector.shape_cast %34 : vector<1024xf32> to vector<1x1024xf32>
      %c0_28 = arith.constant 0 : index
      %c0_29 = arith.constant 0 : index
      %36 = vector.load %arg9[%c0_28, %c0_29] : memref<1x1024xf32, #tpu.memory_space<vmem>>, vector<1x1024xf32>
      %37 = arith.addf %35, %36 : vector<1x1024xf32>
      %c0_30 = arith.constant 0 : index
      %c0_31 = arith.constant 0 : index
      %c0_32 = arith.constant 0 : index
      %38 = vector.load %arg10[%c0_30, %c0_31, %c0_32] : memref<1x1x1024xf32, #tpu.memory_space<vmem>>, vector<1x1x1024xf32>
      %39 = vector.shape_cast %38 : vector<1x1x1024xf32> to vector<1x1024xf32>
      %40 = vector.shape_cast %37 : vector<1x1024xf32> to vector<1x1x1024xf32>
      tpu.vector_store %arg10[%c0_30, %c0_31, %c0_32], %40 {strides = array<i32>} : memref<1x1x1024xf32, #tpu.memory_space<vmem>>, vector<1x1x1024xf32>,
    } else {
    }
    return
  }
  func.func @transform_0(%arg0: i32, %arg1: i32, %arg2: i32) -> (i32, i32, i32) {
    %c1_i32 = arith.constant 1 : i32
    %0 = arith.muli %arg0, %c1_i32 : i32
    %1 = arith.addi %0, %arg2 : i32
    %c0_i32 = arith.constant 0 : i32
    %c0_i32_0 = arith.constant 0 : i32
    return %arg1, %1, %c0_i32 : i32, i32, i32
  }
  func.func @transform_1(%arg0: i32, %arg1: i32, %arg2: i32) -> (i32, i32, i32) {
    %c0_i32 = arith.constant 0 : i32
    %c0_i32_0 = arith.constant 0 : i32
    %c0_i32_1 = arith.constant 0 : i32
    return %arg1, %c0_i32, %c0_i32_0 : i32, i32, i32
  }
  func.func @transform_2(%arg0: i32, %arg1: i32, %arg2: i32) -> (i32, i32) {
    %c0_i32 = arith.constant 0 : i32
    %c0_i32_0 = arith.constant 0 : i32
    %c0_i32_1 = arith.constant 0 : i32
    return %c0_i32, %c0_i32_0 : i32, i32
  }
  func.func @transform_3(%arg0: i32, %arg1: i32, %arg2: i32) -> (i32, i32) {
    %c0_i32 = arith.constant 0 : i32
    %c0_i32_0 = arith.constant 0 : i32
    %c0_i32_1 = arith.constant 0 : i32
    return %c0_i32, %c0_i32_0 : i32, i32
  }
  func.func @transform_4(%arg0: i32, %arg1: i32, %arg2: i32) -> (i32, i32) {
    %c0_i32 = arith.constant 0 : i32
    %c0_i32_0 = arith.constant 0 : i32
    %c0_i32_1 = arith.constant 0 : i32
    return %c0_i32, %c0_i32_0 : i32, i32
  }
  func.func @transform_5(%arg0: i32, %arg1: i32, %arg2: i32) -> (i32, i32) {
    %c0_i32 = arith.constant 0 : i32
    %c0_i32_0 = arith.constant 0 : i32
    %c0_i32_1 = arith.constant 0 : i32
    return %c0_i32, %c0_i32_0 : i32, i32
  }
  func.func @transform_6(%arg0: i32, %arg1: i32, %arg2: i32) -> (i32, i32) {
    %c0_i32 = arith.constant 0 : i32
    %c0_i32_0 = arith.constant 0 : i32
    %c0_i32_1 = arith.constant 0 : i32
    return %c0_i32, %c0_i32_0 : i32, i32
  }
  func.func @transform_7(%arg0: i32, %arg1: i32, %arg2: i32) -> (i32, i32, i32) {
    %c1_i32 = arith.constant 1 : i32
    %0 = arith.muli %arg1, %c1_i32 : i32
    %1 = arith.addi %0, %arg0 : i32
    %c0_i32 = arith.constant 0 : i32
    %c0_i32_0 = arith.constant 0 : i32
    %c0_i32_1 = arith.constant 0 : i32
    return %1, %c0_i32, %c0_i32_0 : i32, i32, i32
  }
}

</mosaic_0001>

<llo_original>
// kernel: pointnet_encoder.3
$region0: #{pointnet_encoder.3}
  #allocation0 [shape = 'u32[]', space=smem, size = 0x4, offset = 0x4, fixed_abs, tag = 'smem constant byte address 0x4 - core index']
  #allocation1 [shape = 'u32[72,128]{1,0:T(1,128)}', space=vmem, size = 0x9000, scoped, tag = 'internal scratch']
  #allocation2 [shape = 'f32[8,1024]{1,0:T(8,128)}', space=vmem, size = 0x8000, scoped, tag = 'scratch operand']
  %s0 = inlined_call_operand.vmem [shape: f32[2,16,2], index: 0, kind: input, shape index: {}]
  %s1 = inlined_call_operand.vmem [shape: bf16[2,64], index: 1, kind: input, shape index: {}]
  %s2 = inlined_call_operand.vmem [shape: f32[1,64], index: 2, kind: input, shape index: {}]
  %s3 = inlined_call_operand.vmem [shape: bf16[64,128], index: 3, kind: input, shape index: {}]
  %s4 = inlined_call_operand.vmem [shape: f32[1,128], index: 4, kind: input, shape index: {}]
  %s5 = inlined_call_operand.vmem [shape: bf16[128,1024], index: 5, kind: input, shape index: {}]
  %s6 = inlined_call_operand.vmem [shape: f32[1,1024], index: 6, kind: input, shape index: {}]
  %s7 = inlined_call_operand.vmem [shape: f32[2,1,1024], index: 7, kind: output, shape index: {}]
  %s8 = sld [smem:[#allocation0]]
  $region69: #{pointnet_encoder.3} parent=0
    _
  %s10 = ssub.s32 1, %s8
  %s11 = scalar_select 0, %s10, %s8
  loop: start=0, step=1, limit=4
  $region2: #{pointnet_encoder.3} parent=0 // loop_pre_header
    _
  $region3: #{pointnet_encoder.3} parent=0 // loop_header
    %s13 = sphi 0, %s17
    %p14 = scmp.ge.s32.totalorder %s13, 4
    %s20 = sphi 0, %s39
    %s21 = sphi 0, %s35
    %s22 = sphi 0, %s31
    %s23 = sphi 0, %s20
    %s24 = sphi 0, %s21
    %s25 = sphi 0, %s22
    %s26 = sphi 0, %s23
    %s27 = sphi 0, %s24
    %s28 = sphi 0, %s25
    %s46 = sphi 0, %s48
    %s49 = sphi 0, %s46
    %s50 = sphi 0, %s49
    %s66 = sphi 0, %s50
    %s70 = sphi 0, %s70
    %s72 = sphi 0, %s70
    %s73 = sphi 0, %s72
    %s87 = sphi 0, %s73
    %s91 = sphi 0, %s91
    %s93 = sphi 0, %s91
    %s94 = sphi 0, %s93
    %s108 = sphi 0, %s94
    %s112 = sphi 0, %s112
    %s114 = sphi 0, %s112
    %s115 = sphi 0, %s114
    %s129 = sphi 0, %s115
    %s133 = sphi 0, %s133
    %s135 = sphi 0, %s133
    %s136 = sphi 0, %s135
    %s150 = sphi 0, %s136
    %s154 = sphi 0, %s154
    %s156 = sphi 0, %s154
    %s157 = sphi 0, %s156
    %s171 = sphi 0, %s157
    %s175 = sphi 0, %s175
    %s177 = sphi 0, %s175
    %s178 = sphi 0, %s177
    %s192 = sphi 0, %s178
    %s200 = sphi 0, %s202
    %s203 = sphi 0, %s200
    %s204 = sphi 0, %s203
    %s220 = sphi 0, %s204
  $region4: #{pointnet_encoder.3} parent=0 // loop_header_branch
    %16 = sbr.rel (%p14) target = $region8
  $region5: #{pointnet_encoder.3} parent=0 // loop_body
    %s18 = ssub.s32 %s13, 1
    %s19 = ssub.s32 %s13, 2
    %s29 = sadd.s32 1, %s22
    %p30 = scmp.ge.s32.totalorder %s29, 1
    %s31 = scalar_select %p30, 0, %s29
    %s32 = sadd.s32 1, %s21
    %s33 = scalar_select %p30, %s32, %s21
    %p34 = scmp.ge.s32.totalorder %s33, 2
    %s35 = scalar_select %p34, 0, %s33
    %s36 = sadd.s32 1, %s20
    %s37 = scalar_select %p34, %s36, %s20
    %p38 = scmp.ge.s32.totalorder %s37, 1
    %s39 = scalar_select %p38, 0, %s37
    %s40 = sadd.s32 %s20, %s22
    %s41 = sadd.s32 %s39, %s31
    %s42 = ssub.s32 %s21, %s35
    %s43 = ssub.s32 %s40, %s41
    %s44 = sor.u32 %s42, %s43
    %p45 = scmp.eq.s32.totalorder %s44, 0
    %s47 = sadd.s32 %s46, 1
    %s48 = scalar_select %p45, %s46, %s47
    %p51 = pneg %p45
    %p52 = scmp.eq.s32.totalorder %s13, 1
    %p53 = por %p51, %p52
    %p54 = scmp.ne.s32.totalorder %s46, %s49
    %p55 = scmp.eq.s32.totalorder %s13, 0
    %p56 = por %p54, %p55
    %p57 = scmp.ne.s32.totalorder %s46, %s49
    %p58 = scmp.eq.s32.totalorder %s18, 1
    %p59 = por %p57, %p58
    %p60 = scmp.ne.s32.totalorder %s49, %s50
    %p61 = scmp.eq.s32.totalorder %s18, 0
    %p62 = por %p60, %p61
    %p63 = scmp.ne.s32.totalorder %s49, %s50
    %p64 = scmp.eq.s32.totalorder %s19, 1
    %p65 = por %p63, %p64
    %p67 = scmp.ne.s32.totalorder %s50, %s66
    %p68 = scmp.eq.s32.totalorder %s19, 0
    %p69 = por %p67, %p68
    %s71 = sadd.s32 %s70, 1
    %p74 = scmp.eq.s32.totalorder %s13, 1
    %p75 = scmp.ne.s32.totalorder %s70, %s72
    %p76 = scmp.eq.s32.totalorder %s13, 0
    %p77 = por %p75, %p76
    %p78 = scmp.ne.s32.totalorder %s70, %s72
    %p79 = scmp.eq.s32.totalorder %s18, 1
    %p80 = por %p78, %p79
    %p81 = scmp.ne.s32.totalorder %s72, %s73
    %p82 = scmp.eq.s32.totalorder %s18, 0
    %p83 = por %p81, %p82
    %p84 = scmp.ne.s32.totalorder %s72, %s73
    %p85 = scmp.eq.s32.totalorder %s19, 1
    %p86 = por %p84, %p85
    %p88 = scmp.ne.s32.totalorder %s73, %s87
    %p89 = scmp.eq.s32.totalorder %s19, 0
    %p90 = por %p88, %p89
    %s92 = sadd.s32 %s91, 1
    %p95 = scmp.eq.s32.totalorder %s13, 1
    %p96 = scmp.ne.s32.totalorder %s91, %s93
    %p97 = scmp.eq.s32.totalorder %s13, 0
    %p98 = por %p96, %p97
    %p99 = scmp.ne.s32.totalorder %s91, %s93
    %p100 = scmp.eq.s32.totalorder %s18, 1
    %p101 = por %p99, %p100
    %p102 = scmp.ne.s32.totalorder %s93, %s94
    %p103 = scmp.eq.s32.totalorder %s18, 0
    %p104 = por %p102, %p103
    %p105 = scmp.ne.s32.totalorder %s93, %s94
    %p106 = scmp.eq.s32.totalorder %s19, 1
    %p107 = por %p105, %p106
    %p109 = scmp.ne.s32.totalorder %s94, %s108
    %p110 = scmp.eq.s32.totalorder %s19, 0
    %p111 = por %p109, %p110
    %s113 = sadd.s32 %s112, 1
    %p116 = scmp.eq.s32.totalorder %s13, 1
    %p117 = scmp.ne.s32.totalorder %s112, %s114
    %p118 = scmp.eq.s32.totalorder %s13, 0
    %p119 = por %p117, %p118
    %p120 = scmp.ne.s32.totalorder %s112, %s114
    %p121 = scmp.eq.s32.totalorder %s18, 1
    %p122 = por %p120, %p121
    %p123 = scmp.ne.s32.totalorder %s114, %s115
    %p124 = scmp.eq.s32.totalorder %s18, 0
    %p125 = por %p123, %p124
    %p126 = scmp.ne.s32.totalorder %s114, %s115
    %p127 = scmp.eq.s32.totalorder %s19, 1
    %p128 = por %p126, %p127
    %p130 = scmp.ne.s32.totalorder %s115, %s129
    %p131 = scmp.eq.s32.totalorder %s19, 0
    %p132 = por %p130, %p131
    %s134 = sadd.s32 %s133, 1
    %p137 = scmp.eq.s32.totalorder %s13, 1
    %p138 = scmp.ne.s32.totalorder %s133, %s135
    %p139 = scmp.eq.s32.totalorder %s13, 0
    %p140 = por %p138, %p139
    %p141 = scmp.ne.s32.totalorder %s133, %s135
    %p142 = scmp.eq.s32.totalorder %s18, 1
    %p143 = por %p141, %p142
    %p144 = scmp.ne.s32.totalorder %s135, %s136
    %p145 = scmp.eq.s32.totalorder %s18, 0
    %p146 = por %p144, %p145
    %p147 = scmp.ne.s32.totalorder %s135, %s136
    %p148 = scmp.eq.s32.totalorder %s19, 1
    %p149 = por %p147, %p148
    %p151 = scmp.ne.s32.totalorder %s136, %s150
    %p152 = scmp.eq.s32.totalorder %s19, 0
    %p153 = por %p151, %p152
    %s155 = sadd.s32 %s154, 1
    %p158 = scmp.eq.s32.totalorder %s13, 1
    %p159 = scmp.ne.s32.totalorder %s154, %s156
    %p160 = scmp.eq.s32.totalorder %s13, 0
    %p161 = por %p159, %p160
    %p162 = scmp.ne.s32.totalorder %s154, %s156
    %p163 = scmp.eq.s32.totalorder %s18, 1
    %p164 = por %p162, %p163
    %p165 = scmp.ne.s32.totalorder %s156, %s157
    %p166 = scmp.eq.s32.totalorder %s18, 0
    %p167 = por %p165, %p166
    %p168 = scmp.ne.s32.totalorder %s156, %s157
    %p169 = scmp.eq.s32.totalorder %s19, 1
    %p170 = por %p168, %p169
    %p172 = scmp.ne.s32.totalorder %s157, %s171
    %p173 = scmp.eq.s32.totalorder %s19, 0
    %p174 = por %p172, %p173
    %s176 = sadd.s32 %s175, 1
    %p179 = scmp.eq.s32.totalorder %s13, 1
    %p180 = scmp.ne.s32.totalorder %s175, %s177
    %p181 = scmp.eq.s32.totalorder %s13, 0
    %p182 = por %p180, %p181
    %p183 = scmp.ne.s32.totalorder %s175, %s177
    %p184 = scmp.eq.s32.totalorder %s18, 1
    %p185 = por %p183, %p184
    %p186 = scmp.ne.s32.totalorder %s177, %s178
    %p187 = scmp.eq.s32.totalorder %s18, 0
    %p188 = por %p186, %p187
    %p189 = scmp.ne.s32.totalorder %s177, %s178
    %p190 = scmp.eq.s32.totalorder %s19, 1
    %p191 = por %p189, %p190
    %p193 = scmp.ne.s32.totalorder %s178, %s192
    %p194 = scmp.eq.s32.totalorder %s19, 0
    %p195 = por %p193, %p194
    %s196 = sadd.s32 %s21, %s20
    %s197 = sadd.s32 %s35, %s39
    %s198 = ssub.s32 %s196, %s197
    %p199 = scmp.eq.s32.totalorder %s198, 0
    %s201 = sadd.s32 %s200, 1
    %s202 = scalar_select %p199, %s200, %s201
    %p205 = pneg %p199
    %p206 = scmp.eq.s32.totalorder %s13, 1
    %p207 = por %p205, %p206
    %p208 = scmp.ne.s32.totalorder %s200, %s203
    %p209 = scmp.eq.s32.totalorder %s13, 0
    %p210 = por %p208, %p209
    %p211 = scmp.ne.s32.totalorder %s200, %s203
    %p212 = scmp.eq.s32.totalorder %s18, 1
    %p213 = por %p211, %p212
    %p214 = scmp.ne.s32.totalorder %s203, %s204
    %p215 = scmp.eq.s32.totalorder %s18, 0
    %p216 = por %p214, %p215
    %p217 = scmp.ne.s32.totalorder %s203, %s204
    %p218 = scmp.eq.s32.totalorder %s19, 1
    %p219 = por %p217, %p218
    %p221 = scmp.ne.s32.totalorder %s204, %s220
    %p222 = scmp.eq.s32.totalorder %s19, 0
    %p223 = por %p221, %p222
    %p224 = scmp.le.s32.totalorder 1, %s13
    %p225 = scmp.lt.s32.totalorder %s13, 3
    %p226 = pnand %p224, %p225
    %p227 = pneg %p226
    // Predicated region
    $region9: #{pointnet_encoder.3} parent=5 // pred_check
      _
    $region10: #{pointnet_encoder.3} parent=5 // pred_check_branch
      %229 = sbr.rel (%p226) target = $region12
    $region11: #{pointnet_encoder.3} parent=5 // pred_region
      %s230 = ssub.s32 %s13, 1
      // Predicated region
      $region13: #{pointnet_encoder.3} parent=11 // pred_check
        %p231 = pneg %p83
      $region14: #{pointnet_encoder.3} parent=11 // pred_check_branch
        %233 = sbr.rel (%p231) target = $region16
      $region15: #{pointnet_encoder.3} parent=11 // pred_region
        _
      $region16: #{pointnet_encoder.3} parent=11 // pred_fallthru
        _
      // Predicated region
      $region17: #{pointnet_encoder.3} parent=11 // pred_check
        %p234 = pneg %p104
      $region18: #{pointnet_encoder.3} parent=11 // pred_check_branch
        %236 = sbr.rel (%p234) target = $region20
      $region19: #{pointnet_encoder.3} parent=11 // pred_region
        _
      $region20: #{pointnet_encoder.3} parent=11 // pred_fallthru
        _
      // Predicated region
      $region21: #{pointnet_encoder.3} parent=11 // pred_check
        %p237 = pneg %p125
      $region22: #{pointnet_encoder.3} parent=11 // pred_check_branch
        %239 = sbr.rel (%p237) target = $region24
      $region23: #{pointnet_encoder.3} parent=11 // pred_region
        _
      $region24: #{pointnet_encoder.3} parent=11 // pred_fallthru
        _
      // Predicated region
      $region25: #{pointnet_encoder.3} parent=11 // pred_check
        %p240 = pneg %p146
      $region26: #{pointnet_encoder.3} parent=11 // pred_check_branch
        %242 = sbr.rel (%p240) target = $region28
      $region27: #{pointnet_encoder.3} parent=11 // pred_region
        _
      $region28: #{pointnet_encoder.3} parent=11 // pred_fallthru
        _
      // Predicated region
      $region29: #{pointnet_encoder.3} parent=11 // pred_check
        %p243 = pneg %p167
      $region30: #{pointnet_encoder.3} parent=11 // pred_check_branch
        %245 = sbr.rel (%p243) target = $region32
      $region31: #{pointnet_encoder.3} parent=11 // pred_region
        _
      $region32: #{pointnet_encoder.3} parent=11 // pred_fallthru
        _
      // Predicated region
      $region33: #{pointnet_encoder.3} parent=11 // pred_check
        %p246 = pneg %p188
      $region34: #{pointnet_encoder.3} parent=11 // pred_check_branch
        %248 = sbr.rel (%p246) target = $region36
      $region35: #{pointnet_encoder.3} parent=11 // pred_region
        _
      $region36: #{pointnet_encoder.3} parent=11 // pred_fallthru
        _
    $region12: #{pointnet_encoder.3} parent=5 // pred_fallthru
      _
    %p249 = scmp.lt.s32.totalorder %s13, 2
    // Predicated region
    $region37: #{pointnet_encoder.3} parent=5 // pred_check
      %p250 = pneg %p249
    $region38: #{pointnet_encoder.3} parent=5 // pred_check_branch
      %252 = sbr.rel (%p250) target = $region40
    $region39: #{pointnet_encoder.3} parent=5 // pred_region
      // Predicated region
      $region41: #{pointnet_encoder.3} parent=39 // pred_check
        %p253 = pneg %p56
      $region42: #{pointnet_encoder.3} parent=39 // pred_check_branch
        %255 = sbr.rel (%p253) target = $region44
      $region43: #{pointnet_encoder.3} parent=39 // pred_region
        %s256 = sadd.s32 %s20, %s22
        %s257 = smul.u32 2, %s256
        %p258 = scmp.lt.s32.totalorder %s21, 1
        %s259 = scalar_select %p258, %s21, 1
        %p260 = scmp.lt.s32.totalorder %s257, 1
        %s261 = scalar_select %p260, %s257, 1
        %s262 = smul.addr %s259, 2
        %s263 = sadd.s32 %s261, %s262
        %s264 = smul.addr %s263, 8
        %s265 = scalar_lea.vmem %s0, %s264
        %s266 = sadd.s32 %s20, %s22
        %s267 = smul.u32 2, %s266
      $region44: #{pointnet_encoder.3} parent=39 // pred_fallthru
        _
    $region40: #{pointnet_encoder.3} parent=5 // pred_fallthru
      _
    %p268 = scmp.le.s32.totalorder 1, %s13
    %p269 = scmp.lt.s32.totalorder %s13, 3
    %p270 = pnand %p268, %p269
    %p271 = pneg %p270
    // Predicated region
    $region45: #{pointnet_encoder.3} parent=5 // pred_check
      _
    $region46: #{pointnet_encoder.3} parent=5 // pred_check_branch
      %273 = sbr.rel (%p270) target = $region48
    $region47: #{pointnet_encoder.3} parent=5 // pred_region
      %s274 = ssub.s32 %s13, 1
      %s275 = sadd.s32 %s23, %s25
      %s276 = smul.u32 2, %s275
      %p277 = scmp.lt.s32.totalorder %s24, 1
      %s278 = scalar_select %p277, %s24, 1
      %p279 = scmp.lt.s32.totalorder %s276, 1
      %s280 = scalar_select %p279, %s276, 1
      %s281 = smul.addr %s278, 2
      %s282 = sadd.s32 %s280, %s281
      %s283 = smul.addr %s282, 8
      %s284 = scalar_lea.vmem %s0, %s283
      %p285 = pneg %p62
      %p286 = pneg %p59
      %p287 = pneg %p83
      %p288 = pneg %p80
      %p289 = pneg %p104
      %p290 = pneg %p101
      %p291 = pneg %p125
      %p292 = pneg %p122
      %p293 = pneg %p146
      %p294 = pneg %p143
      %p295 = pneg %p167
      %p296 = pneg %p164
      %p297 = pneg %p188
      %p298 = pneg %p185
      %p299 = pneg %p216
      %p300 = pneg %p213
      %s301 = sadd.s32 %s24, %s23
      %p302 = scmp.lt.s32.totalorder %s301, 1
      %s303 = scalar_select %p302, %s301, 1
      %s304 = smul.addr %s303, 8
      %s305 = scalar_lea.vmem %s7, %s304
      %s306 = sadd.s32 %s23, %s25
      %s307 = smul.u32 2, %s306
      %p308 = scmp.lt.s32.totalorder %s24, 1
      %s309 = scalar_select %p308, %s24, 1
      %p310 = scmp.lt.s32.totalorder %s307, 1
      %s311 = scalar_select %p310, %s307, 1
      %s312 = smul.addr %s309, 2
      %s313 = sadd.s32 %s311, %s312
      %s314 = smul.addr %s313, 8
      %s315 = scalar_lea.vmem %s0, %s314
      %s316 = sadd.s32 %s23, %s25
      %s317 = smul.u32 2, %s316
      %s318 = sadd.s32 %s24, %s23
      %p319 = scmp.lt.s32.totalorder %s318, 1
      %s320 = scalar_select %p319, %s318, 1
      %s321 = smul.addr %s320, 8
      %s322 = scalar_lea.vmem %s7, %s321
      %s323 = sadd.s32 %s24, %s23
      %p325 = scmp.eq.s32.totalorder %s25, 0
      // Predicated region
      $region49: #{pointnet_encoder.3} parent=47 // pred_check
        %p326 = pneg %p325
      $region50: #{pointnet_encoder.3} parent=47 // pred_check_branch
        %328 = sbr.rel (%p326) target = $region52
      $region51: #{pointnet_encoder.3} parent=47 // pred_region
        %329 = vst [vmem:[#allocation2] sm:$0xff] -inf
        %330 = vst [vmem:[#allocation2 + $0x8] sm:$0xff] -inf
        %331 = vst [vmem:[#allocation2 + $0x10] sm:$0xff] -inf
        %332 = vst [vmem:[#allocation2 + $0x18] sm:$0xff] -inf
        %333 = vst [vmem:[#allocation2 + $0x20] sm:$0xff] -inf
        %334 = vst [vmem:[#allocation2 + $0x28] sm:$0xff] -inf
        %335 = vst [vmem:[#allocation2 + $0x30] sm:$0xff] -inf
        %336 = vst [vmem:[#allocation2 + $0x38] sm:$0xff] -inf
      $region52: #{pointnet_encoder.3} parent=47 // pred_fallthru
        _
      %v337 = vld [vmem:[%s315] sm:$0xff]
      %v338 = vld [vmem:[%s315 + $0x8] sm:$0xff]
      %v339 = vpack.c.bf16 %v338, %v337
      %v340 = vld [vmem:[%s1] sm:$0x1]
      %v341 = vld [vmem:[%s2] sm:$0x1]
      %v343 = vperm.slane %v341, 0
      %vm345 = vcmask 15360
      %v347 = vsel %vm345, %v339, 0
      %vm349 = vcmask 1040384
      %v351 = vsel %vm349, %v340, 0
      %353 = vmatpush.bf16.msra.mxu0 0
      %354 = vmatpush.bf16.msra.mxu0 0
      %355 = vmatpush.bf16.msra.mxu0 0
      %356 = vmatpush.bf16.msra.mxu0 0
      %357 = vmatpush.bf16.msra.mxu0 0
      %358 = vmatpush.bf16.msra.mxu0 0
      %359 = vmatpush.bf16.msra.mxu0 0
      %360 = vmatpush.bf16.msra.mxu0 %v351
      %361 = vmatmul.bf16.gmra.mxu0 %v347
      %v362 = vpop.f32.mrf.mxu0
      %v363 = vadd.f32 %v343, %v362
      %v364 = vpop.f32.mrf.mxu0
      %v365 = vadd.f32 %v343, %v364
      %366 = vdwg.mxu0
      %v367 = vmax.f32 %v363, 0.0
      %v368 = vmax.f32 %v365, 0.0
      %v369 = vpack.c.bf16 %v368, %v367
      %v370 = vld [vmem:[%s3] sm:$0xf]
      %v371 = vld [vmem:[%s3 + $0x4] sm:$0xf]
      %v372 = vld [vmem:[%s3 + $0x8] sm:$0xf]
      %v373 = vld [vmem:[%s3 + $0xc] sm:$0xf]
      %v374 = vld [vmem:[%s3 + $0x10] sm:$0xf]
      %v375 = vld [vmem:[%s3 + $0x14] sm:$0xf]
      %v376 = vld [vmem:[%s3 + $0x18] sm:$0xf]
      %v377 = vld [vmem:[%s3 + $0x1c] sm:$0xf]
      %v378 = vld [vmem:[%s4] sm:$0x1]
      %v380 = vperm.slane %v378, 0
      %v390 = vunpack.c.l.b16 %v370
      %v391 = vunpack.c.l.b16 %v371
      %v392 = vunpack.c.l.b16 %v372
      %v393 = vunpack.c.l.b16 %v373
      %v394 = vunpack.c.l.b16 %v374
      %v395 = vunpack.c.l.b16 %v375
      %v396 = vunpack.c.l.b16 %v376
      %v397 = vunpack.c.l.b16 %v377
      %v398 = vpack.c.b16 %v391, %v390
      %v399 = vpack.c.b16 %v393, %v392
      %v400 = vpack.c.b16 %v395, %v394
      %v401 = vpack.c.b16 %v397, %v396
      %vm406 = vcmask 523264
      %v408 = vsel %vm406, %v369, 0
      %410 = vmatpush.bf16.msra.mxu0 0
      %411 = vmatpush.bf16.msra.mxu0 0
      %412 = vmatpush.bf16.msra.mxu0 0
      %413 = vmatpush.bf16.msra.mxu0 0
      %414 = vmatpush.bf16.msra.mxu0 %v401
      %415 = vmatpush.bf16.msra.mxu0 %v400
      %416 = vmatpush.bf16.msra.mxu0 %v399
      %417 = vmatpush.bf16.msra.mxu0 %v398
      %418 = vmatmul.bf16.gmra.mxu0 %v408
      %v419 = vpop.f32.mrf.mxu0
      %v420 = vadd.f32 %v380, %v419
      %v421 = vpop.f32.mrf.mxu0
      %v422 = vadd.f32 %v380, %v421
      %423 = vdwg.mxu0
      %v424 = vmax.f32 %v420, 0.0
      %v425 = vmax.f32 %v422, 0.0
      %v426 = vpack.c.bf16 %v425, %v424
      %v427 = vld [vmem:[%s5] sm:$0xff]
      %v428 = vld [vmem:[%s5 + $0x8] sm:$0xff]
      %v429 = vld [vmem:[%s5 + $0x10] sm:$0xff]
      %v430 = vld [vmem:[%s5 + $0x18] sm:$0xff]
      %v431 = vld [vmem:[%s5 + $0x20] sm:$0xff]
      %v432 = vld [vmem:[%s5 + $0x28] sm:$0xff]
      %v433 = vld [vmem:[%s5 + $0x30] sm:$0xff]
      %v434 = vld [vmem:[%s5 + $0x38] sm:$0xff]
      %v435 = vld [vmem:[%s5 + $0x40] sm:$0xff]
      %v436 = vld [vmem:[%s5 + $0x48] sm:$0xff]
      %v437 = vld [vmem:[%s5 + $0x50] sm:$0xff]
      %v438 = vld [vmem:[%s5 + $0x58] sm:$0xff]
      %v439 = vld [vmem:[%s5 + $0x60] sm:$0xff]
      %v440 = vld [vmem:[%s5 + $0x68] sm:$0xff]
      %v441 = vld [vmem:[%s5 + $0x70] sm:$0xff]
      %v442 = vld [vmem:[%s5 + $0x78] sm:$0xff]
      %v443 = vld [vmem:[%s5 + $0x80] sm:$0xff]
      %v444 = vld [vmem:[%s5 + $0x88] sm:$0xff]
      %v445 = vld [vmem:[%s5 + $0x90] sm:$0xff]
      %v446 = vld [vmem:[%s5 + $0x98] sm:$0xff]
      %v447 = vld [vmem:[%s5 + $0xa0] sm:$0xff]
      %v448 = vld [vmem:[%s5 + $0xa8] sm:$0xff]
      %v449 = vld [vmem:[%s5 + $0xb0] sm:$0xff]
      %v450 = vld [vmem:[%s5 + $0xb8] sm:$0xff]
      %v451 = vld [vmem:[%s5 + $0xc0] sm:$0xff]
      %v452 = vld [vmem:[%s5 + $0xc8] sm:$0xff]
      %v453 = vld [vmem:[%s5 + $0xd0] sm:$0xff]
      %v454 = vld [vmem:[%s5 + $0xd8] sm:$0xff]
      %v455 = vld [vmem:[%s5 + $0xe0] sm:$0xff]
      %v456 = vld [vmem:[%s5 + $0xe8] sm:$0xff]
      %v457 = vld [vmem:[%s5 + $0xf0] sm:$0xff]
      %v458 = vld [vmem:[%s5 + $0xf8] sm:$0xff]
      %v459 = vld [vmem:[%s5 + $0x100] sm:$0xff]
      %v460 = vld [vmem:[%s5 + $0x108] sm:$0xff]
      %v461 = vld [vmem:[%s5 + $0x110] sm:$0xff]
      %v462 = vld [vmem:[%s5 + $0x118] sm:$0xff]
      %v463 = vld [vmem:[%s5 + $0x120] sm:$0xff]
      %v464 = vld [vmem:[%s5 + $0x128] sm:$0xff]
      %v465 = vld [vmem:[%s5 + $0x130] sm:$0xff]
      %v466 = vld [vmem:[%s5 + $0x138] sm:$0xff]
      %v467 = vld [vmem:[%s5 + $0x140] sm:$0xff]
      %v468 = vld [vmem:[%s5 + $0x148] sm:$0xff]
      %v469 = vld [vmem:[%s5 + $0x150] sm:$0xff]
      %v470 = vld [vmem:[%s5 + $0x158] sm:$0xff]
      %v471 = vld [vmem:[%s5 + $0x160] sm:$0xff]
      %v472 = vld [vmem:[%s5 + $0x168] sm:$0xff]
      %v473 = vld [vmem:[%s5 + $0x170] sm:$0xff]
      %v474 = vld [vmem:[%s5 + $0x178] sm:$0xff]
      %v475 = vld [vmem:[%s5 + $0x180] sm:$0xff]
      %v476 = vld [vmem:[%s5 + $0x188] sm:$0xff]
      %v477 = vld [vmem:[%s5 + $0x190] sm:$0xff]
      %v478 = vld [vmem:[%s5 + $0x198] sm:$0xff]
      %v479 = vld [vmem:[%s5 + $0x1a0] sm:$0xff]
      %v480 = vld [vmem:[%s5 + $0x1a8] sm:$0xff]
      %v481 = vld [vmem:[%s5 + $0x1b0] sm:$0xff]
      %v482 = vld [vmem:[%s5 + $0x1b8] sm:$0xff]
      %v483 = vld [vmem:[%s5 + $0x1c0] sm:$0xff]
      %v484 = vld [vmem:[%s5 + $0x1c8] sm:$0xff]
      %v485 = vld [vmem:[%s5 + $0x1d0] sm:$0xff]
      %v486 = vld [vmem:[%s5 + $0x1d8] sm:$0xff]
      %v487 = vld [vmem:[%s5 + $0x1e0] sm:$0xff]
      %v488 = vld [vmem:[%s5 + $0x1e8] sm:$0xff]
      %v489 = vld [vmem:[%s5 + $0x1f0] sm:$0xff]
      %v490 = vld [vmem:[%s5 + $0x1f8] sm:$0xff]
      %v555 = vunpack.c.l.b16 %v427
      %v556 = vunpack.c.h.b16 %v427
      %v557 = vunpack.c.l.b16 %v428
      %v558 = vunpack.c.h.b16 %v428
      %v559 = vunpack.c.l.b16 %v429
      %v560 = vunpack.c.h.b16 %v429
      %v561 = vunpack.c.l.b16 %v430
      %v562 = vunpack.c.h.b16 %v430
      %v563 = vunpack.c.l.b16 %v431
      %v564 = vunpack.c.h.b16 %v431
      %v565 = vunpack.c.l.b16 %v432
      %v566 = vunpack.c.h.b16 %v432
      %v567 = vunpack.c.l.b16 %v433
      %v568 = vunpack.c.h.b16 %v433
      %v569 = vunpack.c.l.b16 %v434
      %v570 = vunpack.c.h.b16 %v434
      %v571 = vunpack.c.l.b16 %v435
      %v572 = vunpack.c.h.b16 %v435
      %v573 = vunpack.c.l.b16 %v436
      %v574 = vunpack.c.h.b16 %v436
      %v575 = vunpack.c.l.b16 %v437
      %v576 = vunpack.c.h.b16 %v437
      %v577 = vunpack.c.l.b16 %v438
      %v578 = vunpack.c.h.b16 %v438
      %v579 = vunpack.c.l.b16 %v439
      %v580 = vunpack.c.h.b16 %v439
      %v581 = vunpack.c.l.b16 %v440
      %v582 = vunpack.c.h.b16 %v440
      %v583 = vunpack.c.l.b16 %v441
      %v584 = vunpack.c.h.b16 %v441
      %v585 = vunpack.c.l.b16 %v442
      %v586 = vunpack.c.h.b16 %v442
      %v587 = vunpack.c.l.b16 %v443
      %v588 = vunpack.c.h.b16 %v443
      %v589 = vunpack.c.l.b16 %v444
      %v590 = vunpack.c.h.b16 %v444
      %v591 = vunpack.c.l.b16 %v445
      %v592 = vunpack.c.h.b16 %v445
      %v593 = vunpack.c.l.b16 %v446
      %v594 = vunpack.c.h.b16 %v446
      %v595 = vunpack.c.l.b16 %v447
      %v596 = vunpack.c.h.b16 %v447
      %v597 = vunpack.c.l.b16 %v448
      %v598 = vunpack.c.h.b16 %v448
      %v599 = vunpack.c.l.b16 %v449
      %v600 = vunpack.c.h.b16 %v449
      %v601 = vunpack.c.l.b16 %v450
      %v602 = vunpack.c.h.b16 %v450
      %v603 = vunpack.c.l.b16 %v451
      %v604 = vunpack.c.h.b16 %v451
      %v605 = vunpack.c.l.b16 %v452
      %v606 = vunpack.c.h.b16 %v452
      %v607 = vunpack.c.l.b16 %v453
      %v608 = vunpack.c.h.b16 %v453
      %v609 = vunpack.c.l.b16 %v454
      %v610 = vunpack.c.h.b16 %v454
      %v611 = vunpack.c.l.b16 %v455
      %v612 = vunpack.c.h.b16 %v455
      %v613 = vunpack.c.l.b16 %v456
      %v614 = vunpack.c.h.b16 %v456
      %v615 = vunpack.c.l.b16 %v457
      %v616 = vunpack.c.h.b16 %v457
      %v617 = vunpack.c.l.b16 %v458
      %v618 = vunpack.c.h.b16 %v458
      %v619 = vunpack.c.l.b16 %v459
      %v620 = vunpack.c.h.b16 %v459
      %v621 = vunpack.c.l.b16 %v460
      %v622 = vunpack.c.h.b16 %v460
      %v623 = vunpack.c.l.b16 %v461
      %v624 = vunpack.c.h.b16 %v461
      %v625 = vunpack.c.l.b16 %v462
      %v626 = vunpack.c.h.b16 %v462
      %v627 = vunpack.c.l.b16 %v463
      %v628 = vunpack.c.h.b16 %v463
      %v629 = vunpack.c.l.b16 %v464
      %v630 = vunpack.c.h.b16 %v464
      %v631 = vunpack.c.l.b16 %v465
      %v632 = vunpack.c.h.b16 %v465
      %v633 = vunpack.c.l.b16 %v466
      %v634 = vunpack.c.h.b16 %v466
      %v635 = vunpack.c.l.b16 %v467
      %v636 = vunpack.c.h.b16 %v467
      %v637 = vunpack.c.l.b16 %v468
      %v638 = vunpack.c.h.b16 %v468
      %v639 = vunpack.c.l.b16 %v469
      %v640 = vunpack.c.h.b16 %v469
      %v641 = vunpack.c.l.b16 %v470
      %v642 = vunpack.c.h.b16 %v470
      %v643 = vunpack.c.l.b16 %v471
      %v644 = vunpack.c.h.b16 %v471
      %v645 = vunpack.c.l.b16 %v472
      %v646 = vunpack.c.h.b16 %v472
      %v647 = vunpack.c.l.b16 %v473
      %v648 = vunpack.c.h.b16 %v473
      %v649 = vunpack.c.l.b16 %v474
      %v650 = vunpack.c.h.b16 %v474
      %v651 = vunpack.c.l.b16 %v475
      %v652 = vunpack.c.h.b16 %v475
      %v653 = vunpack.c.l.b16 %v476
      %v654 = vunpack.c.h.b16 %v476
      %v655 = vunpack.c.l.b16 %v477
      %v656 = vunpack.c.h.b16 %v477
      %v657 = vunpack.c.l.b16 %v478
      %v658 = vunpack.c.h.b16 %v478
      %v659 = vunpack.c.l.b16 %v479
      %v660 = vunpack.c.h.b16 %v479
      %v661 = vunpack.c.l.b16 %v480
      %v662 = vunpack.c.h.b16 %v480
      %v663 = vunpack.c.l.b16 %v481
      %v664 = vunpack.c.h.b16 %v481
      %v665 = vunpack.c.l.b16 %v482
      %v666 = vunpack.c.h.b16 %v482
      %v667 = vunpack.c.l.b16 %v483
      %v668 = vunpack.c.h.b16 %v483
      %v669 = vunpack.c.l.b16 %v484
      %v670 = vunpack.c.h.b16 %v484
      %v671 = vunpack.c.l.b16 %v485
      %v672 = vunpack.c.h.b16 %v485
      %v673 = vunpack.c.l.b16 %v486
      %v674 = vunpack.c.h.b16 %v486
      %v675 = vunpack.c.l.b16 %v487
      %v676 = vunpack.c.h.b16 %v487
      %v677 = vunpack.c.l.b16 %v488
      %v678 = vunpack.c.h.b16 %v488
      %v679 = vunpack.c.l.b16 %v489
      %v680 = vunpack.c.h.b16 %v489
      %v681 = vunpack.c.l.b16 %v490
      %v682 = vunpack.c.h.b16 %v490
      %v683 = vpack.c.b16 %v563, %v555
      %v684 = vpack.c.b16 %v564, %v556
      %v685 = vpack.c.b16 %v565, %v557
      %v686 = vpack.c.b16 %v566, %v558
      %v687 = vpack.c.b16 %v567, %v559
      %v688 = vpack.c.b16 %v568, %v560
      %v689 = vpack.c.b16 %v569, %v561
      %v690 = vpack.c.b16 %v570, %v562
      %v691 = vpack.c.b16 %v579, %v571
      %v692 = vpack.c.b16 %v580, %v572
      %v693 = vpack.c.b16 %v581, %v573
      %v694 = vpack.c.b16 %v582, %v574
      %v695 = vpack.c.b16 %v583, %v575
      %v696 = vpack.c.b16 %v584, %v576
      %v697 = vpack.c.b16 %v585, %v577
      %v698 = vpack.c.b16 %v586, %v578
      %v699 = vpack.c.b16 %v595, %v587
      %v700 = vpack.c.b16 %v596, %v588
      %v701 = vpack.c.b16 %v597, %v589
      %v702 = vpack.c.b16 %v598, %v590
      %v703 = vpack.c.b16 %v599, %v591
      %v704 = vpack.c.b16 %v600, %v592
      %v705 = vpack.c.b16 %v601, %v593
      %v706 = vpack.c.b16 %v602, %v594
      %v707 = vpack.c.b16 %v611, %v603
      %v708 = vpack.c.b16 %v612, %v604
      %v709 = vpack.c.b16 %v613, %v605
      %v710 = vpack.c.b16 %v614, %v606
      %v711 = vpack.c.b16 %v615, %v607
      %v712 = vpack.c.b16 %v616, %v608
      %v713 = vpack.c.b16 %v617, %v609
      %v714 = vpack.c.b16 %v618, %v610
      %v715 = vpack.c.b16 %v627, %v619
      %v716 = vpack.c.b16 %v628, %v620
      %v717 = vpack.c.b16 %v629, %v621
      %v718 = vpack.c.b16 %v630, %v622
      %v719 = vpack.c.b16 %v631, %v623
      %v720 = vpack.c.b16 %v632, %v624
      %v721 = vpack.c.b16 %v633, %v625
      %v722 = vpack.c.b16 %v634, %v626
      %v723 = vpack.c.b16 %v643, %v635
      %v724 = vpack.c.b16 %v644, %v636
      %v725 = vpack.c.b16 %v645, %v637
      %v726 = vpack.c.b16 %v646, %v638
      %v727 = vpack.c.b16 %v647, %v639
      %v728 = vpack.c.b16 %v648, %v640
      %v729 = vpack.c.b16 %v649, %v641
      %v730 = vpack.c.b16 %v650, %v642
      %v731 = vpack.c.b16 %v659, %v651
      %v732 = vpack.c.b16 %v660, %v652
      %v733 = vpack.c.b16 %v661, %v653
      %v734 = vpack.c.b16 %v662, %v654
      %v735 = vpack.c.b16 %v663, %v655
      %v736 = vpack.c.b16 %v664, %v656
      %v737 = vpack.c.b16 %v665, %v657
      %v738 = vpack.c.b16 %v666, %v658
      %v739 = vpack.c.b16 %v675, %v667
      %v740 = vpack.c.b16 %v676, %v668
      %v741 = vpack.c.b16 %v677, %v669
      %v742 = vpack.c.b16 %v678, %v670
      %v743 = vpack.c.b16 %v679, %v671
      %v744 = vpack.c.b16 %v680, %v672
      %v745 = vpack.c.b16 %v681, %v673
      %v746 = vpack.c.b16 %v682, %v674
      %811 = vmatpush.bf16.msra.mxu0 %v739
      %812 = vmatpush.bf16.msra.mxu0 %v731
      %813 = vmatpush.bf16.msra.mxu0 %v723
      %814 = vmatpush.bf16.msra.mxu0 %v715
      %815 = vmatpush.bf16.msra.mxu0 %v707
      %816 = vmatpush.bf16.msra.mxu0 %v699
      %817 = vmatpush.bf16.msra.mxu0 %v691
      %818 = vmatpush.bf16.msra.mxu0 %v683
      %819 = vmatmul.bf16.gmra.mxu0 %v426
      %v820 = vpop.f32.mrf.mxu0
      %v821 = vadd.f32 0.0, %v820
      %v822 = vpop.f32.mrf.mxu0
      %v823 = vadd.f32 0.0, %v822
      %824 = vdwg.mxu0
      %825 = vmatpush.bf16.msra.mxu0 %v740
      %826 = vmatpush.bf16.msra.mxu0 %v732
      %827 = vmatpush.bf16.msra.mxu0 %v724
      %828 = vmatpush.bf16.msra.mxu0 %v716
      %829 = vmatpush.bf16.msra.mxu0 %v708
      %830 = vmatpush.bf16.msra.mxu0 %v700
      %831 = vmatpush.bf16.msra.mxu0 %v692
      %832 = vmatpush.bf16.msra.mxu0 %v684
      %833 = vmatmul.bf16.gmra.mxu0 %v426
      %v834 = vpop.f32.mrf.mxu0
      %v835 = vadd.f32 0.0, %v834
      %v836 = vpop.f32.mrf.mxu0
      %v837 = vadd.f32 0.0, %v836
      %838 = vdwg.mxu0
      %839 = vmatpush.bf16.msra.mxu0 %v741
      %840 = vmatpush.bf16.msra.mxu0 %v733
      %841 = vmatpush.bf16.msra.mxu0 %v725
      %842 = vmatpush.bf16.msra.mxu0 %v717
      %843 = vmatpush.bf16.msra.mxu0 %v709
      %844 = vmatpush.bf16.msra.mxu0 %v701
      %845 = vmatpush.bf16.msra.mxu0 %v693
      %846 = vmatpush.bf16.msra.mxu0 %v685
      %847 = vmatmul.bf16.gmra.mxu0 %v426
      %v848 = vpop.f32.mrf.mxu0
      %v849 = vadd.f32 0.0, %v848
      %v850 = vpop.f32.mrf.mxu0
      %v851 = vadd.f32 0.0, %v850
      %852 = vdwg.mxu0
      %853 = vmatpush.bf16.msra.mxu0 %v742
      %854 = vmatpush.bf16.msra.mxu0 %v734
      %855 = vmatpush.bf16.msra.mxu0 %v726
      %856 = vmatpush.bf16.msra.mxu0 %v718
      %857 = vmatpush.bf16.msra.mxu0 %v710
      %858 = vmatpush.bf16.msra.mxu0 %v702
      %859 = vmatpush.bf16.msra.mxu0 %v694
      %860 = vmatpush.bf16.msra.mxu0 %v686
      %861 = vmatmul.bf16.gmra.mxu0 %v426
      %v862 = vpop.f32.mrf.mxu0
      %v863 = vadd.f32 0.0, %v862
      %v864 = vpop.f32.mrf.mxu0
      %v865 = vadd.f32 0.0, %v864
      %866 = vdwg.mxu0
      %867 = vmatpush.bf16.msra.mxu0 %v743
      %868 = vmatpush.bf16.msra.mxu0 %v735
      %869 = vmatpush.bf16.msra.mxu0 %v727
      %870 = vmatpush.bf16.msra.mxu0 %v719
      %871 = vmatpush.bf16.msra.mxu0 %v711
      %872 = vmatpush.bf16.msra.mxu0 %v703
      %873 = vmatpush.bf16.msra.mxu0 %v695
      %874 = vmatpush.bf16.msra.mxu0 %v687
      %875 = vmatmul.bf16.gmra.mxu0 %v426
      %v876 = vpop.f32.mrf.mxu0
      %v877 = vadd.f32 0.0, %v876
      %v878 = vpop.f32.mrf.mxu0
      %v879 = vadd.f32 0.0, %v878
      %880 = vdwg.mxu0
      %881 = vmatpush.bf16.msra.mxu0 %v744
      %882 = vmatpush.bf16.msra.mxu0 %v736
      %883 = vmatpush.bf16.msra.mxu0 %v728
      %884 = vmatpush.bf16.msra.mxu0 %v720
      %885 = vmatpush.bf16.msra.mxu0 %v712
      %886 = vmatpush.bf16.msra.mxu0 %v704
      %887 = vmatpush.bf16.msra.mxu0 %v696
      %888 = vmatpush.bf16.msra.mxu0 %v688
      %889 = vmatmul.bf16.gmra.mxu0 %v426
      %v890 = vpop.f32.mrf.mxu0
      %v891 = vadd.f32 0.0, %v890
      %v892 = vpop.f32.mrf.mxu0
      %v893 = vadd.f32 0.0, %v892
      %894 = vdwg.mxu0
      %895 = vmatpush.bf16.msra.mxu0 %v745
      %896 = vmatpush.bf16.msra.mxu0 %v737
      %897 = vmatpush.bf16.msra.mxu0 %v729
      %898 = vmatpush.bf16.msra.mxu0 %v721
      %899 = vmatpush.bf16.msra.mxu0 %v713
      %900 = vmatpush.bf16.msra.mxu0 %v705
      %901 = vmatpush.bf16.msra.mxu0 %v697
      %902 = vmatpush.bf16.msra.mxu0 %v689
      %903 = vmatmul.bf16.gmra.mxu0 %v426
      %v904 = vpop.f32.mrf.mxu0
      %v905 = vadd.f32 0.0, %v904
      %v906 = vpop.f32.mrf.mxu0
      %v907 = vadd.f32 0.0, %v906
      %908 = vdwg.mxu0
      %909 = vmatpush.bf16.msra.mxu0 %v746
      %910 = vmatpush.bf16.msra.mxu0 %v738
      %911 = vmatpush.bf16.msra.mxu0 %v730
      %912 = vmatpush.bf16.msra.mxu0 %v722
      %913 = vmatpush.bf16.msra.mxu0 %v714
      %914 = vmatpush.bf16.msra.mxu0 %v706
      %915 = vmatpush.bf16.msra.mxu0 %v698
      %916 = vmatpush.bf16.msra.mxu0 %v690
      %917 = vmatmul.bf16.gmra.mxu0 %v426
      %v918 = vpop.f32.mrf.mxu0
      %v919 = vadd.f32 0.0, %v918
      %v920 = vpop.f32.mrf.mxu0
      %v921 = vadd.f32 0.0, %v920
      %922 = vdwg.mxu0
      %v923 = vld [vmem:[#allocation2] sm:$0xff]
      %v924 = vld [vmem:[#allocation2 + $0x8] sm:$0xff]
      %v925 = vld [vmem:[#allocation2 + $0x10] sm:$0xff]
      %v926 = vld [vmem:[#allocation2 + $0x18] sm:$0xff]
      %v927 = vld [vmem:[#allocation2 + $0x20] sm:$0xff]
      %v928 = vld [vmem:[#allocation2 + $0x28] sm:$0xff]
      %v929 = vld [vmem:[#allocation2 + $0x30] sm:$0xff]
      %v930 = vld [vmem:[#allocation2 + $0x38] sm:$0xff]
      %v931 = vmax.f32 %v821, %v823
      %v932 = vmax.f32 %v835, %v837
      %v933 = vmax.f32 %v849, %v851
      %v934 = vmax.f32 %v863, %v865
      %v935 = vmax.f32 %v877, %v879
      %v936 = vmax.f32 %v891, %v893
      %v937 = vmax.f32 %v905, %v907
      %v938 = vmax.f32 %v919, %v921
      %v939 = vmax.f32 %v923, %v931
      %v940 = vmax.f32 %v924, %v932
      %v941 = vmax.f32 %v925, %v933
      %v942 = vmax.f32 %v926, %v934
      %v943 = vmax.f32 %v927, %v935
      %v944 = vmax.f32 %v928, %v936
      %v945 = vmax.f32 %v929, %v937
      %v946 = vmax.f32 %v930, %v938
      %947 = vst [vmem:[#allocation2] sm:$0xff] %v939
      %948 = vst [vmem:[#allocation2 + $0x8] sm:$0xff] %v940
      %949 = vst [vmem:[#allocation2 + $0x10] sm:$0xff] %v941
      %950 = vst [vmem:[#allocation2 + $0x18] sm:$0xff] %v942
      %951 = vst [vmem:[#allocation2 + $0x20] sm:$0xff] %v943
      %952 = vst [vmem:[#allocation2 + $0x28] sm:$0xff] %v944
      %953 = vst [vmem:[#allocation2 + $0x30] sm:$0xff] %v945
      %954 = vst [vmem:[#allocation2 + $0x38] sm:$0xff] %v946
      // Predicated region
      $region53: #{pointnet_encoder.3} parent=47 // pred_check
        %p955 = pneg %p325
      $region54: #{pointnet_encoder.3} parent=47 // pred_check_branch
        %957 = sbr.rel (%p955) target = $region56
      $region55: #{pointnet_encoder.3} parent=47 // pred_region
        %v958 = vld [vmem:[#allocation2] sm:$0xff]
        %v959 = vld [vmem:[#allocation2 + $0x8] sm:$0xff]
        %v960 = vld [vmem:[#allocation2 + $0x10] sm:$0xff]
        %v961 = vld [vmem:[#allocation2 + $0x18] sm:$0xff]
        %v962 = vld [vmem:[#allocation2 + $0x20] sm:$0xff]
        %v963 = vld [vmem:[#allocation2 + $0x28] sm:$0xff]
        %v964 = vld [vmem:[#allocation2 + $0x30] sm:$0xff]
        %v965 = vld [vmem:[#allocation2 + $0x38] sm:$0xff]
        %v966 = vrot.slane %v958, 4
        %v967 = vmax.f32 %v958, %v966
        %v968 = vrot.slane %v967, 2
        %v969 = vmax.f32 %v967, %v968
        %v970 = vrot.slane %v969, 1
        %v971 = vmax.f32 %v969, %v970
        %v972 = vrot.slane %v959, 4
        %v973 = vmax.f32 %v959, %v972
        %v974 = vrot.slane %v973, 2
        %v975 = vmax.f32 %v973, %v974
        %v976 = vrot.slane %v975, 1
        %v977 = vmax.f32 %v975, %v976
        %v978 = vrot.slane %v960, 4
        %v979 = vmax.f32 %v960, %v978
        %v980 = vrot.slane %v979, 2
        %v981 = vmax.f32 %v979, %v980
        %v982 = vrot.slane %v981, 1
        %v983 = vmax.f32 %v981, %v982
        %v984 = vrot.slane %v961, 4
        %v985 = vmax.f32 %v961, %v984
        %v986 = vrot.slane %v985, 2
        %v987 = vmax.f32 %v985, %v986
        %v988 = vrot.slane %v987, 1
        %v989 = vmax.f32 %v987, %v988
        %v990 = vrot.slane %v962, 4
        %v991 = vmax.f32 %v962, %v990
        %v992 = vrot.slane %v991, 2
        %v993 = vmax.f32 %v991, %v992
        %v994 = vrot.slane %v993, 1
        %v995 = vmax.f32 %v993, %v994
        %v996 = vrot.slane %v963, 4
        %v997 = vmax.f32 %v963, %v996
        %v998 = vrot.slane %v997, 2
        %v999 = vmax.f32 %v997, %v998
        %v1000 = vrot.slane %v999, 1
        %v1001 = vmax.f32 %v999, %v1000
        %v1002 = vrot.slane %v964, 4
        %v1003 = vmax.f32 %v964, %v1002
        %v1004 = vrot.slane %v1003, 2
        %v1005 = vmax.f32 %v1003, %v1004
        %v1006 = vrot.slane %v1005, 1
        %v1007 = vmax.f32 %v1005, %v1006
        %v1008 = vrot.slane %v965, 4
        %v1009 = vmax.f32 %v965, %v1008
        %v1010 = vrot.slane %v1009, 2
        %v1011 = vmax.f32 %v1009, %v1010
        %v1012 = vrot.slane %v1011, 1
        %v1013 = vmax.f32 %v1011, %v1012
        %v1014 = vld [vmem:[%s6] sm:$0xff]
        %v1016 = vperm.slane %v1014, 0
        %v1017 = vperm.slane %v1014, 1
        %v1018 = vperm.slane %v1014, 2
        %v1019 = vperm.slane %v1014, 3
        %v1020 = vperm.slane %v1014, 4
        %v1021 = vperm.slane %v1014, 5
        %v1022 = vperm.slane %v1014, 6
        %v1023 = vperm.slane %v1014, 7
        %v1032 = vadd.f32 %v971, %v1016
        %v1033 = vadd.f32 %v977, %v1017
        %v1034 = vadd.f32 %v983, %v1018
        %v1035 = vadd.f32 %v989, %v1019
        %v1036 = vadd.f32 %v995, %v1020
        %v1037 = vadd.f32 %v1001, %v1021
        %v1038 = vadd.f32 %v1007, %v1022
        %v1039 = vadd.f32 %v1013, %v1023
        %v1040 = vmax.f32 %v1032, 0.0
        %v1041 = vmax.f32 %v1033, 0.0
        %v1042 = vmax.f32 %v1034, 0.0
        %v1043 = vmax.f32 %v1035, 0.0
        %v1044 = vmax.f32 %v1036, 0.0
        %v1045 = vmax.f32 %v1037, 0.0
        %v1046 = vmax.f32 %v1038, 0.0
        %v1047 = vmax.f32 %v1039, 0.0
        %v1056 = vrot.slane %v1041, 7
        %v1057 = vrot.slane %v1042, 6
        %v1058 = vrot.slane %v1043, 5
        %v1059 = vrot.slane %v1044, 4
        %v1060 = vrot.slane %v1045, 3
        %v1061 = vrot.slane %v1046, 2
        %v1062 = vrot.slane %v1047, 1
        %v1063 = vsel %vm349, %v1040, %v1056
        %vm1064 = vcmask 1042434
        %v1065 = vsel %vm1064, %v1057, %v1058
        %vm1066 = vcmask 1041408
        %v1067 = vsel %vm1066, %v1063, %v1065
        %vm1068 = vcmask 1044484
        %v1069 = vsel %vm1068, %v1059, %v1060
        %vm1070 = vcmask 1046534
        %v1071 = vsel %vm1070, %v1061, %v1062
        %vm1072 = vcmask 1045508
        %v1073 = vsel %vm1072, %v1069, %v1071
        %vm1074 = vcmask 1043456
        %v1075 = vsel %vm1074, %v1067, %v1073
        %1077 = vst [vmem:[%s322] sm:$0xff] %v1075
      $region56: #{pointnet_encoder.3} parent=47 // pred_fallthru
        _
      %s1078 = sadd.s32 %s24, %s23
      %p1079 = scmp.lt.s32.totalorder %s1078, 1
      %s1080 = scalar_select %p1079, %s1078, 1
      %s1081 = smul.addr %s1080, 8
      %s1082 = scalar_lea.vmem %s7, %s1081
      // Predicated region
      $region57: #{pointnet_encoder.3} parent=47 // pred_check
        %p1083 = pneg %p213
      $region58: #{pointnet_encoder.3} parent=47 // pred_check_branch
        %1085 = sbr.rel (%p1083) target = $region60
      $region59: #{pointnet_encoder.3} parent=47 // pred_region
        %s1086 = sadd.s32 %s24, %s23
      $region60: #{pointnet_encoder.3} parent=47 // pred_fallthru
        _
    $region48: #{pointnet_encoder.3} parent=5 // pred_fallthru
      _
    %p1087 = scmp.le.s32.totalorder 2, %s13
    // Predicated region
    $region61: #{pointnet_encoder.3} parent=5 // pred_check
      %p1088 = pneg %p1087
    $region62: #{pointnet_encoder.3} parent=5 // pred_check_branch
      %1090 = sbr.rel (%p1088) target = $region64
    $region63: #{pointnet_encoder.3} parent=5 // pred_region
      %s1091 = ssub.s32 %s13, 2
      // Predicated region
      $region65: #{pointnet_encoder.3} parent=63 // pred_check
        %p1092 = pneg %p219
      $region66: #{pointnet_encoder.3} parent=63 // pred_check_branch
        %1094 = sbr.rel (%p1092) target = $region68
      $region67: #{pointnet_encoder.3} parent=63 // pred_region
        %s1095 = sadd.s32 %s27, %s26
        %p1096 = scmp.lt.s32.totalorder %s1095, 1
        %s1097 = scalar_select %p1096, %s1095, 1
        %s1098 = smul.addr %s1097, 8
        %s1099 = scalar_lea.vmem %s7, %s1098
      $region68: #{pointnet_encoder.3} parent=63 // pred_fallthru
        _
    $region64: #{pointnet_encoder.3} parent=5 // pred_fallthru
      _
  $region6: #{pointnet_encoder.3} parent=0 // loop_footer
    %s17 = sadd.s32 1, %s13
  $region7: #{pointnet_encoder.3} parent=0 // loop_footer_branch
    %12 = sbr.rel target = $region3
  $region8: #{pointnet_encoder.3} parent=0 // loop_exit
    _

// kernel: pointnet_encoder.5
$region0: #{pointnet_encoder.5}
  #allocation0 [shape = 'u32[]', space=smem, size = 0x4, offset = 0x4, fixed_abs, tag = 'smem constant byte address 0x4 - core index']
  #allocation1 [shape = 'u32[72,128]{1,0:T(1,128)}', space=vmem, size = 0x9000, scoped, tag = 'internal scratch']
  #allocation2 [shape = 'f32[8,1024]{1,0:T(8,128)}', space=vmem, size = 0x8000, scoped, tag = 'scratch operand']
  %s0 = inlined_call_operand.vmem [shape: f32[2,16,2], index: 0, kind: input, shape index: {}]
  %s1 = inlined_call_operand.vmem [shape: bf16[2,2,64], index: 1, kind: input, shape index: {}]
  %s2 = inlined_call_operand.vmem [shape: f32[1,64], index: 2, kind: input, shape index: {}]
  %s3 = inlined_call_operand.vmem [shape: bf16[64,128], index: 3, kind: input, shape index: {}]
  %s4 = inlined_call_operand.vmem [shape: f32[1,128], index: 4, kind: input, shape index: {}]
  %s5 = inlined_call_operand.vmem [shape: bf16[128,1024], index: 5, kind: input, shape index: {}]
  %s6 = inlined_call_operand.vmem [shape: f32[1,1024], index: 6, kind: input, shape index: {}]
  %s7 = inlined_call_operand.vmem [shape: f32[2,1,1024], index: 7, kind: output, shape index: {}]
  %s8 = sld [smem:[#allocation0]]
  $region69: #{pointnet_encoder.5} parent=0
    _
  %s10 = ssub.s32 1, %s8
  %s11 = scalar_select 0, %s10, %s8
  loop: start=0, step=1, limit=4
  $region2: #{pointnet_encoder.5} parent=0 // loop_pre_header
    _
  $region3: #{pointnet_encoder.5} parent=0 // loop_header
    %s13 = sphi 0, %s17
    %p14 = scmp.ge.s32.totalorder %s13, 4
    %s20 = sphi 0, %s39
    %s21 = sphi 0, %s35
    %s22 = sphi 0, %s31
    %s23 = sphi 0, %s20
    %s24 = sphi 0, %s21
    %s25 = sphi 0, %s22
    %s26 = sphi 0, %s23
    %s27 = sphi 0, %s24
    %s28 = sphi 0, %s25
    %s46 = sphi 0, %s48
    %s49 = sphi 0, %s46
    %s50 = sphi 0, %s49
    %s66 = sphi 0, %s50
    %s72 = sphi 0, %s74
    %s75 = sphi 0, %s72
    %s76 = sphi 0, %s75
    %s92 = sphi 0, %s76
    %s96 = sphi 0, %s96
    %s98 = sphi 0, %s96
    %s99 = sphi 0, %s98
    %s113 = sphi 0, %s99
    %s117 = sphi 0, %s117
    %s119 = sphi 0, %s117
    %s120 = sphi 0, %s119
    %s134 = sphi 0, %s120
    %s138 = sphi 0, %s138
    %s140 = sphi 0, %s138
    %s141 = sphi 0, %s140
    %s155 = sphi 0, %s141
    %s159 = sphi 0, %s159
    %s161 = sphi 0, %s159
    %s162 = sphi 0, %s161
    %s176 = sphi 0, %s162
    %s180 = sphi 0, %s180
    %s182 = sphi 0, %s180
    %s183 = sphi 0, %s182
    %s197 = sphi 0, %s183
    %s205 = sphi 0, %s207
    %s208 = sphi 0, %s205
    %s209 = sphi 0, %s208
    %s225 = sphi 0, %s209
  $region4: #{pointnet_encoder.5} parent=0 // loop_header_branch
    %16 = sbr.rel (%p14) target = $region8
  $region5: #{pointnet_encoder.5} parent=0 // loop_body
    %s18 = ssub.s32 %s13, 1
    %s19 = ssub.s32 %s13, 2
    %s29 = sadd.s32 1, %s22
    %p30 = scmp.ge.s32.totalorder %s29, 1
    %s31 = scalar_select %p30, 0, %s29
    %s32 = sadd.s32 1, %s21
    %s33 = scalar_select %p30, %s32, %s21
    %p34 = scmp.ge.s32.totalorder %s33, 2
    %s35 = scalar_select %p34, 0, %s33
    %s36 = sadd.s32 1, %s20
    %s37 = scalar_select %p34, %s36, %s20
    %p38 = scmp.ge.s32.totalorder %s37, 1
    %s39 = scalar_select %p38, 0, %s37
    %s40 = sadd.s32 %s20, %s22
    %s41 = sadd.s32 %s39, %s31
    %s42 = ssub.s32 %s21, %s35
    %s43 = ssub.s32 %s40, %s41
    %s44 = sor.u32 %s42, %s43
    %p45 = scmp.eq.s32.totalorder %s44, 0
    %s47 = sadd.s32 %s46, 1
    %s48 = scalar_select %p45, %s46, %s47
    %p51 = pneg %p45
    %p52 = scmp.eq.s32.totalorder %s13, 1
    %p53 = por %p51, %p52
    %p54 = scmp.ne.s32.totalorder %s46, %s49
    %p55 = scmp.eq.s32.totalorder %s13, 0
    %p56 = por %p54, %p55
    %p57 = scmp.ne.s32.totalorder %s46, %s49
    %p58 = scmp.eq.s32.totalorder %s18, 1
    %p59 = por %p57, %p58
    %p60 = scmp.ne.s32.totalorder %s49, %s50
    %p61 = scmp.eq.s32.totalorder %s18, 0
    %p62 = por %p60, %p61
    %p63 = scmp.ne.s32.totalorder %s49, %s50
    %p64 = scmp.eq.s32.totalorder %s19, 1
    %p65 = por %p63, %p64
    %p67 = scmp.ne.s32.totalorder %s50, %s66
    %p68 = scmp.eq.s32.totalorder %s19, 0
    %p69 = por %p67, %p68
    %s70 = ssub.s32 %s21, %s35
    %p71 = scmp.eq.s32.totalorder %s70, 0
    %s73 = sadd.s32 %s72, 1
    %s74 = scalar_select %p71, %s72, %s73
    %p77 = pneg %p71
    %p78 = scmp.eq.s32.totalorder %s13, 1
    %p79 = por %p77, %p78
    %p80 = scmp.ne.s32.totalorder %s72, %s75
    %p81 = scmp.eq.s32.totalorder %s13, 0
    %p82 = por %p80, %p81
    %p83 = scmp.ne.s32.totalorder %s72, %s75
    %p84 = scmp.eq.s32.totalorder %s18, 1
    %p85 = por %p83, %p84
    %p86 = scmp.ne.s32.totalorder %s75, %s76
    %p87 = scmp.eq.s32.totalorder %s18, 0
    %p88 = por %p86, %p87
    %p89 = scmp.ne.s32.totalorder %s75, %s76
    %p90 = scmp.eq.s32.totalorder %s19, 1
    %p91 = por %p89, %p90
    %p93 = scmp.ne.s32.totalorder %s76, %s92
    %p94 = scmp.eq.s32.totalorder %s19, 0
    %p95 = por %p93, %p94
    %s97 = sadd.s32 %s96, 1
    %p100 = scmp.eq.s32.totalorder %s13, 1
    %p101 = scmp.ne.s32.totalorder %s96, %s98
    %p102 = scmp.eq.s32.totalorder %s13, 0
    %p103 = por %p101, %p102
    %p104 = scmp.ne.s32.totalorder %s96, %s98
    %p105 = scmp.eq.s32.totalorder %s18, 1
    %p106 = por %p104, %p105
    %p107 = scmp.ne.s32.totalorder %s98, %s99
    %p108 = scmp.eq.s32.totalorder %s18, 0
    %p109 = por %p107, %p108
    %p110 = scmp.ne.s32.totalorder %s98, %s99
    %p111 = scmp.eq.s32.totalorder %s19, 1
    %p112 = por %p110, %p111
    %p114 = scmp.ne.s32.totalorder %s99, %s113
    %p115 = scmp.eq.s32.totalorder %s19, 0
    %p116 = por %p114, %p115
    %s118 = sadd.s32 %s117, 1
    %p121 = scmp.eq.s32.totalorder %s13, 1
    %p122 = scmp.ne.s32.totalorder %s117, %s119
    %p123 = scmp.eq.s32.totalorder %s13, 0
    %p124 = por %p122, %p123
    %p125 = scmp.ne.s32.totalorder %s117, %s119
    %p126 = scmp.eq.s32.totalorder %s18, 1
    %p127 = por %p125, %p126
    %p128 = scmp.ne.s32.totalorder %s119, %s120
    %p129 = scmp.eq.s32.totalorder %s18, 0
    %p130 = por %p128, %p129
    %p131 = scmp.ne.s32.totalorder %s119, %s120
    %p132 = scmp.eq.s32.totalorder %s19, 1
    %p133 = por %p131, %p132
    %p135 = scmp.ne.s32.totalorder %s120, %s134
    %p136 = scmp.eq.s32.totalorder %s19, 0
    %p137 = por %p135, %p136
    %s139 = sadd.s32 %s138, 1
    %p142 = scmp.eq.s32.totalorder %s13, 1
    %p143 = scmp.ne.s32.totalorder %s138, %s140
    %p144 = scmp.eq.s32.totalorder %s13, 0
    %p145 = por %p143, %p144
    %p146 = scmp.ne.s32.totalorder %s138, %s140
    %p147 = scmp.eq.s32.totalorder %s18, 1
    %p148 = por %p146, %p147
    %p149 = scmp.ne.s32.totalorder %s140, %s141
    %p150 = scmp.eq.s32.totalorder %s18, 0
    %p151 = por %p149, %p150
    %p152 = scmp.ne.s32.totalorder %s140, %s141
    %p153 = scmp.eq.s32.totalorder %s19, 1
    %p154 = por %p152, %p153
    %p156 = scmp.ne.s32.totalorder %s141, %s155
    %p157 = scmp.eq.s32.totalorder %s19, 0
    %p158 = por %p156, %p157
    %s160 = sadd.s32 %s159, 1
    %p163 = scmp.eq.s32.totalorder %s13, 1
    %p164 = scmp.ne.s32.totalorder %s159, %s161
    %p165 = scmp.eq.s32.totalorder %s13, 0
    %p166 = por %p164, %p165
    %p167 = scmp.ne.s32.totalorder %s159, %s161
    %p168 = scmp.eq.s32.totalorder %s18, 1
    %p169 = por %p167, %p168
    %p170 = scmp.ne.s32.totalorder %s161, %s162
    %p171 = scmp.eq.s32.totalorder %s18, 0
    %p172 = por %p170, %p171
    %p173 = scmp.ne.s32.totalorder %s161, %s162
    %p174 = scmp.eq.s32.totalorder %s19, 1
    %p175 = por %p173, %p174
    %p177 = scmp.ne.s32.totalorder %s162, %s176
    %p178 = scmp.eq.s32.totalorder %s19, 0
    %p179 = por %p177, %p178
    %s181 = sadd.s32 %s180, 1
    %p184 = scmp.eq.s32.totalorder %s13, 1
    %p185 = scmp.ne.s32.totalorder %s180, %s182
    %p186 = scmp.eq.s32.totalorder %s13, 0
    %p187 = por %p185, %p186
    %p188 = scmp.ne.s32.totalorder %s180, %s182
    %p189 = scmp.eq.s32.totalorder %s18, 1
    %p190 = por %p188, %p189
    %p191 = scmp.ne.s32.totalorder %s182, %s183
    %p192 = scmp.eq.s32.totalorder %s18, 0
    %p193 = por %p191, %p192
    %p194 = scmp.ne.s32.totalorder %s182, %s183
    %p195 = scmp.eq.s32.totalorder %s19, 1
    %p196 = por %p194, %p195
    %p198 = scmp.ne.s32.totalorder %s183, %s197
    %p199 = scmp.eq.s32.totalorder %s19, 0
    %p200 = por %p198, %p199
    %s201 = sadd.s32 %s21, %s20
    %s202 = sadd.s32 %s35, %s39
    %s203 = ssub.s32 %s201, %s202
    %p204 = scmp.eq.s32.totalorder %s203, 0
    %s206 = sadd.s32 %s205, 1
    %s207 = scalar_select %p204, %s205, %s206
    %p210 = pneg %p204
    %p211 = scmp.eq.s32.totalorder %s13, 1
    %p212 = por %p210, %p211
    %p213 = scmp.ne.s32.totalorder %s205, %s208
    %p214 = scmp.eq.s32.totalorder %s13, 0
    %p215 = por %p213, %p214
    %p216 = scmp.ne.s32.totalorder %s205, %s208
    %p217 = scmp.eq.s32.totalorder %s18, 1
    %p218 = por %p216, %p217
    %p219 = scmp.ne.s32.totalorder %s208, %s209
    %p220 = scmp.eq.s32.totalorder %s18, 0
    %p221 = por %p219, %p220
    %p222 = scmp.ne.s32.totalorder %s208, %s209
    %p223 = scmp.eq.s32.totalorder %s19, 1
    %p224 = por %p222, %p223
    %p226 = scmp.ne.s32.totalorder %s209, %s225
    %p227 = scmp.eq.s32.totalorder %s19, 0
    %p228 = por %p226, %p227
    %p229 = scmp.le.s32.totalorder 1, %s13
    %p230 = scmp.lt.s32.totalorder %s13, 3
    %p231 = pnand %p229, %p230
    %p232 = pneg %p231
    // Predicated region
    $region9: #{pointnet_encoder.5} parent=5 // pred_check
      _
    $region10: #{pointnet_encoder.5} parent=5 // pred_check_branch
      %234 = sbr.rel (%p231) target = $region12
    $region11: #{pointnet_encoder.5} parent=5 // pred_region
      %s235 = ssub.s32 %s13, 1
      // Predicated region
      $region13: #{pointnet_encoder.5} parent=11 // pred_check
        %p236 = pneg %p109
      $region14: #{pointnet_encoder.5} parent=11 // pred_check_branch
        %238 = sbr.rel (%p236) target = $region16
      $region15: #{pointnet_encoder.5} parent=11 // pred_region
        _
      $region16: #{pointnet_encoder.5} parent=11 // pred_fallthru
        _
      // Predicated region
      $region17: #{pointnet_encoder.5} parent=11 // pred_check
        %p239 = pneg %p130
      $region18: #{pointnet_encoder.5} parent=11 // pred_check_branch
        %241 = sbr.rel (%p239) target = $region20
      $region19: #{pointnet_encoder.5} parent=11 // pred_region
        _
      $region20: #{pointnet_encoder.5} parent=11 // pred_fallthru
        _
      // Predicated region
      $region21: #{pointnet_encoder.5} parent=11 // pred_check
        %p242 = pneg %p151
      $region22: #{pointnet_encoder.5} parent=11 // pred_check_branch
        %244 = sbr.rel (%p242) target = $region24
      $region23: #{pointnet_encoder.5} parent=11 // pred_region
        _
      $region24: #{pointnet_encoder.5} parent=11 // pred_fallthru
        _
      // Predicated region
      $region25: #{pointnet_encoder.5} parent=11 // pred_check
        %p245 = pneg %p172
      $region26: #{pointnet_encoder.5} parent=11 // pred_check_branch
        %247 = sbr.rel (%p245) target = $region28
      $region27: #{pointnet_encoder.5} parent=11 // pred_region
        _
      $region28: #{pointnet_encoder.5} parent=11 // pred_fallthru
        _
      // Predicated region
      $region29: #{pointnet_encoder.5} parent=11 // pred_check
        %p248 = pneg %p193
      $region30: #{pointnet_encoder.5} parent=11 // pred_check_branch
        %250 = sbr.rel (%p248) target = $region32
      $region31: #{pointnet_encoder.5} parent=11 // pred_region
        _
      $region32: #{pointnet_encoder.5} parent=11 // pred_fallthru
        _
    $region12: #{pointnet_encoder.5} parent=5 // pred_fallthru
      _
    %p251 = scmp.lt.s32.totalorder %s13, 2
    // Predicated region
    $region33: #{pointnet_encoder.5} parent=5 // pred_check
      %p252 = pneg %p251
    $region34: #{pointnet_encoder.5} parent=5 // pred_check_branch
      %254 = sbr.rel (%p252) target = $region36
    $region35: #{pointnet_encoder.5} parent=5 // pred_region
      // Predicated region
      $region37: #{pointnet_encoder.5} parent=35 // pred_check
        %p255 = pneg %p56
      $region38: #{pointnet_encoder.5} parent=35 // pred_check_branch
        %257 = sbr.rel (%p255) target = $region40
      $region39: #{pointnet_encoder.5} parent=35 // pred_region
        %s258 = sadd.s32 %s20, %s22
        %s259 = smul.u32 2, %s258
        %p260 = scmp.lt.s32.totalorder %s21, 1
        %s261 = scalar_select %p260, %s21, 1
        %p262 = scmp.lt.s32.totalorder %s259, 1
        %s263 = scalar_select %p262, %s259, 1
        %s264 = smul.addr %s261, 2
        %s265 = sadd.s32 %s263, %s264
        %s266 = smul.addr %s265, 8
        %s267 = scalar_lea.vmem %s0, %s266
        %s268 = sadd.s32 %s20, %s22
        %s269 = smul.u32 2, %s268
      $region40: #{pointnet_encoder.5} parent=35 // pred_fallthru
        _
      // Predicated region
      $region41: #{pointnet_encoder.5} parent=35 // pred_check
        %p270 = pneg %p82
      $region42: #{pointnet_encoder.5} parent=35 // pred_check_branch
        %272 = sbr.rel (%p270) target = $region44
      $region43: #{pointnet_encoder.5} parent=35 // pred_region
        %p273 = scmp.lt.s32.totalorder %s21, 1
        %s274 = scalar_select %p273, %s21, 1
        %s275 = scalar_lea.vmem %s1, %s274
      $region44: #{pointnet_encoder.5} parent=35 // pred_fallthru
        _
    $region36: #{pointnet_encoder.5} parent=5 // pred_fallthru
      _
    %p276 = scmp.le.s32.totalorder 1, %s13
    %p277 = scmp.lt.s32.totalorder %s13, 3
    %p278 = pnand %p276, %p277
    %p279 = pneg %p278
    // Predicated region
    $region45: #{pointnet_encoder.5} parent=5 // pred_check
      _
    $region46: #{pointnet_encoder.5} parent=5 // pred_check_branch
      %281 = sbr.rel (%p278) target = $region48
    $region47: #{pointnet_encoder.5} parent=5 // pred_region
      %s282 = ssub.s32 %s13, 1
      %s283 = sadd.s32 %s23, %s25
      %s284 = smul.u32 2, %s283
      %p285 = scmp.lt.s32.totalorder %s24, 1
      %s286 = scalar_select %p285, %s24, 1
      %p287 = scmp.lt.s32.totalorder %s284, 1
      %s288 = scalar_select %p287, %s284, 1
      %s289 = smul.addr %s286, 2
      %s290 = sadd.s32 %s288, %s289
      %s291 = smul.addr %s290, 8
      %s292 = scalar_lea.vmem %s0, %s291
      %p293 = pneg %p62
      %p294 = pneg %p59
      %p295 = scmp.lt.s32.totalorder %s24, 1
      %s296 = scalar_select %p295, %s24, 1
      %s297 = scalar_lea.vmem %s1, %s296
      %p298 = pneg %p88
      %p299 = pneg %p85
      %p300 = pneg %p109
      %p301 = pneg %p106
      %p302 = pneg %p130
      %p303 = pneg %p127
      %p304 = pneg %p151
      %p305 = pneg %p148
      %p306 = pneg %p172
      %p307 = pneg %p169
      %p308 = pneg %p193
      %p309 = pneg %p190
      %p310 = pneg %p221
      %p311 = pneg %p218
      %s312 = sadd.s32 %s24, %s23
      %p313 = scmp.lt.s32.totalorder %s312, 1
      %s314 = scalar_select %p313, %s312, 1
      %s315 = smul.addr %s314, 8
      %s316 = scalar_lea.vmem %s7, %s315
      %s317 = sadd.s32 %s23, %s25
      %s318 = smul.u32 2, %s317
      %p319 = scmp.lt.s32.totalorder %s24, 1
      %s320 = scalar_select %p319, %s24, 1
      %p321 = scmp.lt.s32.totalorder %s318, 1
      %s322 = scalar_select %p321, %s318, 1
      %s323 = smul.addr %s320, 2
      %s324 = sadd.s32 %s322, %s323
      %s325 = smul.addr %s324, 8
      %s326 = scalar_lea.vmem %s0, %s325
      %s327 = sadd.s32 %s23, %s25
      %s328 = smul.u32 2, %s327
      %p329 = scmp.lt.s32.totalorder %s24, 1
      %s330 = scalar_select %p329, %s24, 1
      %s331 = scalar_lea.vmem %s1, %s330
      %s332 = sadd.s32 %s24, %s23
      %p333 = scmp.lt.s32.totalorder %s332, 1
      %s334 = scalar_select %p333, %s332, 1
      %s335 = smul.addr %s334, 8
      %s336 = scalar_lea.vmem %s7, %s335
      %s337 = sadd.s32 %s24, %s23
      %p339 = scmp.eq.s32.totalorder %s25, 0
      // Predicated region
      $region49: #{pointnet_encoder.5} parent=47 // pred_check
        %p340 = pneg %p339
      $region50: #{pointnet_encoder.5} parent=47 // pred_check_branch
        %342 = sbr.rel (%p340) target = $region52
      $region51: #{pointnet_encoder.5} parent=47 // pred_region
        %343 = vst [vmem:[#allocation2] sm:$0xff] -inf
        %344 = vst [vmem:[#allocation2 + $0x8] sm:$0xff] -inf
        %345 = vst [vmem:[#allocation2 + $0x10] sm:$0xff] -inf
        %346 = vst [vmem:[#allocation2 + $0x18] sm:$0xff] -inf
        %347 = vst [vmem:[#allocation2 + $0x20] sm:$0xff] -inf
        %348 = vst [vmem:[#allocation2 + $0x28] sm:$0xff] -inf
        %349 = vst [vmem:[#allocation2 + $0x30] sm:$0xff] -inf
        %350 = vst [vmem:[#allocation2 + $0x38] sm:$0xff] -inf
      $region52: #{pointnet_encoder.5} parent=47 // pred_fallthru
        _
      %v351 = vld [vmem:[%s326] sm:$0xff]
      %v352 = vld [vmem:[%s326 + $0x8] sm:$0xff]
      %v353 = vpack.c.bf16 %v352, %v351
      %v354 = vld [vmem:[%s331] sm:$0x1]
      %v355 = vld [vmem:[%s2] sm:$0x1]
      %v357 = vperm.slane %v355, 0
      %vm359 = vcmask 15360
      %v361 = vsel %vm359, %v353, 0
      %vm363 = vcmask 1040384
      %v365 = vsel %vm363, %v354, 0
      %367 = vmatpush.bf16.msra.mxu0 0
      %368 = vmatpush.bf16.msra.mxu0 0
      %369 = vmatpush.bf16.msra.mxu0 0
      %370 = vmatpush.bf16.msra.mxu0 0
      %371 = vmatpush.bf16.msra.mxu0 0
      %372 = vmatpush.bf16.msra.mxu0 0
      %373 = vmatpush.bf16.msra.mxu0 0
      %374 = vmatpush.bf16.msra.mxu0 %v365
      %375 = vmatmul.bf16.gmra.mxu0 %v361
      %v376 = vpop.f32.mrf.mxu0
      %v377 = vadd.f32 %v357, %v376
      %v378 = vpop.f32.mrf.mxu0
      %v379 = vadd.f32 %v357, %v378
      %380 = vdwg.mxu0
      %v381 = vmax.f32 %v377, 0.0
      %v382 = vmax.f32 %v379, 0.0
      %v383 = vpack.c.bf16 %v382, %v381
      %v384 = vld [vmem:[%s3] sm:$0xf]
      %v385 = vld [vmem:[%s3 + $0x4] sm:$0xf]
      %v386 = vld [vmem:[%s3 + $0x8] sm:$0xf]
      %v387 = vld [vmem:[%s3 + $0xc] sm:$0xf]
      %v388 = vld [vmem:[%s3 + $0x10] sm:$0xf]
      %v389 = vld [vmem:[%s3 + $0x14] sm:$0xf]
      %v390 = vld [vmem:[%s3 + $0x18] sm:$0xf]
      %v391 = vld [vmem:[%s3 + $0x1c] sm:$0xf]
      %v392 = vld [vmem:[%s4] sm:$0x1]
      %v394 = vperm.slane %v392, 0
      %v404 = vunpack.c.l.b16 %v384
      %v405 = vunpack.c.l.b16 %v385
      %v406 = vunpack.c.l.b16 %v386
      %v407 = vunpack.c.l.b16 %v387
      %v408 = vunpack.c.l.b16 %v388
      %v409 = vunpack.c.l.b16 %v389
      %v410 = vunpack.c.l.b16 %v390
      %v411 = vunpack.c.l.b16 %v391
      %v412 = vpack.c.b16 %v405, %v404
      %v413 = vpack.c.b16 %v407, %v406
      %v414 = vpack.c.b16 %v409, %v408
      %v415 = vpack.c.b16 %v411, %v410
      %vm420 = vcmask 523264
      %v422 = vsel %vm420, %v383, 0
      %424 = vmatpush.bf16.msra.mxu0 0
      %425 = vmatpush.bf16.msra.mxu0 0
      %426 = vmatpush.bf16.msra.mxu0 0
      %427 = vmatpush.bf16.msra.mxu0 0
      %428 = vmatpush.bf16.msra.mxu0 %v415
      %429 = vmatpush.bf16.msra.mxu0 %v414
      %430 = vmatpush.bf16.msra.mxu0 %v413
      %431 = vmatpush.bf16.msra.mxu0 %v412
      %432 = vmatmul.bf16.gmra.mxu0 %v422
      %v433 = vpop.f32.mrf.mxu0
      %v434 = vadd.f32 %v394, %v433
      %v435 = vpop.f32.mrf.mxu0
      %v436 = vadd.f32 %v394, %v435
      %437 = vdwg.mxu0
      %v438 = vmax.f32 %v434, 0.0
      %v439 = vmax.f32 %v436, 0.0
      %v440 = vpack.c.bf16 %v439, %v438
      %v441 = vld [vmem:[%s5] sm:$0xff]
      %v442 = vld [vmem:[%s5 + $0x8] sm:$0xff]
      %v443 = vld [vmem:[%s5 + $0x10] sm:$0xff]
      %v444 = vld [vmem:[%s5 + $0x18] sm:$0xff]
      %v445 = vld [vmem:[%s5 + $0x20] sm:$0xff]
      %v446 = vld [vmem:[%s5 + $0x28] sm:$0xff]
      %v447 = vld [vmem:[%s5 + $0x30] sm:$0xff]
      %v448 = vld [vmem:[%s5 + $0x38] sm:$0xff]
      %v449 = vld [vmem:[%s5 + $0x40] sm:$0xff]
      %v450 = vld [vmem:[%s5 + $0x48] sm:$0xff]
      %v451 = vld [vmem:[%s5 + $0x50] sm:$0xff]
      %v452 = vld [vmem:[%s5 + $0x58] sm:$0xff]
      %v453 = vld [vmem:[%s5 + $0x60] sm:$0xff]
      %v454 = vld [vmem:[%s5 + $0x68] sm:$0xff]
      %v455 = vld [vmem:[%s5 + $0x70] sm:$0xff]
      %v456 = vld [vmem:[%s5 + $0x78] sm:$0xff]
      %v457 = vld [vmem:[%s5 + $0x80] sm:$0xff]
      %v458 = vld [vmem:[%s5 + $0x88] sm:$0xff]
      %v459 = vld [vmem:[%s5 + $0x90] sm:$0xff]
      %v460 = vld [vmem:[%s5 + $0x98] sm:$0xff]
      %v461 = vld [vmem:[%s5 + $0xa0] sm:$0xff]
      %v462 = vld [vmem:[%s5 + $0xa8] sm:$0xff]
      %v463 = vld [vmem:[%s5 + $0xb0] sm:$0xff]
      %v464 = vld [vmem:[%s5 + $0xb8] sm:$0xff]
      %v465 = vld [vmem:[%s5 + $0xc0] sm:$0xff]
      %v466 = vld [vmem:[%s5 + $0xc8] sm:$0xff]
      %v467 = vld [vmem:[%s5 + $0xd0] sm:$0xff]
      %v468 = vld [vmem:[%s5 + $0xd8] sm:$0xff]
      %v469 = vld [vmem:[%s5 + $0xe0] sm:$0xff]
      %v470 = vld [vmem:[%s5 + $0xe8] sm:$0xff]
      %v471 = vld [vmem:[%s5 + $0xf0] sm:$0xff]
      %v472 = vld [vmem:[%s5 + $0xf8] sm:$0xff]
      %v473 = vld [vmem:[%s5 + $0x100] sm:$0xff]
      %v474 = vld [vmem:[%s5 + $0x108] sm:$0xff]
      %v475 = vld [vmem:[%s5 + $0x110] sm:$0xff]
      %v476 = vld [vmem:[%s5 + $0x118] sm:$0xff]
      %v477 = vld [vmem:[%s5 + $0x120] sm:$0xff]
      %v478 = vld [vmem:[%s5 + $0x128] sm:$0xff]
      %v479 = vld [vmem:[%s5 + $0x130] sm:$0xff]
      %v480 = vld [vmem:[%s5 + $0x138] sm:$0xff]
      %v481 = vld [vmem:[%s5 + $0x140] sm:$0xff]
      %v482 = vld [vmem:[%s5 + $0x148] sm:$0xff]
      %v483 = vld [vmem:[%s5 + $0x150] sm:$0xff]
      %v484 = vld [vmem:[%s5 + $0x158] sm:$0xff]
      %v485 = vld [vmem:[%s5 + $0x160] sm:$0xff]
      %v486 = vld [vmem:[%s5 + $0x168] sm:$0xff]
      %v487 = vld [vmem:[%s5 + $0x170] sm:$0xff]
      %v488 = vld [vmem:[%s5 + $0x178] sm:$0xff]
      %v489 = vld [vmem:[%s5 + $0x180] sm:$0xff]
      %v490 = vld [vmem:[%s5 + $0x188] sm:$0xff]
      %v491 = vld [vmem:[%s5 + $0x190] sm:$0xff]
      %v492 = vld [vmem:[%s5 + $0x198] sm:$0xff]
      %v493 = vld [vmem:[%s5 + $0x1a0] sm:$0xff]
      %v494 = vld [vmem:[%s5 + $0x1a8] sm:$0xff]
      %v495 = vld [vmem:[%s5 + $0x1b0] sm:$0xff]
      %v496 = vld [vmem:[%s5 + $0x1b8] sm:$0xff]
      %v497 = vld [vmem:[%s5 + $0x1c0] sm:$0xff]
      %v498 = vld [vmem:[%s5 + $0x1c8] sm:$0xff]
      %v499 = vld [vmem:[%s5 + $0x1d0] sm:$0xff]
      %v500 = vld [vmem:[%s5 + $0x1d8] sm:$0xff]
      %v501 = vld [vmem:[%s5 + $0x1e0] sm:$0xff]
      %v502 = vld [vmem:[%s5 + $0x1e8] sm:$0xff]
      %v503 = vld [vmem:[%s5 + $0x1f0] sm:$0xff]
      %v504 = vld [vmem:[%s5 + $0x1f8] sm:$0xff]
      %v569 = vunpack.c.l.b16 %v441
      %v570 = vunpack.c.h.b16 %v441
      %v571 = vunpack.c.l.b16 %v442
      %v572 = vunpack.c.h.b16 %v442
      %v573 = vunpack.c.l.b16 %v443
      %v574 = vunpack.c.h.b16 %v443
      %v575 = vunpack.c.l.b16 %v444
      %v576 = vunpack.c.h.b16 %v444
      %v577 = vunpack.c.l.b16 %v445
      %v578 = vunpack.c.h.b16 %v445
      %v579 = vunpack.c.l.b16 %v446
      %v580 = vunpack.c.h.b16 %v446
      %v581 = vunpack.c.l.b16 %v447
      %v582 = vunpack.c.h.b16 %v447
      %v583 = vunpack.c.l.b16 %v448
      %v584 = vunpack.c.h.b16 %v448
      %v585 = vunpack.c.l.b16 %v449
      %v586 = vunpack.c.h.b16 %v449
      %v587 = vunpack.c.l.b16 %v450
      %v588 = vunpack.c.h.b16 %v450
      %v589 = vunpack.c.l.b16 %v451
      %v590 = vunpack.c.h.b16 %v451
      %v591 = vunpack.c.l.b16 %v452
      %v592 = vunpack.c.h.b16 %v452
      %v593 = vunpack.c.l.b16 %v453
      %v594 = vunpack.c.h.b16 %v453
      %v595 = vunpack.c.l.b16 %v454
      %v596 = vunpack.c.h.b16 %v454
      %v597 = vunpack.c.l.b16 %v455
      %v598 = vunpack.c.h.b16 %v455
      %v599 = vunpack.c.l.b16 %v456
      %v600 = vunpack.c.h.b16 %v456
      %v601 = vunpack.c.l.b16 %v457
      %v602 = vunpack.c.h.b16 %v457
      %v603 = vunpack.c.l.b16 %v458
      %v604 = vunpack.c.h.b16 %v458
      %v605 = vunpack.c.l.b16 %v459
      %v606 = vunpack.c.h.b16 %v459
      %v607 = vunpack.c.l.b16 %v460
      %v608 = vunpack.c.h.b16 %v460
      %v609 = vunpack.c.l.b16 %v461
      %v610 = vunpack.c.h.b16 %v461
      %v611 = vunpack.c.l.b16 %v462
      %v612 = vunpack.c.h.b16 %v462
      %v613 = vunpack.c.l.b16 %v463
      %v614 = vunpack.c.h.b16 %v463
      %v615 = vunpack.c.l.b16 %v464
      %v616 = vunpack.c.h.b16 %v464
      %v617 = vunpack.c.l.b16 %v465
      %v618 = vunpack.c.h.b16 %v465
      %v619 = vunpack.c.l.b16 %v466
      %v620 = vunpack.c.h.b16 %v466
      %v621 = vunpack.c.l.b16 %v467
      %v622 = vunpack.c.h.b16 %v467
      %v623 = vunpack.c.l.b16 %v468
      %v624 = vunpack.c.h.b16 %v468
      %v625 = vunpack.c.l.b16 %v469
      %v626 = vunpack.c.h.b16 %v469
      %v627 = vunpack.c.l.b16 %v470
      %v628 = vunpack.c.h.b16 %v470
      %v629 = vunpack.c.l.b16 %v471
      %v630 = vunpack.c.h.b16 %v471
      %v631 = vunpack.c.l.b16 %v472
      %v632 = vunpack.c.h.b16 %v472
      %v633 = vunpack.c.l.b16 %v473
      %v634 = vunpack.c.h.b16 %v473
      %v635 = vunpack.c.l.b16 %v474
      %v636 = vunpack.c.h.b16 %v474
      %v637 = vunpack.c.l.b16 %v475
      %v638 = vunpack.c.h.b16 %v475
      %v639 = vunpack.c.l.b16 %v476
      %v640 = vunpack.c.h.b16 %v476
      %v641 = vunpack.c.l.b16 %v477
      %v642 = vunpack.c.h.b16 %v477
      %v643 = vunpack.c.l.b16 %v478
      %v644 = vunpack.c.h.b16 %v478
      %v645 = vunpack.c.l.b16 %v479
      %v646 = vunpack.c.h.b16 %v479
      %v647 = vunpack.c.l.b16 %v480
      %v648 = vunpack.c.h.b16 %v480
      %v649 = vunpack.c.l.b16 %v481
      %v650 = vunpack.c.h.b16 %v481
      %v651 = vunpack.c.l.b16 %v482
      %v652 = vunpack.c.h.b16 %v482
      %v653 = vunpack.c.l.b16 %v483
      %v654 = vunpack.c.h.b16 %v483
      %v655 = vunpack.c.l.b16 %v484
      %v656 = vunpack.c.h.b16 %v484
      %v657 = vunpack.c.l.b16 %v485
      %v658 = vunpack.c.h.b16 %v485
      %v659 = vunpack.c.l.b16 %v486
      %v660 = vunpack.c.h.b16 %v486
      %v661 = vunpack.c.l.b16 %v487
      %v662 = vunpack.c.h.b16 %v487
      %v663 = vunpack.c.l.b16 %v488
      %v664 = vunpack.c.h.b16 %v488
      %v665 = vunpack.c.l.b16 %v489
      %v666 = vunpack.c.h.b16 %v489
      %v667 = vunpack.c.l.b16 %v490
      %v668 = vunpack.c.h.b16 %v490
      %v669 = vunpack.c.l.b16 %v491
      %v670 = vunpack.c.h.b16 %v491
      %v671 = vunpack.c.l.b16 %v492
      %v672 = vunpack.c.h.b16 %v492
      %v673 = vunpack.c.l.b16 %v493
      %v674 = vunpack.c.h.b16 %v493
      %v675 = vunpack.c.l.b16 %v494
      %v676 = vunpack.c.h.b16 %v494
      %v677 = vunpack.c.l.b16 %v495
      %v678 = vunpack.c.h.b16 %v495
      %v679 = vunpack.c.l.b16 %v496
      %v680 = vunpack.c.h.b16 %v496
      %v681 = vunpack.c.l.b16 %v497
      %v682 = vunpack.c.h.b16 %v497
      %v683 = vunpack.c.l.b16 %v498
      %v684 = vunpack.c.h.b16 %v498
      %v685 = vunpack.c.l.b16 %v499
      %v686 = vunpack.c.h.b16 %v499
      %v687 = vunpack.c.l.b16 %v500
      %v688 = vunpack.c.h.b16 %v500
      %v689 = vunpack.c.l.b16 %v501
      %v690 = vunpack.c.h.b16 %v501
      %v691 = vunpack.c.l.b16 %v502
      %v692 = vunpack.c.h.b16 %v502
      %v693 = vunpack.c.l.b16 %v503
      %v694 = vunpack.c.h.b16 %v503
      %v695 = vunpack.c.l.b16 %v504
      %v696 = vunpack.c.h.b16 %v504
      %v697 = vpack.c.b16 %v577, %v569
      %v698 = vpack.c.b16 %v578, %v570
      %v699 = vpack.c.b16 %v579, %v571
      %v700 = vpack.c.b16 %v580, %v572
      %v701 = vpack.c.b16 %v581, %v573
      %v702 = vpack.c.b16 %v582, %v574
      %v703 = vpack.c.b16 %v583, %v575
      %v704 = vpack.c.b16 %v584, %v576
      %v705 = vpack.c.b16 %v593, %v585
      %v706 = vpack.c.b16 %v594, %v586
      %v707 = vpack.c.b16 %v595, %v587
      %v708 = vpack.c.b16 %v596, %v588
      %v709 = vpack.c.b16 %v597, %v589
      %v710 = vpack.c.b16 %v598, %v590
      %v711 = vpack.c.b16 %v599, %v591
      %v712 = vpack.c.b16 %v600, %v592
      %v713 = vpack.c.b16 %v609, %v601
      %v714 = vpack.c.b16 %v610, %v602
      %v715 = vpack.c.b16 %v611, %v603
      %v716 = vpack.c.b16 %v612, %v604
      %v717 = vpack.c.b16 %v613, %v605
      %v718 = vpack.c.b16 %v614, %v606
      %v719 = vpack.c.b16 %v615, %v607
      %v720 = vpack.c.b16 %v616, %v608
      %v721 = vpack.c.b16 %v625, %v617
      %v722 = vpack.c.b16 %v626, %v618
      %v723 = vpack.c.b16 %v627, %v619
      %v724 = vpack.c.b16 %v628, %v620
      %v725 = vpack.c.b16 %v629, %v621
      %v726 = vpack.c.b16 %v630, %v622
      %v727 = vpack.c.b16 %v631, %v623
      %v728 = vpack.c.b16 %v632, %v624
      %v729 = vpack.c.b16 %v641, %v633
      %v730 = vpack.c.b16 %v642, %v634
      %v731 = vpack.c.b16 %v643, %v635
      %v732 = vpack.c.b16 %v644, %v636
      %v733 = vpack.c.b16 %v645, %v637
      %v734 = vpack.c.b16 %v646, %v638
      %v735 = vpack.c.b16 %v647, %v639
      %v736 = vpack.c.b16 %v648, %v640
      %v737 = vpack.c.b16 %v657, %v649
      %v738 = vpack.c.b16 %v658, %v650
      %v739 = vpack.c.b16 %v659, %v651
      %v740 = vpack.c.b16 %v660, %v652
      %v741 = vpack.c.b16 %v661, %v653
      %v742 = vpack.c.b16 %v662, %v654
      %v743 = vpack.c.b16 %v663, %v655
      %v744 = vpack.c.b16 %v664, %v656
      %v745 = vpack.c.b16 %v673, %v665
      %v746 = vpack.c.b16 %v674, %v666
      %v747 = vpack.c.b16 %v675, %v667
      %v748 = vpack.c.b16 %v676, %v668
      %v749 = vpack.c.b16 %v677, %v669
      %v750 = vpack.c.b16 %v678, %v670
      %v751 = vpack.c.b16 %v679, %v671
      %v752 = vpack.c.b16 %v680, %v672
      %v753 = vpack.c.b16 %v689, %v681
      %v754 = vpack.c.b16 %v690, %v682
      %v755 = vpack.c.b16 %v691, %v683
      %v756 = vpack.c.b16 %v692, %v684
      %v757 = vpack.c.b16 %v693, %v685
      %v758 = vpack.c.b16 %v694, %v686
      %v759 = vpack.c.b16 %v695, %v687
      %v760 = vpack.c.b16 %v696, %v688
      %825 = vmatpush.bf16.msra.mxu0 %v753
      %826 = vmatpush.bf16.msra.mxu0 %v745
      %827 = vmatpush.bf16.msra.mxu0 %v737
      %828 = vmatpush.bf16.msra.mxu0 %v729
      %829 = vmatpush.bf16.msra.mxu0 %v721
      %830 = vmatpush.bf16.msra.mxu0 %v713
      %831 = vmatpush.bf16.msra.mxu0 %v705
      %832 = vmatpush.bf16.msra.mxu0 %v697
      %833 = vmatmul.bf16.gmra.mxu0 %v440
      %v834 = vpop.f32.mrf.mxu0
      %v835 = vadd.f32 0.0, %v834
      %v836 = vpop.f32.mrf.mxu0
      %v837 = vadd.f32 0.0, %v836
      %838 = vdwg.mxu0
      %839 = vmatpush.bf16.msra.mxu0 %v754
      %840 = vmatpush.bf16.msra.mxu0 %v746
      %841 = vmatpush.bf16.msra.mxu0 %v738
      %842 = vmatpush.bf16.msra.mxu0 %v730
      %843 = vmatpush.bf16.msra.mxu0 %v722
      %844 = vmatpush.bf16.msra.mxu0 %v714
      %845 = vmatpush.bf16.msra.mxu0 %v706
      %846 = vmatpush.bf16.msra.mxu0 %v698
      %847 = vmatmul.bf16.gmra.mxu0 %v440
      %v848 = vpop.f32.mrf.mxu0
      %v849 = vadd.f32 0.0, %v848
      %v850 = vpop.f32.mrf.mxu0
      %v851 = vadd.f32 0.0, %v850
      %852 = vdwg.mxu0
      %853 = vmatpush.bf16.msra.mxu0 %v755
      %854 = vmatpush.bf16.msra.mxu0 %v747
      %855 = vmatpush.bf16.msra.mxu0 %v739
      %856 = vmatpush.bf16.msra.mxu0 %v731
      %857 = vmatpush.bf16.msra.mxu0 %v723
      %858 = vmatpush.bf16.msra.mxu0 %v715
      %859 = vmatpush.bf16.msra.mxu0 %v707
      %860 = vmatpush.bf16.msra.mxu0 %v699
      %861 = vmatmul.bf16.gmra.mxu0 %v440
      %v862 = vpop.f32.mrf.mxu0
      %v863 = vadd.f32 0.0, %v862
      %v864 = vpop.f32.mrf.mxu0
      %v865 = vadd.f32 0.0, %v864
      %866 = vdwg.mxu0
      %867 = vmatpush.bf16.msra.mxu0 %v756
      %868 = vmatpush.bf16.msra.mxu0 %v748
      %869 = vmatpush.bf16.msra.mxu0 %v740
      %870 = vmatpush.bf16.msra.mxu0 %v732
      %871 = vmatpush.bf16.msra.mxu0 %v724
      %872 = vmatpush.bf16.msra.mxu0 %v716
      %873 = vmatpush.bf16.msra.mxu0 %v708
      %874 = vmatpush.bf16.msra.mxu0 %v700
      %875 = vmatmul.bf16.gmra.mxu0 %v440
      %v876 = vpop.f32.mrf.mxu0
      %v877 = vadd.f32 0.0, %v876
      %v878 = vpop.f32.mrf.mxu0
      %v879 = vadd.f32 0.0, %v878
      %880 = vdwg.mxu0
      %881 = vmatpush.bf16.msra.mxu0 %v757
      %882 = vmatpush.bf16.msra.mxu0 %v749
      %883 = vmatpush.bf16.msra.mxu0 %v741
      %884 = vmatpush.bf16.msra.mxu0 %v733
      %885 = vmatpush.bf16.msra.mxu0 %v725
      %886 = vmatpush.bf16.msra.mxu0 %v717
      %887 = vmatpush.bf16.msra.mxu0 %v709
      %888 = vmatpush.bf16.msra.mxu0 %v701
      %889 = vmatmul.bf16.gmra.mxu0 %v440
      %v890 = vpop.f32.mrf.mxu0
      %v891 = vadd.f32 0.0, %v890
      %v892 = vpop.f32.mrf.mxu0
      %v893 = vadd.f32 0.0, %v892
      %894 = vdwg.mxu0
      %895 = vmatpush.bf16.msra.mxu0 %v758
      %896 = vmatpush.bf16.msra.mxu0 %v750
      %897 = vmatpush.bf16.msra.mxu0 %v742
      %898 = vmatpush.bf16.msra.mxu0 %v734
      %899 = vmatpush.bf16.msra.mxu0 %v726
      %900 = vmatpush.bf16.msra.mxu0 %v718
      %901 = vmatpush.bf16.msra.mxu0 %v710
      %902 = vmatpush.bf16.msra.mxu0 %v702
      %903 = vmatmul.bf16.gmra.mxu0 %v440
      %v904 = vpop.f32.mrf.mxu0
      %v905 = vadd.f32 0.0, %v904
      %v906 = vpop.f32.mrf.mxu0
      %v907 = vadd.f32 0.0, %v906
      %908 = vdwg.mxu0
      %909 = vmatpush.bf16.msra.mxu0 %v759
      %910 = vmatpush.bf16.msra.mxu0 %v751
      %911 = vmatpush.bf16.msra.mxu0 %v743
      %912 = vmatpush.bf16.msra.mxu0 %v735
      %913 = vmatpush.bf16.msra.mxu0 %v727
      %914 = vmatpush.bf16.msra.mxu0 %v719
      %915 = vmatpush.bf16.msra.mxu0 %v711
      %916 = vmatpush.bf16.msra.mxu0 %v703
      %917 = vmatmul.bf16.gmra.mxu0 %v440
      %v918 = vpop.f32.mrf.mxu0
      %v919 = vadd.f32 0.0, %v918
      %v920 = vpop.f32.mrf.mxu0
      %v921 = vadd.f32 0.0, %v920
      %922 = vdwg.mxu0
      %923 = vmatpush.bf16.msra.mxu0 %v760
      %924 = vmatpush.bf16.msra.mxu0 %v752
      %925 = vmatpush.bf16.msra.mxu0 %v744
      %926 = vmatpush.bf16.msra.mxu0 %v736
      %927 = vmatpush.bf16.msra.mxu0 %v728
      %928 = vmatpush.bf16.msra.mxu0 %v720
      %929 = vmatpush.bf16.msra.mxu0 %v712
      %930 = vmatpush.bf16.msra.mxu0 %v704
      %931 = vmatmul.bf16.gmra.mxu0 %v440
      %v932 = vpop.f32.mrf.mxu0
      %v933 = vadd.f32 0.0, %v932
      %v934 = vpop.f32.mrf.mxu0
      %v935 = vadd.f32 0.0, %v934
      %936 = vdwg.mxu0
      %v937 = vld [vmem:[#allocation2] sm:$0xff]
      %v938 = vld [vmem:[#allocation2 + $0x8] sm:$0xff]
      %v939 = vld [vmem:[#allocation2 + $0x10] sm:$0xff]
      %v940 = vld [vmem:[#allocation2 + $0x18] sm:$0xff]
      %v941 = vld [vmem:[#allocation2 + $0x20] sm:$0xff]
      %v942 = vld [vmem:[#allocation2 + $0x28] sm:$0xff]
      %v943 = vld [vmem:[#allocation2 + $0x30] sm:$0xff]
      %v944 = vld [vmem:[#allocation2 + $0x38] sm:$0xff]
      %v945 = vmax.f32 %v835, %v837
      %v946 = vmax.f32 %v849, %v851
      %v947 = vmax.f32 %v863, %v865
      %v948 = vmax.f32 %v877, %v879
      %v949 = vmax.f32 %v891, %v893
      %v950 = vmax.f32 %v905, %v907
      %v951 = vmax.f32 %v919, %v921
      %v952 = vmax.f32 %v933, %v935
      %v953 = vmax.f32 %v937, %v945
      %v954 = vmax.f32 %v938, %v946
      %v955 = vmax.f32 %v939, %v947
      %v956 = vmax.f32 %v940, %v948
      %v957 = vmax.f32 %v941, %v949
      %v958 = vmax.f32 %v942, %v950
      %v959 = vmax.f32 %v943, %v951
      %v960 = vmax.f32 %v944, %v952
      %961 = vst [vmem:[#allocation2] sm:$0xff] %v953
      %962 = vst [vmem:[#allocation2 + $0x8] sm:$0xff] %v954
      %963 = vst [vmem:[#allocation2 + $0x10] sm:$0xff] %v955
      %964 = vst [vmem:[#allocation2 + $0x18] sm:$0xff] %v956
      %965 = vst [vmem:[#allocation2 + $0x20] sm:$0xff] %v957
      %966 = vst [vmem:[#allocation2 + $0x28] sm:$0xff] %v958
      %967 = vst [vmem:[#allocation2 + $0x30] sm:$0xff] %v959
      %968 = vst [vmem:[#allocation2 + $0x38] sm:$0xff] %v960
      // Predicated region
      $region53: #{pointnet_encoder.5} parent=47 // pred_check
        %p969 = pneg %p339
      $region54: #{pointnet_encoder.5} parent=47 // pred_check_branch
        %971 = sbr.rel (%p969) target = $region56
      $region55: #{pointnet_encoder.5} parent=47 // pred_region
        %v972 = vld [vmem:[#allocation2] sm:$0xff]
        %v973 = vld [vmem:[#allocation2 + $0x8] sm:$0xff]
        %v974 = vld [vmem:[#allocation2 + $0x10] sm:$0xff]
        %v975 = vld [vmem:[#allocation2 + $0x18] sm:$0xff]
        %v976 = vld [vmem:[#allocation2 + $0x20] sm:$0xff]
        %v977 = vld [vmem:[#allocation2 + $0x28] sm:$0xff]
        %v978 = vld [vmem:[#allocation2 + $0x30] sm:$0xff]
        %v979 = vld [vmem:[#allocation2 + $0x38] sm:$0xff]
        %v980 = vrot.slane %v972, 4
        %v981 = vmax.f32 %v972, %v980
        %v982 = vrot.slane %v981, 2
        %v983 = vmax.f32 %v981, %v982
        %v984 = vrot.slane %v983, 1
        %v985 = vmax.f32 %v983, %v984
        %v986 = vrot.slane %v973, 4
        %v987 = vmax.f32 %v973, %v986
        %v988 = vrot.slane %v987, 2
        %v989 = vmax.f32 %v987, %v988
        %v990 = vrot.slane %v989, 1
        %v991 = vmax.f32 %v989, %v990
        %v992 = vrot.slane %v974, 4
        %v993 = vmax.f32 %v974, %v992
        %v994 = vrot.slane %v993, 2
        %v995 = vmax.f32 %v993, %v994
        %v996 = vrot.slane %v995, 1
        %v997 = vmax.f32 %v995, %v996
        %v998 = vrot.slane %v975, 4
        %v999 = vmax.f32 %v975, %v998
        %v1000 = vrot.slane %v999, 2
        %v1001 = vmax.f32 %v999, %v1000
        %v1002 = vrot.slane %v1001, 1
        %v1003 = vmax.f32 %v1001, %v1002
        %v1004 = vrot.slane %v976, 4
        %v1005 = vmax.f32 %v976, %v1004
        %v1006 = vrot.slane %v1005, 2
        %v1007 = vmax.f32 %v1005, %v1006
        %v1008 = vrot.slane %v1007, 1
        %v1009 = vmax.f32 %v1007, %v1008
        %v1010 = vrot.slane %v977, 4
        %v1011 = vmax.f32 %v977, %v1010
        %v1012 = vrot.slane %v1011, 2
        %v1013 = vmax.f32 %v1011, %v1012
        %v1014 = vrot.slane %v1013, 1
        %v1015 = vmax.f32 %v1013, %v1014
        %v1016 = vrot.slane %v978, 4
        %v1017 = vmax.f32 %v978, %v1016
        %v1018 = vrot.slane %v1017, 2
        %v1019 = vmax.f32 %v1017, %v1018
        %v1020 = vrot.slane %v1019, 1
        %v1021 = vmax.f32 %v1019, %v1020
        %v1022 = vrot.slane %v979, 4
        %v1023 = vmax.f32 %v979, %v1022
        %v1024 = vrot.slane %v1023, 2
        %v1025 = vmax.f32 %v1023, %v1024
        %v1026 = vrot.slane %v1025, 1
        %v1027 = vmax.f32 %v1025, %v1026
        %v1028 = vld [vmem:[%s6] sm:$0xff]
        %v1030 = vperm.slane %v1028, 0
        %v1031 = vperm.slane %v1028, 1
        %v1032 = vperm.slane %v1028, 2
        %v1033 = vperm.slane %v1028, 3
        %v1034 = vperm.slane %v1028, 4
        %v1035 = vperm.slane %v1028, 5
        %v1036 = vperm.slane %v1028, 6
        %v1037 = vperm.slane %v1028, 7
        %v1046 = vadd.f32 %v985, %v1030
        %v1047 = vadd.f32 %v991, %v1031
        %v1048 = vadd.f32 %v997, %v1032
        %v1049 = vadd.f32 %v1003, %v1033
        %v1050 = vadd.f32 %v1009, %v1034
        %v1051 = vadd.f32 %v1015, %v1035
        %v1052 = vadd.f32 %v1021, %v1036
        %v1053 = vadd.f32 %v1027, %v1037
        %v1062 = vrot.slane %v1047, 7
        %v1063 = vrot.slane %v1048, 6
        %v1064 = vrot.slane %v1049, 5
        %v1065 = vrot.slane %v1050, 4
        %v1066 = vrot.slane %v1051, 3
        %v1067 = vrot.slane %v1052, 2
        %v1068 = vrot.slane %v1053, 1
        %v1069 = vsel %vm363, %v1046, %v1062
        %vm1070 = vcmask 1042434
        %v1071 = vsel %vm1070, %v1063, %v1064
        %vm1072 = vcmask 1041408
        %v1073 = vsel %vm1072, %v1069, %v1071
        %vm1074 = vcmask 1044484
        %v1075 = vsel %vm1074, %v1065, %v1066
        %vm1076 = vcmask 1046534
        %v1077 = vsel %vm1076, %v1067, %v1068
        %vm1078 = vcmask 1045508
        %v1079 = vsel %vm1078, %v1075, %v1077
        %vm1080 = vcmask 1043456
        %v1081 = vsel %vm1080, %v1073, %v1079
        %1083 = vst [vmem:[%s336] sm:$0xff] %v1081
      $region56: #{pointnet_encoder.5} parent=47 // pred_fallthru
        _
      %s1084 = sadd.s32 %s24, %s23
      %p1085 = scmp.lt.s32.totalorder %s1084, 1
      %s1086 = scalar_select %p1085, %s1084, 1
      %s1087 = smul.addr %s1086, 8
      %s1088 = scalar_lea.vmem %s7, %s1087
      // Predicated region
      $region57: #{pointnet_encoder.5} parent=47 // pred_check
        %p1089 = pneg %p218
      $region58: #{pointnet_encoder.5} parent=47 // pred_check_branch
        %1091 = sbr.rel (%p1089) target = $region60
      $region59: #{pointnet_encoder.5} parent=47 // pred_region
        %s1092 = sadd.s32 %s24, %s23
      $region60: #{pointnet_encoder.5} parent=47 // pred_fallthru
        _
    $region48: #{pointnet_encoder.5} parent=5 // pred_fallthru
      _
    %p1093 = scmp.le.s32.totalorder 2, %s13
    // Predicated region
    $region61: #{pointnet_encoder.5} parent=5 // pred_check
      %p1094 = pneg %p1093
    $region62: #{pointnet_encoder.5} parent=5 // pred_check_branch
      %1096 = sbr.rel (%p1094) target = $region64
    $region63: #{pointnet_encoder.5} parent=5 // pred_region
      %s1097 = ssub.s32 %s13, 2
      // Predicated region
      $region65: #{pointnet_encoder.5} parent=63 // pred_check
        %p1098 = pneg %p224
      $region66: #{pointnet_encoder.5} parent=63 // pred_check_branch
        %1100 = sbr.rel (%p1098) target = $region68
      $region67: #{pointnet_encoder.5} parent=63 // pred_region
        %s1101 = sadd.s32 %s27, %s26
        %p1102 = scmp.lt.s32.totalorder %s1101, 1
        %s1103 = scalar_select %p1102, %s1101, 1
        %s1104 = smul.addr %s1103, 8
        %s1105 = scalar_lea.vmem %s7, %s1104
      $region68: #{pointnet_encoder.5} parent=63 // pred_fallthru
        _
    $region64: #{pointnet_encoder.5} parent=5 // pred_fallthru
      _
  $region6: #{pointnet_encoder.5} parent=0 // loop_footer
    %s17 = sadd.s32 1, %s13
  $region7: #{pointnet_encoder.5} parent=0 // loop_footer_branch
    %12 = sbr.rel target = $region3
  $region8: #{pointnet_encoder.5} parent=0 // loop_exit
    _

// kernel: pointnet_encoder.4
$region0: #{pointnet_encoder.4}
  #allocation0 [shape = 'u32[]', space=smem, size = 0x4, offset = 0x4, fixed_abs, tag = 'smem constant byte address 0x4 - core index']
  #allocation1 [shape = 'u32[72,128]{1,0:T(1,128)}', space=vmem, size = 0x9000, scoped, tag = 'internal scratch']
  %s0 = inlined_call_operand.vmem [shape: f32[2,1024], index: 0, kind: input, shape index: {}]
  %s1 = inlined_call_operand.vmem [shape: bf16[1024,512], index: 1, kind: input, shape index: {}]
  %s2 = inlined_call_operand.vmem [shape: f32[1,512], index: 2, kind: input, shape index: {}]
  %s3 = inlined_call_operand.vmem [shape: bf16[512,256], index: 3, kind: input, shape index: {}]
  %s4 = inlined_call_operand.vmem [shape: f32[1,256], index: 4, kind: input, shape index: {}]
  %s5 = inlined_call_operand.vmem [shape: bf16[256,4], index: 5, kind: input, shape index: {}]
  %s6 = inlined_call_operand.vmem [shape: f32[1,4], index: 6, kind: input, shape index: {}]
  %s7 = inlined_call_operand.vmem [shape: f32[2,4], index: 7, kind: output, shape index: {}]
  %s8 = sld [smem:[#allocation0]]
  $region38: #{pointnet_encoder.4} parent=0
    _
  %s10 = ssub.s32 1, %s8
  %s11 = scalar_select 0, %s10, %s8
  // Predicated region
  $region2: #{pointnet_encoder.4} parent=0 // pred_check
    _
  $region3: #{pointnet_encoder.4} parent=0 // pred_check_branch
    %13 = sbr.rel (0) target = $region5
  $region4: #{pointnet_encoder.4} parent=0 // pred_region
    _
  $region5: #{pointnet_encoder.4} parent=0 // pred_fallthru
    _
  // Predicated region
  $region6: #{pointnet_encoder.4} parent=0 // pred_check
    _
  $region7: #{pointnet_encoder.4} parent=0 // pred_check_branch
    %15 = sbr.rel (0) target = $region9
  $region8: #{pointnet_encoder.4} parent=0 // pred_region
    _
  $region9: #{pointnet_encoder.4} parent=0 // pred_fallthru
    _
  // Predicated region
  $region10: #{pointnet_encoder.4} parent=0 // pred_check
    _
  $region11: #{pointnet_encoder.4} parent=0 // pred_check_branch
    %17 = sbr.rel (0) target = $region13
  $region12: #{pointnet_encoder.4} parent=0 // pred_region
    _
  $region13: #{pointnet_encoder.4} parent=0 // pred_fallthru
    _
  // Predicated region
  $region14: #{pointnet_encoder.4} parent=0 // pred_check
    _
  $region15: #{pointnet_encoder.4} parent=0 // pred_check_branch
    %19 = sbr.rel (0) target = $region17
  $region16: #{pointnet_encoder.4} parent=0 // pred_region
    _
  $region17: #{pointnet_encoder.4} parent=0 // pred_fallthru
    _
  // Predicated region
  $region18: #{pointnet_encoder.4} parent=0 // pred_check
    _
  $region19: #{pointnet_encoder.4} parent=0 // pred_check_branch
    %21 = sbr.rel (0) target = $region21
  $region20: #{pointnet_encoder.4} parent=0 // pred_region
    _
  $region21: #{pointnet_encoder.4} parent=0 // pred_fallthru
    _
  // Predicated region
  $region22: #{pointnet_encoder.4} parent=0 // pred_check
    _
  $region23: #{pointnet_encoder.4} parent=0 // pred_check_branch
    %23 = sbr.rel (0) target = $region25
  $region24: #{pointnet_encoder.4} parent=0 // pred_region
    _
  $region25: #{pointnet_encoder.4} parent=0 // pred_fallthru
    _
  // Predicated region
  $region26: #{pointnet_encoder.4} parent=0 // pred_check
    _
  $region27: #{pointnet_encoder.4} parent=0 // pred_check_branch
    %25 = sbr.rel (0) target = $region29
  $region28: #{pointnet_encoder.4} parent=0 // pred_region
    _
  $region29: #{pointnet_encoder.4} parent=0 // pred_fallthru
    _
  %v26 = vld [vmem:[%s0] sm:$0xff]
  %v27 = vld [vmem:[%s0 + $0x8] sm:$0xff]
  %30 = vst [vmem:[#allocation1] ss:$4 sm:$0xff] %v26
  %s31 = scalar_lea.vmem [#allocation1], 32
  %32 = vst [vmem:[%s31] ss:$4 sm:$0xff] %v27
  %v33 = vld.sshfl [vmem:[#allocation1] sm:$0xff pattern:$0x73625140]
  %v34 = vld.sshfl [vmem:[#allocation1 + $0x8] sm:$0xff pattern:$0x73625140]
  %v35 = vld.sshfl [vmem:[#allocation1 + $0x10] sm:$0xff pattern:$0x73625140]
  %v36 = vld.sshfl [vmem:[#allocation1 + $0x18] sm:$0xff pattern:$0x73625140]
  %v37 = vld.sshfl [vmem:[#allocation1 + $0x20] sm:$0xff pattern:$0x73625140]
  %v38 = vld.sshfl [vmem:[#allocation1 + $0x28] sm:$0xff pattern:$0x73625140]
  %v39 = vld.sshfl [vmem:[#allocation1 + $0x30] sm:$0xff pattern:$0x73625140]
  %v40 = vld.sshfl [vmem:[#allocation1 + $0x38] sm:$0xff pattern:$0x73625140]
  %v49 = vpack.c.bf16 %v33, %v33
  %v50 = vpack.c.bf16 %v34, %v34
  %v51 = vpack.c.bf16 %v35, %v35
  %v52 = vpack.c.bf16 %v36, %v36
  %v53 = vpack.c.bf16 %v37, %v37
  %v54 = vpack.c.bf16 %v38, %v38
  %v55 = vpack.c.bf16 %v39, %v39
  %v56 = vpack.c.bf16 %v40, %v40
  %v57 = vld [vmem:[%s1] sm:$0xff]
  %v58 = vld [vmem:[%s1 + $0x8] sm:$0xff]
  %v59 = vld [vmem:[%s1 + $0x10] sm:$0xff]
  %v60 = vld [vmem:[%s1 + $0x18] sm:$0xff]
  %v61 = vld [vmem:[%s1 + $0x20] sm:$0xff]
  %v62 = vld [vmem:[%s1 + $0x28] sm:$0xff]
  %v63 = vld [vmem:[%s1 + $0x30] sm:$0xff]
  %v64 = vld [vmem:[%s1 + $0x38] sm:$0xff]
  %v65 = vld [vmem:[%s1 + $0x40] sm:$0xff]
  %v66 = vld [vmem:[%s1 + $0x48] sm:$0xff]
  %v67 = vld [vmem:[%s1 + $0x50] sm:$0xff]
  %v68 = vld [vmem:[%s1 + $0x58] sm:$0xff]
  %v69 = vld [vmem:[%s1 + $0x60] sm:$0xff]
  %v70 = vld [vmem:[%s1 + $0x68] sm:$0xff]
  %v71 = vld [vmem:[%s1 + $0x70] sm:$0xff]
  %v72 = vld [vmem:[%s1 + $0x78] sm:$0xff]
  %v73 = vld [vmem:[%s1 + $0x80] sm:$0xff]
  %v74 = vld [vmem:[%s1 + $0x88] sm:$0xff]
  %v75 = vld [vmem:[%s1 + $0x90] sm:$0xff]
  %v76 = vld [vmem:[%s1 + $0x98] sm:$0xff]
  %v77 = vld [vmem:[%s1 + $0xa0] sm:$0xff]
  %v78 = vld [vmem:[%s1 + $0xa8] sm:$0xff]
  %v79 = vld [vmem:[%s1 + $0xb0] sm:$0xff]
  %v80 = vld [vmem:[%s1 + $0xb8] sm:$0xff]
  %v81 = vld [vmem:[%s1 + $0xc0] sm:$0xff]
  %v82 = vld [vmem:[%s1 + $0xc8] sm:$0xff]
  %v83 = vld [vmem:[%s1 + $0xd0] sm:$0xff]
  %v84 = vld [vmem:[%s1 + $0xd8] sm:$0xff]
  %v85 = vld [vmem:[%s1 + $0xe0] sm:$0xff]
  %v86 = vld [vmem:[%s1 + $0xe8] sm:$0xff]
  %v87 = vld [vmem:[%s1 + $0xf0] sm:$0xff]
  %v88 = vld [vmem:[%s1 + $0xf8] sm:$0xff]
  %v89 = vld [vmem:[%s1 + $0x100] sm:$0xff]
  %v90 = vld [vmem:[%s1 + $0x108] sm:$0xff]
  %v91 = vld [vmem:[%s1 + $0x110] sm:$0xff]
  %v92 = vld [vmem:[%s1 + $0x118] sm:$0xff]
  %v93 = vld [vmem:[%s1 + $0x120] sm:$0xff]
  %v94 = vld [vmem:[%s1 + $0x128] sm:$0xff]
  %v95 = vld [vmem:[%s1 + $0x130] sm:$0xff]
  %v96 = vld [vmem:[%s1 + $0x138] sm:$0xff]
  %v97 = vld [vmem:[%s1 + $0x140] sm:$0xff]
  %v98 = vld [vmem:[%s1 + $0x148] sm:$0xff]
  %v99 = vld [vmem:[%s1 + $0x150] sm:$0xff]
  %v100 = vld [vmem:[%s1 + $0x158] sm:$0xff]
  %v101 = vld [vmem:[%s1 + $0x160] sm:$0xff]
  %v102 = vld [vmem:[%s1 + $0x168] sm:$0xff]
  %v103 = vld [vmem:[%s1 + $0x170] sm:$0xff]
  %v104 = vld [vmem:[%s1 + $0x178] sm:$0xff]
  %v105 = vld [vmem:[%s1 + $0x180] sm:$0xff]
  %v106 = vld [vmem:[%s1 + $0x188] sm:$0xff]
  %v107 = vld [vmem:[%s1 + $0x190] sm:$0xff]
  %v108 = vld [vmem:[%s1 + $0x198] sm:$0xff]
  %v109 = vld [vmem:[%s1 + $0x1a0] sm:$0xff]
  %v110 = vld [vmem:[%s1 + $0x1a8] sm:$0xff]
  %v111 = vld [vmem:[%s1 + $0x1b0] sm:$0xff]
  %v112 = vld [vmem:[%s1 + $0x1b8] sm:$0xff]
  %v113 = vld [vmem:[%s1 + $0x1c0] sm:$0xff]
  %v114 = vld [vmem:[%s1 + $0x1c8] sm:$0xff]
  %v115 = vld [vmem:[%s1 + $0x1d0] sm:$0xff]
  %v116 = vld [vmem:[%s1 + $0x1d8] sm:$0xff]
  %v117 = vld [vmem:[%s1 + $0x1e0] sm:$0xff]
  %v118 = vld [vmem:[%s1 + $0x1e8] sm:$0xff]
  %v119 = vld [vmem:[%s1 + $0x1f0] sm:$0xff]
  %v120 = vld [vmem:[%s1 + $0x1f8] sm:$0xff]
  %v121 = vld [vmem:[%s1 + $0x200] sm:$0xff]
  %v122 = vld [vmem:[%s1 + $0x208] sm:$0xff]
  %v123 = vld [vmem:[%s1 + $0x210] sm:$0xff]
  %v124 = vld [vmem:[%s1 + $0x218] sm:$0xff]
  %v125 = vld [vmem:[%s1 + $0x220] sm:$0xff]
  %v126 = vld [vmem:[%s1 + $0x228] sm:$0xff]
  %v127 = vld [vmem:[%s1 + $0x230] sm:$0xff]
  %v128 = vld [vmem:[%s1 + $0x238] sm:$0xff]
  %v129 = vld [vmem:[%s1 + $0x240] sm:$0xff]
  %v130 = vld [vmem:[%s1 + $0x248] sm:$0xff]
  %v131 = vld [vmem:[%s1 + $0x250] sm:$0xff]
  %v132 = vld [vmem:[%s1 + $0x258] sm:$0xff]
  %v133 = vld [vmem:[%s1 + $0x260] sm:$0xff]
  %v134 = vld [vmem:[%s1 + $0x268] sm:$0xff]
  %v135 = vld [vmem:[%s1 + $0x270] sm:$0xff]
  %v136 = vld [vmem:[%s1 + $0x278] sm:$0xff]
  %v137 = vld [vmem:[%s1 + $0x280] sm:$0xff]
  %v138 = vld [vmem:[%s1 + $0x288] sm:$0xff]
  %v139 = vld [vmem:[%s1 + $0x290] sm:$0xff]
  %v140 = vld [vmem:[%s1 + $0x298] sm:$0xff]
  %v141 = vld [vmem:[%s1 + $0x2a0] sm:$0xff]
  %v142 = vld [vmem:[%s1 + $0x2a8] sm:$0xff]
  %v143 = vld [vmem:[%s1 + $0x2b0] sm:$0xff]
  %v144 = vld [vmem:[%s1 + $0x2b8] sm:$0xff]
  %v145 = vld [vmem:[%s1 + $0x2c0] sm:$0xff]
  %v146 = vld [vmem:[%s1 + $0x2c8] sm:$0xff]
  %v147 = vld [vmem:[%s1 + $0x2d0] sm:$0xff]
  %v148 = vld [vmem:[%s1 + $0x2d8] sm:$0xff]
  %v149 = vld [vmem:[%s1 + $0x2e0] sm:$0xff]
  %v150 = vld [vmem:[%s1 + $0x2e8] sm:$0xff]
  %v151 = vld [vmem:[%s1 + $0x2f0] sm:$0xff]
  %v152 = vld [vmem:[%s1 + $0x2f8] sm:$0xff]
  %v153 = vld [vmem:[%s1 + $0x300] sm:$0xff]
  %v154 = vld [vmem:[%s1 + $0x308] sm:$0xff]
  %v155 = vld [vmem:[%s1 + $0x310] sm:$0xff]
  %v156 = vld [vmem:[%s1 + $0x318] sm:$0xff]
  %v157 = vld [vmem:[%s1 + $0x320] sm:$0xff]
  %v158 = vld [vmem:[%s1 + $0x328] sm:$0xff]
  %v159 = vld [vmem:[%s1 + $0x330] sm:$0xff]
  %v160 = vld [vmem:[%s1 + $0x338] sm:$0xff]
  %v161 = vld [vmem:[%s1 + $0x340] sm:$0xff]
  %v162 = vld [vmem:[%s1 + $0x348] sm:$0xff]
  %v163 = vld [vmem:[%s1 + $0x350] sm:$0xff]
  %v164 = vld [vmem:[%s1 + $0x358] sm:$0xff]
  %v165 = vld [vmem:[%s1 + $0x360] sm:$0xff]
  %v166 = vld [vmem:[%s1 + $0x368] sm:$0xff]
  %v167 = vld [vmem:[%s1 + $0x370] sm:$0xff]
  %v168 = vld [vmem:[%s1 + $0x378] sm:$0xff]
  %v169 = vld [vmem:[%s1 + $0x380] sm:$0xff]
  %v170 = vld [vmem:[%s1 + $0x388] sm:$0xff]
  %v171 = vld [vmem:[%s1 + $0x390] sm:$0xff]
  %v172 = vld [vmem:[%s1 + $0x398] sm:$0xff]
  %v173 = vld [vmem:[%s1 + $0x3a0] sm:$0xff]
  %v174 = vld [vmem:[%s1 + $0x3a8] sm:$0xff]
  %v175 = vld [vmem:[%s1 + $0x3b0] sm:$0xff]
  %v176 = vld [vmem:[%s1 + $0x3b8] sm:$0xff]
  %v177 = vld [vmem:[%s1 + $0x3c0] sm:$0xff]
  %v178 = vld [vmem:[%s1 + $0x3c8] sm:$0xff]
  %v179 = vld [vmem:[%s1 + $0x3d0] sm:$0xff]
  %v180 = vld [vmem:[%s1 + $0x3d8] sm:$0xff]
  %v181 = vld [vmem:[%s1 + $0x3e0] sm:$0xff]
  %v182 = vld [vmem:[%s1 + $0x3e8] sm:$0xff]
  %v183 = vld [vmem:[%s1 + $0x3f0] sm:$0xff]
  %v184 = vld [vmem:[%s1 + $0x3f8] sm:$0xff]
  %v185 = vld [vmem:[%s1 + $0x400] sm:$0xff]
  %v186 = vld [vmem:[%s1 + $0x408] sm:$0xff]
  %v187 = vld [vmem:[%s1 + $0x410] sm:$0xff]
  %v188 = vld [vmem:[%s1 + $0x418] sm:$0xff]
  %v189 = vld [vmem:[%s1 + $0x420] sm:$0xff]
  %v190 = vld [vmem:[%s1 + $0x428] sm:$0xff]
  %v191 = vld [vmem:[%s1 + $0x430] sm:$0xff]
  %v192 = vld [vmem:[%s1 + $0x438] sm:$0xff]
  %v193 = vld [vmem:[%s1 + $0x440] sm:$0xff]
  %v194 = vld [vmem:[%s1 + $0x448] sm:$0xff]
  %v195 = vld [vmem:[%s1 + $0x450] sm:$0xff]
  %v196 = vld [vmem:[%s1 + $0x458] sm:$0xff]
  %v197 = vld [vmem:[%s1 + $0x460] sm:$0xff]
  %v198 = vld [vmem:[%s1 + $0x468] sm:$0xff]
  %v199 = vld [vmem:[%s1 + $0x470] sm:$0xff]
  %v200 = vld [vmem:[%s1 + $0x478] sm:$0xff]
  %v201 = vld [vmem:[%s1 + $0x480] sm:$0xff]
  %v202 = vld [vmem:[%s1 + $0x488] sm:$0xff]
  %v203 = vld [vmem:[%s1 + $0x490] sm:$0xff]
  %v204 = vld [vmem:[%s1 + $0x498] sm:$0xff]
  %v205 = vld [vmem:[%s1 + $0x4a0] sm:$0xff]
  %v206 = vld [vmem:[%s1 + $0x4a8] sm:$0xff]
  %v207 = vld [vmem:[%s1 + $0x4b0] sm:$0xff]
  %v208 = vld [vmem:[%s1 + $0x4b8] sm:$0xff]
  %v209 = vld [vmem:[%s1 + $0x4c0] sm:$0xff]
  %v210 = vld [vmem:[%s1 + $0x4c8] sm:$0xff]
  %v211 = vld [vmem:[%s1 + $0x4d0] sm:$0xff]
  %v212 = vld [vmem:[%s1 + $0x4d8] sm:$0xff]
  %v213 = vld [vmem:[%s1 + $0x4e0] sm:$0xff]
  %v214 = vld [vmem:[%s1 + $0x4e8] sm:$0xff]
  %v215 = vld [vmem:[%s1 + $0x4f0] sm:$0xff]
  %v216 = vld [vmem:[%s1 + $0x4f8] sm:$0xff]
  %v217 = vld [vmem:[%s1 + $0x500] sm:$0xff]
  %v218 = vld [vmem:[%s1 + $0x508] sm:$0xff]
  %v219 = vld [vmem:[%s1 + $0x510] sm:$0xff]
  %v220 = vld [vmem:[%s1 + $0x518] sm:$0xff]
  %v221 = vld [vmem:[%s1 + $0x520] sm:$0xff]
  %v222 = vld [vmem:[%s1 + $0x528] sm:$0xff]
  %v223 = vld [vmem:[%s1 + $0x530] sm:$0xff]
  %v224 = vld [vmem:[%s1 + $0x538] sm:$0xff]
  %v225 = vld [vmem:[%s1 + $0x540] sm:$0xff]
  %v226 = vld [vmem:[%s1 + $0x548] sm:$0xff]
  %v227 = vld [vmem:[%s1 + $0x550] sm:$0xff]
  %v228 = vld [vmem:[%s1 + $0x558] sm:$0xff]
  %v229 = vld [vmem:[%s1 + $0x560] sm:$0xff]
  %v230 = vld [vmem:[%s1 + $0x568] sm:$0xff]
  %v231 = vld [vmem:[%s1 + $0x570] sm:$0xff]
  %v232 = vld [vmem:[%s1 + $0x578] sm:$0xff]
  %v233 = vld [vmem:[%s1 + $0x580] sm:$0xff]
  %v234 = vld [vmem:[%s1 + $0x588] sm:$0xff]
  %v235 = vld [vmem:[%s1 + $0x590] sm:$0xff]
  %v236 = vld [vmem:[%s1 + $0x598] sm:$0xff]
  %v237 = vld [vmem:[%s1 + $0x5a0] sm:$0xff]
  %v238 = vld [vmem:[%s1 + $0x5a8] sm:$0xff]
  %v239 = vld [vmem:[%s1 + $0x5b0] sm:$0xff]
  %v240 = vld [vmem:[%s1 + $0x5b8] sm:$0xff]
  %v241 = vld [vmem:[%s1 + $0x5c0] sm:$0xff]
  %v242 = vld [vmem:[%s1 + $0x5c8] sm:$0xff]
  %v243 = vld [vmem:[%s1 + $0x5d0] sm:$0xff]
  %v244 = vld [vmem:[%s1 + $0x5d8] sm:$0xff]
  %v245 = vld [vmem:[%s1 + $0x5e0] sm:$0xff]
  %v246 = vld [vmem:[%s1 + $0x5e8] sm:$0xff]
  %v247 = vld [vmem:[%s1 + $0x5f0] sm:$0xff]
  %v248 = vld [vmem:[%s1 + $0x5f8] sm:$0xff]
  %v249 = vld [vmem:[%s1 + $0x600] sm:$0xff]
  %v250 = vld [vmem:[%s1 + $0x608] sm:$0xff]
  %v251 = vld [vmem:[%s1 + $0x610] sm:$0xff]
  %v252 = vld [vmem:[%s1 + $0x618] sm:$0xff]
  %v253 = vld [vmem:[%s1 + $0x620] sm:$0xff]
  %v254 = vld [vmem:[%s1 + $0x628] sm:$0xff]
  %v255 = vld [vmem:[%s1 + $0x630] sm:$0xff]
  %v256 = vld [vmem:[%s1 + $0x638] sm:$0xff]
  %v257 = vld [vmem:[%s1 + $0x640] sm:$0xff]
  %v258 = vld [vmem:[%s1 + $0x648] sm:$0xff]
  %v259 = vld [vmem:[%s1 + $0x650] sm:$0xff]
  %v260 = vld [vmem:[%s1 + $0x658] sm:$0xff]
  %v261 = vld [vmem:[%s1 + $0x660] sm:$0xff]
  %v262 = vld [vmem:[%s1 + $0x668] sm:$0xff]
  %v263 = vld [vmem:[%s1 + $0x670] sm:$0xff]
  %v264 = vld [vmem:[%s1 + $0x678] sm:$0xff]
  %v265 = vld [vmem:[%s1 + $0x680] sm:$0xff]
  %v266 = vld [vmem:[%s1 + $0x688] sm:$0xff]
  %v267 = vld [vmem:[%s1 + $0x690] sm:$0xff]
  %v268 = vld [vmem:[%s1 + $0x698] sm:$0xff]
  %v269 = vld [vmem:[%s1 + $0x6a0] sm:$0xff]
  %v270 = vld [vmem:[%s1 + $0x6a8] sm:$0xff]
  %v271 = vld [vmem:[%s1 + $0x6b0] sm:$0xff]
  %v272 = vld [vmem:[%s1 + $0x6b8] sm:$0xff]
  %v273 = vld [vmem:[%s1 + $0x6c0] sm:$0xff]
  %v274 = vld [vmem:[%s1 + $0x6c8] sm:$0xff]
  %v275 = vld [vmem:[%s1 + $0x6d0] sm:$0xff]
  %v276 = vld [vmem:[%s1 + $0x6d8] sm:$0xff]
  %v277 = vld [vmem:[%s1 + $0x6e0] sm:$0xff]
  %v278 = vld [vmem:[%s1 + $0x6e8] sm:$0xff]
  %v279 = vld [vmem:[%s1 + $0x6f0] sm:$0xff]
  %v280 = vld [vmem:[%s1 + $0x6f8] sm:$0xff]
  %v281 = vld [vmem:[%s1 + $0x700] sm:$0xff]
  %v282 = vld [vmem:[%s1 + $0x708] sm:$0xff]
  %v283 = vld [vmem:[%s1 + $0x710] sm:$0xff]
  %v284 = vld [vmem:[%s1 + $0x718] sm:$0xff]
  %v285 = vld [vmem:[%s1 + $0x720] sm:$0xff]
  %v286 = vld [vmem:[%s1 + $0x728] sm:$0xff]
  %v287 = vld [vmem:[%s1 + $0x730] sm:$0xff]
  %v288 = vld [vmem:[%s1 + $0x738] sm:$0xff]
  %v289 = vld [vmem:[%s1 + $0x740] sm:$0xff]
  %v290 = vld [vmem:[%s1 + $0x748] sm:$0xff]
  %v291 = vld [vmem:[%s1 + $0x750] sm:$0xff]
  %v292 = vld [vmem:[%s1 + $0x758] sm:$0xff]
  %v293 = vld [vmem:[%s1 + $0x760] sm:$0xff]
  %v294 = vld [vmem:[%s1 + $0x768] sm:$0xff]
  %v295 = vld [vmem:[%s1 + $0x770] sm:$0xff]
  %v296 = vld [vmem:[%s1 + $0x778] sm:$0xff]
  %v297 = vld [vmem:[%s1 + $0x780] sm:$0xff]
  %v298 = vld [vmem:[%s1 + $0x788] sm:$0xff]
  %v299 = vld [vmem:[%s1 + $0x790] sm:$0xff]
  %v300 = vld [vmem:[%s1 + $0x798] sm:$0xff]
  %v301 = vld [vmem:[%s1 + $0x7a0] sm:$0xff]
  %v302 = vld [vmem:[%s1 + $0x7a8] sm:$0xff]
  %v303 = vld [vmem:[%s1 + $0x7b0] sm:$0xff]
  %v304 = vld [vmem:[%s1 + $0x7b8] sm:$0xff]
  %v305 = vld [vmem:[%s1 + $0x7c0] sm:$0xff]
  %v306 = vld [vmem:[%s1 + $0x7c8] sm:$0xff]
  %v307 = vld [vmem:[%s1 + $0x7d0] sm:$0xff]
  %v308 = vld [vmem:[%s1 + $0x7d8] sm:$0xff]
  %v309 = vld [vmem:[%s1 + $0x7e0] sm:$0xff]
  %v310 = vld [vmem:[%s1 + $0x7e8] sm:$0xff]
  %v311 = vld [vmem:[%s1 + $0x7f0] sm:$0xff]
  %v312 = vld [vmem:[%s1 + $0x7f8] sm:$0xff]
  %v313 = vld [vmem:[%s2] sm:$0xf]
  %v315 = vperm.slane %v313, 0
  %v316 = vperm.slane %v313, 1
  %v317 = vperm.slane %v313, 2
  %v318 = vperm.slane %v313, 3
  %v579 = vunpack.c.l.b16 %v57
  %v580 = vunpack.c.h.b16 %v57
  %v581 = vunpack.c.l.b16 %v58
  %v582 = vunpack.c.h.b16 %v58
  %v583 = vunpack.c.l.b16 %v59
  %v584 = vunpack.c.h.b16 %v59
  %v585 = vunpack.c.l.b16 %v60
  %v586 = vunpack.c.h.b16 %v60
  %v587 = vunpack.c.l.b16 %v61
  %v588 = vunpack.c.h.b16 %v61
  %v589 = vunpack.c.l.b16 %v62
  %v590 = vunpack.c.h.b16 %v62
  %v591 = vunpack.c.l.b16 %v63
  %v592 = vunpack.c.h.b16 %v63
  %v593 = vunpack.c.l.b16 %v64
  %v594 = vunpack.c.h.b16 %v64
  %v595 = vunpack.c.l.b16 %v65
  %v596 = vunpack.c.h.b16 %v65
  %v597 = vunpack.c.l.b16 %v66
  %v598 = vunpack.c.h.b16 %v66
  %v599 = vunpack.c.l.b16 %v67
  %v600 = vunpack.c.h.b16 %v67
  %v601 = vunpack.c.l.b16 %v68
  %v602 = vunpack.c.h.b16 %v68
  %v603 = vunpack.c.l.b16 %v69
  %v604 = vunpack.c.h.b16 %v69
  %v605 = vunpack.c.l.b16 %v70
  %v606 = vunpack.c.h.b16 %v70
  %v607 = vunpack.c.l.b16 %v71
  %v608 = vunpack.c.h.b16 %v71
  %v609 = vunpack.c.l.b16 %v72
  %v610 = vunpack.c.h.b16 %v72
  %v611 = vunpack.c.l.b16 %v73
  %v612 = vunpack.c.h.b16 %v73
  %v613 = vunpack.c.l.b16 %v74
  %v614 = vunpack.c.h.b16 %v74
  %v615 = vunpack.c.l.b16 %v75
  %v616 = vunpack.c.h.b16 %v75
  %v617 = vunpack.c.l.b16 %v76
  %v618 = vunpack.c.h.b16 %v76
  %v619 = vunpack.c.l.b16 %v77
  %v620 = vunpack.c.h.b16 %v77
  %v621 = vunpack.c.l.b16 %v78
  %v622 = vunpack.c.h.b16 %v78
  %v623 = vunpack.c.l.b16 %v79
  %v624 = vunpack.c.h.b16 %v79
  %v625 = vunpack.c.l.b16 %v80
  %v626 = vunpack.c.h.b16 %v80
  %v627 = vunpack.c.l.b16 %v81
  %v628 = vunpack.c.h.b16 %v81
  %v629 = vunpack.c.l.b16 %v82
  %v630 = vunpack.c.h.b16 %v82
  %v631 = vunpack.c.l.b16 %v83
  %v632 = vunpack.c.h.b16 %v83
  %v633 = vunpack.c.l.b16 %v84
  %v634 = vunpack.c.h.b16 %v84
  %v635 = vunpack.c.l.b16 %v85
  %v636 = vunpack.c.h.b16 %v85
  %v637 = vunpack.c.l.b16 %v86
  %v638 = vunpack.c.h.b16 %v86
  %v639 = vunpack.c.l.b16 %v87
  %v640 = vunpack.c.h.b16 %v87
  %v641 = vunpack.c.l.b16 %v88
  %v642 = vunpack.c.h.b16 %v88
  %v643 = vunpack.c.l.b16 %v89
  %v644 = vunpack.c.h.b16 %v89
  %v645 = vunpack.c.l.b16 %v90
  %v646 = vunpack.c.h.b16 %v90
  %v647 = vunpack.c.l.b16 %v91
  %v648 = vunpack.c.h.b16 %v91
  %v649 = vunpack.c.l.b16 %v92
  %v650 = vunpack.c.h.b16 %v92
  %v651 = vunpack.c.l.b16 %v93
  %v652 = vunpack.c.h.b16 %v93
  %v653 = vunpack.c.l.b16 %v94
  %v654 = vunpack.c.h.b16 %v94
  %v655 = vunpack.c.l.b16 %v95
  %v656 = vunpack.c.h.b16 %v95
  %v657 = vunpack.c.l.b16 %v96
  %v658 = vunpack.c.h.b16 %v96
  %v659 = vunpack.c.l.b16 %v97
  %v660 = vunpack.c.h.b16 %v97
  %v661 = vunpack.c.l.b16 %v98
  %v662 = vunpack.c.h.b16 %v98
  %v663 = vunpack.c.l.b16 %v99
  %v664 = vunpack.c.h.b16 %v99
  %v665 = vunpack.c.l.b16 %v100
  %v666 = vunpack.c.h.b16 %v100
  %v667 = vunpack.c.l.b16 %v101
  %v668 = vunpack.c.h.b16 %v101
  %v669 = vunpack.c.l.b16 %v102
  %v670 = vunpack.c.h.b16 %v102
  %v671 = vunpack.c.l.b16 %v103
  %v672 = vunpack.c.h.b16 %v103
  %v673 = vunpack.c.l.b16 %v104
  %v674 = vunpack.c.h.b16 %v104
  %v675 = vunpack.c.l.b16 %v105
  %v676 = vunpack.c.h.b16 %v105
  %v677 = vunpack.c.l.b16 %v106
  %v678 = vunpack.c.h.b16 %v106
  %v679 = vunpack.c.l.b16 %v107
  %v680 = vunpack.c.h.b16 %v107
  %v681 = vunpack.c.l.b16 %v108
  %v682 = vunpack.c.h.b16 %v108
  %v683 = vunpack.c.l.b16 %v109
  %v684 = vunpack.c.h.b16 %v109
  %v685 = vunpack.c.l.b16 %v110
  %v686 = vunpack.c.h.b16 %v110
  %v687 = vunpack.c.l.b16 %v111
  %v688 = vunpack.c.h.b16 %v111
  %v689 = vunpack.c.l.b16 %v112
  %v690 = vunpack.c.h.b16 %v112
  %v691 = vunpack.c.l.b16 %v113
  %v692 = vunpack.c.h.b16 %v113
  %v693 = vunpack.c.l.b16 %v114
  %v694 = vunpack.c.h.b16 %v114
  %v695 = vunpack.c.l.b16 %v115
  %v696 = vunpack.c.h.b16 %v115
  %v697 = vunpack.c.l.b16 %v116
  %v698 = vunpack.c.h.b16 %v116
  %v699 = vunpack.c.l.b16 %v117
  %v700 = vunpack.c.h.b16 %v117
  %v701 = vunpack.c.l.b16 %v118
  %v702 = vunpack.c.h.b16 %v118
  %v703 = vunpack.c.l.b16 %v119
  %v704 = vunpack.c.h.b16 %v119
  %v705 = vunpack.c.l.b16 %v120
  %v706 = vunpack.c.h.b16 %v120
  %v707 = vunpack.c.l.b16 %v121
  %v708 = vunpack.c.h.b16 %v121
  %v709 = vunpack.c.l.b16 %v122
  %v710 = vunpack.c.h.b16 %v122
  %v711 = vunpack.c.l.b16 %v123
  %v712 = vunpack.c.h.b16 %v123
  %v713 = vunpack.c.l.b16 %v124
  %v714 = vunpack.c.h.b16 %v124
  %v715 = vunpack.c.l.b16 %v125
  %v716 = vunpack.c.h.b16 %v125
  %v717 = vunpack.c.l.b16 %v126
  %v718 = vunpack.c.h.b16 %v126
  %v719 = vunpack.c.l.b16 %v127
  %v720 = vunpack.c.h.b16 %v127
  %v721 = vunpack.c.l.b16 %v128
  %v722 = vunpack.c.h.b16 %v128
  %v723 = vunpack.c.l.b16 %v129
  %v724 = vunpack.c.h.b16 %v129
  %v725 = vunpack.c.l.b16 %v130
  %v726 = vunpack.c.h.b16 %v130
  %v727 = vunpack.c.l.b16 %v131
  %v728 = vunpack.c.h.b16 %v131
  %v729 = vunpack.c.l.b16 %v132
  %v730 = vunpack.c.h.b16 %v132
  %v731 = vunpack.c.l.b16 %v133
  %v732 = vunpack.c.h.b16 %v133
  %v733 = vunpack.c.l.b16 %v134
  %v734 = vunpack.c.h.b16 %v134
  %v735 = vunpack.c.l.b16 %v135
  %v736 = vunpack.c.h.b16 %v135
  %v737 = vunpack.c.l.b16 %v136
  %v738 = vunpack.c.h.b16 %v136
  %v739 = vunpack.c.l.b16 %v137
  %v740 = vunpack.c.h.b16 %v137
  %v741 = vunpack.c.l.b16 %v138
  %v742 = vunpack.c.h.b16 %v138
  %v743 = vunpack.c.l.b16 %v139
  %v744 = vunpack.c.h.b16 %v139
  %v745 = vunpack.c.l.b16 %v140
  %v746 = vunpack.c.h.b16 %v140
  %v747 = vunpack.c.l.b16 %v141
  %v748 = vunpack.c.h.b16 %v141
  %v749 = vunpack.c.l.b16 %v142
  %v750 = vunpack.c.h.b16 %v142
  %v751 = vunpack.c.l.b16 %v143
  %v752 = vunpack.c.h.b16 %v143
  %v753 = vunpack.c.l.b16 %v144
  %v754 = vunpack.c.h.b16 %v144
  %v755 = vunpack.c.l.b16 %v145
  %v756 = vunpack.c.h.b16 %v145
  %v757 = vunpack.c.l.b16 %v146
  %v758 = vunpack.c.h.b16 %v146
  %v759 = vunpack.c.l.b16 %v147
  %v760 = vunpack.c.h.b16 %v147
  %v761 = vunpack.c.l.b16 %v148
  %v762 = vunpack.c.h.b16 %v148
  %v763 = vunpack.c.l.b16 %v149
  %v764 = vunpack.c.h.b16 %v149
  %v765 = vunpack.c.l.b16 %v150
  %v766 = vunpack.c.h.b16 %v150
  %v767 = vunpack.c.l.b16 %v151
  %v768 = vunpack.c.h.b16 %v151
  %v769 = vunpack.c.l.b16 %v152
  %v770 = vunpack.c.h.b16 %v152
  %v771 = vunpack.c.l.b16 %v153
  %v772 = vunpack.c.h.b16 %v153
  %v773 = vunpack.c.l.b16 %v154
  %v774 = vunpack.c.h.b16 %v154
  %v775 = vunpack.c.l.b16 %v155
  %v776 = vunpack.c.h.b16 %v155
  %v777 = vunpack.c.l.b16 %v156
  %v778 = vunpack.c.h.b16 %v156
  %v779 = vunpack.c.l.b16 %v157
  %v780 = vunpack.c.h.b16 %v157
  %v781 = vunpack.c.l.b16 %v158
  %v782 = vunpack.c.h.b16 %v158
  %v783 = vunpack.c.l.b16 %v159
  %v784 = vunpack.c.h.b16 %v159
  %v785 = vunpack.c.l.b16 %v160
  %v786 = vunpack.c.h.b16 %v160
  %v787 = vunpack.c.l.b16 %v161
  %v788 = vunpack.c.h.b16 %v161
  %v789 = vunpack.c.l.b16 %v162
  %v790 = vunpack.c.h.b16 %v162
  %v791 = vunpack.c.l.b16 %v163
  %v792 = vunpack.c.h.b16 %v163
  %v793 = vunpack.c.l.b16 %v164
  %v794 = vunpack.c.h.b16 %v164
  %v795 = vunpack.c.l.b16 %v165
  %v796 = vunpack.c.h.b16 %v165
  %v797 = vunpack.c.l.b16 %v166
  %v798 = vunpack.c.h.b16 %v166
  %v799 = vunpack.c.l.b16 %v167
  %v800 = vunpack.c.h.b16 %v167
  %v801 = vunpack.c.l.b16 %v168
  %v802 = vunpack.c.h.b16 %v168
  %v803 = vunpack.c.l.b16 %v169
  %v804 = vunpack.c.h.b16 %v169
  %v805 = vunpack.c.l.b16 %v170
  %v806 = vunpack.c.h.b16 %v170
  %v807 = vunpack.c.l.b16 %v171
  %v808 = vunpack.c.h.b16 %v171
  %v809 = vunpack.c.l.b16 %v172
  %v810 = vunpack.c.h.b16 %v172
  %v811 = vunpack.c.l.b16 %v173
  %v812 = vunpack.c.h.b16 %v173
  %v813 = vunpack.c.l.b16 %v174
  %v814 = vunpack.c.h.b16 %v174
  %v815 = vunpack.c.l.b16 %v175
  %v816 = vunpack.c.h.b16 %v175
  %v817 = vunpack.c.l.b16 %v176
  %v818 = vunpack.c.h.b16 %v176
  %v819 = vunpack.c.l.b16 %v177
  %v820 = vunpack.c.h.b16 %v177
  %v821 = vunpack.c.l.b16 %v178
  %v822 = vunpack.c.h.b16 %v178
  %v823 = vunpack.c.l.b16 %v179
  %v824 = vunpack.c.h.b16 %v179
  %v825 = vunpack.c.l.b16 %v180
  %v826 = vunpack.c.h.b16 %v180
  %v827 = vunpack.c.l.b16 %v181
  %v828 = vunpack.c.h.b16 %v181
  %v829 = vunpack.c.l.b16 %v182
  %v830 = vunpack.c.h.b16 %v182
  %v831 = vunpack.c.l.b16 %v183
  %v832 = vunpack.c.h.b16 %v183
  %v833 = vunpack.c.l.b16 %v184
  %v834 = vunpack.c.h.b16 %v184
  %v835 = vunpack.c.l.b16 %v185
  %v836 = vunpack.c.h.b16 %v185
  %v837 = vunpack.c.l.b16 %v186
  %v838 = vunpack.c.h.b16 %v186
  %v839 = vunpack.c.l.b16 %v187
  %v840 = vunpack.c.h.b16 %v187
  %v841 = vunpack.c.l.b16 %v188
  %v842 = vunpack.c.h.b16 %v188
  %v843 = vunpack.c.l.b16 %v189
  %v844 = vunpack.c.h.b16 %v189
  %v845 = vunpack.c.l.b16 %v190
  %v846 = vunpack.c.h.b16 %v190
  %v847 = vunpack.c.l.b16 %v191
  %v848 = vunpack.c.h.b16 %v191
  %v849 = vunpack.c.l.b16 %v192
  %v850 = vunpack.c.h.b16 %v192
  %v851 = vunpack.c.l.b16 %v193
  %v852 = vunpack.c.h.b16 %v193
  %v853 = vunpack.c.l.b16 %v194
  %v854 = vunpack.c.h.b16 %v194
  %v855 = vunpack.c.l.b16 %v195
  %v856 = vunpack.c.h.b16 %v195
  %v857 = vunpack.c.l.b16 %v196
  %v858 = vunpack.c.h.b16 %v196
  %v859 = vunpack.c.l.b16 %v197
  %v860 = vunpack.c.h.b16 %v197
  %v861 = vunpack.c.l.b16 %v198
  %v862 = vunpack.c.h.b16 %v198
  %v863 = vunpack.c.l.b16 %v199
  %v864 = vunpack.c.h.b16 %v199
  %v865 = vunpack.c.l.b16 %v200
  %v866 = vunpack.c.h.b16 %v200
  %v867 = vunpack.c.l.b16 %v201
  %v868 = vunpack.c.h.b16 %v201
  %v869 = vunpack.c.l.b16 %v202
  %v870 = vunpack.c.h.b16 %v202
  %v871 = vunpack.c.l.b16 %v203
  %v872 = vunpack.c.h.b16 %v203
  %v873 = vunpack.c.l.b16 %v204
  %v874 = vunpack.c.h.b16 %v204
  %v875 = vunpack.c.l.b16 %v205
  %v876 = vunpack.c.h.b16 %v205
  %v877 = vunpack.c.l.b16 %v206
  %v878 = vunpack.c.h.b16 %v206
  %v879 = vunpack.c.l.b16 %v207
  %v880 = vunpack.c.h.b16 %v207
  %v881 = vunpack.c.l.b16 %v208
  %v882 = vunpack.c.h.b16 %v208
  %v883 = vunpack.c.l.b16 %v209
  %v884 = vunpack.c.h.b16 %v209
  %v885 = vunpack.c.l.b16 %v210
  %v886 = vunpack.c.h.b16 %v210
  %v887 = vunpack.c.l.b16 %v211
  %v888 = vunpack.c.h.b16 %v211
  %v889 = vunpack.c.l.b16 %v212
  %v890 = vunpack.c.h.b16 %v212
  %v891 = vunpack.c.l.b16 %v213
  %v892 = vunpack.c.h.b16 %v213
  %v893 = vunpack.c.l.b16 %v214
  %v894 = vunpack.c.h.b16 %v214
  %v895 = vunpack.c.l.b16 %v215
  %v896 = vunpack.c.h.b16 %v215
  %v897 = vunpack.c.l.b16 %v216
  %v898 = vunpack.c.h.b16 %v216
  %v899 = vunpack.c.l.b16 %v217
  %v900 = vunpack.c.h.b16 %v217
  %v901 = vunpack.c.l.b16 %v218
  %v902 = vunpack.c.h.b16 %v218
  %v903 = vunpack.c.l.b16 %v219
  %v904 = vunpack.c.h.b16 %v219
  %v905 = vunpack.c.l.b16 %v220
  %v906 = vunpack.c.h.b16 %v220
  %v907 = vunpack.c.l.b16 %v221
  %v908 = vunpack.c.h.b16 %v221
  %v909 = vunpack.c.l.b16 %v222
  %v910 = vunpack.c.h.b16 %v222
  %v911 = vunpack.c.l.b16 %v223
  %v912 = vunpack.c.h.b16 %v223
  %v913 = vunpack.c.l.b16 %v224
  %v914 = vunpack.c.h.b16 %v224
  %v915 = vunpack.c.l.b16 %v225
  %v916 = vunpack.c.h.b16 %v225
  %v917 = vunpack.c.l.b16 %v226
  %v918 = vunpack.c.h.b16 %v226
  %v919 = vunpack.c.l.b16 %v227
  %v920 = vunpack.c.h.b16 %v227
  %v921 = vunpack.c.l.b16 %v228
  %v922 = vunpack.c.h.b16 %v228
  %v923 = vunpack.c.l.b16 %v229
  %v924 = vunpack.c.h.b16 %v229
  %v925 = vunpack.c.l.b16 %v230
  %v926 = vunpack.c.h.b16 %v230
  %v927 = vunpack.c.l.b16 %v231
  %v928 = vunpack.c.h.b16 %v231
  %v929 = vunpack.c.l.b16 %v232
  %v930 = vunpack.c.h.b16 %v232
  %v931 = vunpack.c.l.b16 %v233
  %v932 = vunpack.c.h.b16 %v233
  %v933 = vunpack.c.l.b16 %v234
  %v934 = vunpack.c.h.b16 %v234
  %v935 = vunpack.c.l.b16 %v235
  %v936 = vunpack.c.h.b16 %v235
  %v937 = vunpack.c.l.b16 %v236
  %v938 = vunpack.c.h.b16 %v236
  %v939 = vunpack.c.l.b16 %v237
  %v940 = vunpack.c.h.b16 %v237
  %v941 = vunpack.c.l.b16 %v238
  %v942 = vunpack.c.h.b16 %v238
  %v943 = vunpack.c.l.b16 %v239
  %v944 = vunpack.c.h.b16 %v239
  %v945 = vunpack.c.l.b16 %v240
  %v946 = vunpack.c.h.b16 %v240
  %v947 = vunpack.c.l.b16 %v241
  %v948 = vunpack.c.h.b16 %v241
  %v949 = vunpack.c.l.b16 %v242
  %v950 = vunpack.c.h.b16 %v242
  %v951 = vunpack.c.l.b16 %v243
  %v952 = vunpack.c.h.b16 %v243
  %v953 = vunpack.c.l.b16 %v244
  %v954 = vunpack.c.h.b16 %v244
  %v955 = vunpack.c.l.b16 %v245
  %v956 = vunpack.c.h.b16 %v245
  %v957 = vunpack.c.l.b16 %v246
  %v958 = vunpack.c.h.b16 %v246
  %v959 = vunpack.c.l.b16 %v247
  %v960 = vunpack.c.h.b16 %v247
  %v961 = vunpack.c.l.b16 %v248
  %v962 = vunpack.c.h.b16 %v248
  %v963 = vunpack.c.l.b16 %v249
  %v964 = vunpack.c.h.b16 %v249
  %v965 = vunpack.c.l.b16 %v250
  %v966 = vunpack.c.h.b16 %v250
  %v967 = vunpack.c.l.b16 %v251
  %v968 = vunpack.c.h.b16 %v251
  %v969 = vunpack.c.l.b16 %v252
  %v970 = vunpack.c.h.b16 %v252
  %v971 = vunpack.c.l.b16 %v253
  %v972 = vunpack.c.h.b16 %v253
  %v973 = vunpack.c.l.b16 %v254
  %v974 = vunpack.c.h.b16 %v254
  %v975 = vunpack.c.l.b16 %v255
  %v976 = vunpack.c.h.b16 %v255
  %v977 = vunpack.c.l.b16 %v256
  %v978 = vunpack.c.h.b16 %v256
  %v979 = vunpack.c.l.b16 %v257
  %v980 = vunpack.c.h.b16 %v257
  %v981 = vunpack.c.l.b16 %v258
  %v982 = vunpack.c.h.b16 %v258
  %v983 = vunpack.c.l.b16 %v259
  %v984 = vunpack.c.h.b16 %v259
  %v985 = vunpack.c.l.b16 %v260
  %v986 = vunpack.c.h.b16 %v260
  %v987 = vunpack.c.l.b16 %v261
  %v988 = vunpack.c.h.b16 %v261
  %v989 = vunpack.c.l.b16 %v262
  %v990 = vunpack.c.h.b16 %v262
  %v991 = vunpack.c.l.b16 %v263
  %v992 = vunpack.c.h.b16 %v263
  %v993 = vunpack.c.l.b16 %v264
  %v994 = vunpack.c.h.b16 %v264
  %v995 = vunpack.c.l.b16 %v265
  %v996 = vunpack.c.h.b16 %v265
  %v997 = vunpack.c.l.b16 %v266
  %v998 = vunpack.c.h.b16 %v266
  %v999 = vunpack.c.l.b16 %v267
  %v1000 = vunpack.c.h.b16 %v267
  %v1001 = vunpack.c.l.b16 %v268
  %v1002 = vunpack.c.h.b16 %v268
  %v1003 = vunpack.c.l.b16 %v269
  %v1004 = vunpack.c.h.b16 %v269
  %v1005 = vunpack.c.l.b16 %v270
  %v1006 = vunpack.c.h.b16 %v270
  %v1007 = vunpack.c.l.b16 %v271
  %v1008 = vunpack.c.h.b16 %v271
  %v1009 = vunpack.c.l.b16 %v272
  %v1010 = vunpack.c.h.b16 %v272
  %v1011 = vunpack.c.l.b16 %v273
  %v1012 = vunpack.c.h.b16 %v273
  %v1013 = vunpack.c.l.b16 %v274
  %v1014 = vunpack.c.h.b16 %v274
  %v1015 = vunpack.c.l.b16 %v275
  %v1016 = vunpack.c.h.b16 %v275
  %v1017 = vunpack.c.l.b16 %v276
  %v1018 = vunpack.c.h.b16 %v276
  %v1019 = vunpack.c.l.b16 %v277
  %v1020 = vunpack.c.h.b16 %v277
  %v1021 = vunpack.c.l.b16 %v278
  %v1022 = vunpack.c.h.b16 %v278
  %v1023 = vunpack.c.l.b16 %v279
  %v1024 = vunpack.c.h.b16 %v279
  %v1025 = vunpack.c.l.b16 %v280
  %v1026 = vunpack.c.h.b16 %v280
  %v1027 = vunpack.c.l.b16 %v281
  %v1028 = vunpack.c.h.b16 %v281
  %v1029 = vunpack.c.l.b16 %v282
  %v1030 = vunpack.c.h.b16 %v282
  %v1031 = vunpack.c.l.b16 %v283
  %v1032 = vunpack.c.h.b16 %v283
  %v1033 = vunpack.c.l.b16 %v284
  %v1034 = vunpack.c.h.b16 %v284
  %v1035 = vunpack.c.l.b16 %v285
  %v1036 = vunpack.c.h.b16 %v285
  %v1037 = vunpack.c.l.b16 %v286
  %v1038 = vunpack.c.h.b16 %v286
  %v1039 = vunpack.c.l.b16 %v287
  %v1040 = vunpack.c.h.b16 %v287
  %v1041 = vunpack.c.l.b16 %v288
  %v1042 = vunpack.c.h.b16 %v288
  %v1043 = vunpack.c.l.b16 %v289
  %v1044 = vunpack.c.h.b16 %v289
  %v1045 = vunpack.c.l.b16 %v290
  %v1046 = vunpack.c.h.b16 %v290
  %v1047 = vunpack.c.l.b16 %v291
  %v1048 = vunpack.c.h.b16 %v291
  %v1049 = vunpack.c.l.b16 %v292
  %v1050 = vunpack.c.h.b16 %v292
  %v1051 = vunpack.c.l.b16 %v293
  %v1052 = vunpack.c.h.b16 %v293
  %v1053 = vunpack.c.l.b16 %v294
  %v1054 = vunpack.c.h.b16 %v294
  %v1055 = vunpack.c.l.b16 %v295
  %v1056 = vunpack.c.h.b16 %v295
  %v1057 = vunpack.c.l.b16 %v296
  %v1058 = vunpack.c.h.b16 %v296
  %v1059 = vunpack.c.l.b16 %v297
  %v1060 = vunpack.c.h.b16 %v297
  %v1061 = vunpack.c.l.b16 %v298
  %v1062 = vunpack.c.h.b16 %v298
  %v1063 = vunpack.c.l.b16 %v299
  %v1064 = vunpack.c.h.b16 %v299
  %v1065 = vunpack.c.l.b16 %v300
  %v1066 = vunpack.c.h.b16 %v300
  %v1067 = vunpack.c.l.b16 %v301
  %v1068 = vunpack.c.h.b16 %v301
  %v1069 = vunpack.c.l.b16 %v302
  %v1070 = vunpack.c.h.b16 %v302
  %v1071 = vunpack.c.l.b16 %v303
  %v1072 = vunpack.c.h.b16 %v303
  %v1073 = vunpack.c.l.b16 %v304
  %v1074 = vunpack.c.h.b16 %v304
  %v1075 = vunpack.c.l.b16 %v305
  %v1076 = vunpack.c.h.b16 %v305
  %v1077 = vunpack.c.l.b16 %v306
  %v1078 = vunpack.c.h.b16 %v306
  %v1079 = vunpack.c.l.b16 %v307
  %v1080 = vunpack.c.h.b16 %v307
  %v1081 = vunpack.c.l.b16 %v308
  %v1082 = vunpack.c.h.b16 %v308
  %v1083 = vunpack.c.l.b16 %v309
  %v1084 = vunpack.c.h.b16 %v309
  %v1085 = vunpack.c.l.b16 %v310
  %v1086 = vunpack.c.h.b16 %v310
  %v1087 = vunpack.c.l.b16 %v311
  %v1088 = vunpack.c.h.b16 %v311
  %v1089 = vunpack.c.l.b16 %v312
  %v1090 = vunpack.c.h.b16 %v312
  %v1091 = vpack.c.b16 %v583, %v579
  %v1092 = vpack.c.b16 %v584, %v580
  %v1093 = vpack.c.b16 %v585, %v581
  %v1094 = vpack.c.b16 %v586, %v582
  %v1095 = vpack.c.b16 %v591, %v587
  %v1096 = vpack.c.b16 %v592, %v588
  %v1097 = vpack.c.b16 %v593, %v589
  %v1098 = vpack.c.b16 %v594, %v590
  %v1099 = vpack.c.b16 %v599, %v595
  %v1100 = vpack.c.b16 %v600, %v596
  %v1101 = vpack.c.b16 %v601, %v597
  %v1102 = vpack.c.b16 %v602, %v598
  %v1103 = vpack.c.b16 %v607, %v603
  %v1104 = vpack.c.b16 %v608, %v604
  %v1105 = vpack.c.b16 %v609, %v605
  %v1106 = vpack.c.b16 %v610, %v606
  %v1107 = vpack.c.b16 %v615, %v611
  %v1108 = vpack.c.b16 %v616, %v612
  %v1109 = vpack.c.b16 %v617, %v613
  %v1110 = vpack.c.b16 %v618, %v614
  %v1111 = vpack.c.b16 %v623, %v619
  %v1112 = vpack.c.b16 %v624, %v620
  %v1113 = vpack.c.b16 %v625, %v621
  %v1114 = vpack.c.b16 %v626, %v622
  %v1115 = vpack.c.b16 %v631, %v627
  %v1116 = vpack.c.b16 %v632, %v628
  %v1117 = vpack.c.b16 %v633, %v629
  %v1118 = vpack.c.b16 %v634, %v630
  %v1119 = vpack.c.b16 %v639, %v635
  %v1120 = vpack.c.b16 %v640, %v636
  %v1121 = vpack.c.b16 %v641, %v637
  %v1122 = vpack.c.b16 %v642, %v638
  %v1123 = vpack.c.b16 %v647, %v643
  %v1124 = vpack.c.b16 %v648, %v644
  %v1125 = vpack.c.b16 %v649, %v645
  %v1126 = vpack.c.b16 %v650, %v646
  %v1127 = vpack.c.b16 %v655, %v651
  %v1128 = vpack.c.b16 %v656, %v652
  %v1129 = vpack.c.b16 %v657, %v653
  %v1130 = vpack.c.b16 %v658, %v654
  %v1131 = vpack.c.b16 %v663, %v659
  %v1132 = vpack.c.b16 %v664, %v660
  %v1133 = vpack.c.b16 %v665, %v661
  %v1134 = vpack.c.b16 %v666, %v662
  %v1135 = vpack.c.b16 %v671, %v667
  %v1136 = vpack.c.b16 %v672, %v668
  %v1137 = vpack.c.b16 %v673, %v669
  %v1138 = vpack.c.b16 %v674, %v670
  %v1139 = vpack.c.b16 %v679, %v675
  %v1140 = vpack.c.b16 %v680, %v676
  %v1141 = vpack.c.b16 %v681, %v677
  %v1142 = vpack.c.b16 %v682, %v678
  %v1143 = vpack.c.b16 %v687, %v683
  %v1144 = vpack.c.b16 %v688, %v684
  %v1145 = vpack.c.b16 %v689, %v685
  %v1146 = vpack.c.b16 %v690, %v686
  %v1147 = vpack.c.b16 %v695, %v691
  %v1148 = vpack.c.b16 %v696, %v692
  %v1149 = vpack.c.b16 %v697, %v693
  %v1150 = vpack.c.b16 %v698, %v694
  %v1151 = vpack.c.b16 %v703, %v699
  %v1152 = vpack.c.b16 %v704, %v700
  %v1153 = vpack.c.b16 %v705, %v701
  %v1154 = vpack.c.b16 %v706, %v702
  %v1155 = vpack.c.b16 %v711, %v707
  %v1156 = vpack.c.b16 %v712, %v708
  %v1157 = vpack.c.b16 %v713, %v709
  %v1158 = vpack.c.b16 %v714, %v710
  %v1159 = vpack.c.b16 %v719, %v715
  %v1160 = vpack.c.b16 %v720, %v716
  %v1161 = vpack.c.b16 %v721, %v717
  %v1162 = vpack.c.b16 %v722, %v718
  %v1163 = vpack.c.b16 %v727, %v723
  %v1164 = vpack.c.b16 %v728, %v724
  %v1165 = vpack.c.b16 %v729, %v725
  %v1166 = vpack.c.b16 %v730, %v726
  %v1167 = vpack.c.b16 %v735, %v731
  %v1168 = vpack.c.b16 %v736, %v732
  %v1169 = vpack.c.b16 %v737, %v733
  %v1170 = vpack.c.b16 %v738, %v734
  %v1171 = vpack.c.b16 %v743, %v739
  %v1172 = vpack.c.b16 %v744, %v740
  %v1173 = vpack.c.b16 %v745, %v741
  %v1174 = vpack.c.b16 %v746, %v742
  %v1175 = vpack.c.b16 %v751, %v747
  %v1176 = vpack.c.b16 %v752, %v748
  %v1177 = vpack.c.b16 %v753, %v749
  %v1178 = vpack.c.b16 %v754, %v750
  %v1179 = vpack.c.b16 %v759, %v755
  %v1180 = vpack.c.b16 %v760, %v756
  %v1181 = vpack.c.b16 %v761, %v757
  %v1182 = vpack.c.b16 %v762, %v758
  %v1183 = vpack.c.b16 %v767, %v763
  %v1184 = vpack.c.b16 %v768, %v764
  %v1185 = vpack.c.b16 %v769, %v765
  %v1186 = vpack.c.b16 %v770, %v766
  %v1187 = vpack.c.b16 %v775, %v771
  %v1188 = vpack.c.b16 %v776, %v772
  %v1189 = vpack.c.b16 %v777, %v773
  %v1190 = vpack.c.b16 %v778, %v774
  %v1191 = vpack.c.b16 %v783, %v779
  %v1192 = vpack.c.b16 %v784, %v780
  %v1193 = vpack.c.b16 %v785, %v781
  %v1194 = vpack.c.b16 %v786, %v782
  %v1195 = vpack.c.b16 %v791, %v787
  %v1196 = vpack.c.b16 %v792, %v788
  %v1197 = vpack.c.b16 %v793, %v789
  %v1198 = vpack.c.b16 %v794, %v790
  %v1199 = vpack.c.b16 %v799, %v795
  %v1200 = vpack.c.b16 %v800, %v796
  %v1201 = vpack.c.b16 %v801, %v797
  %v1202 = vpack.c.b16 %v802, %v798
  %v1203 = vpack.c.b16 %v807, %v803
  %v1204 = vpack.c.b16 %v808, %v804
  %v1205 = vpack.c.b16 %v809, %v805
  %v1206 = vpack.c.b16 %v810, %v806
  %v1207 = vpack.c.b16 %v815, %v811
  %v1208 = vpack.c.b16 %v816, %v812
  %v1209 = vpack.c.b16 %v817, %v813
  %v1210 = vpack.c.b16 %v818, %v814
  %v1211 = vpack.c.b16 %v823, %v819
  %v1212 = vpack.c.b16 %v824, %v820
  %v1213 = vpack.c.b16 %v825, %v821
  %v1214 = vpack.c.b16 %v826, %v822
  %v1215 = vpack.c.b16 %v831, %v827
  %v1216 = vpack.c.b16 %v832, %v828
  %v1217 = vpack.c.b16 %v833, %v829
  %v1218 = vpack.c.b16 %v834, %v830
  %v1219 = vpack.c.b16 %v839, %v835
  %v1220 = vpack.c.b16 %v840, %v836
  %v1221 = vpack.c.b16 %v841, %v837
  %v1222 = vpack.c.b16 %v842, %v838
  %v1223 = vpack.c.b16 %v847, %v843
  %v1224 = vpack.c.b16 %v848, %v844
  %v1225 = vpack.c.b16 %v849, %v845
  %v1226 = vpack.c.b16 %v850, %v846
  %v1227 = vpack.c.b16 %v855, %v851
  %v1228 = vpack.c.b16 %v856, %v852
  %v1229 = vpack.c.b16 %v857, %v853
  %v1230 = vpack.c.b16 %v858, %v854
  %v1231 = vpack.c.b16 %v863, %v859
  %v1232 = vpack.c.b16 %v864, %v860
  %v1233 = vpack.c.b16 %v865, %v861
  %v1234 = vpack.c.b16 %v866, %v862
  %v1235 = vpack.c.b16 %v871, %v867
  %v1236 = vpack.c.b16 %v872, %v868
  %v1237 = vpack.c.b16 %v873, %v869
  %v1238 = vpack.c.b16 %v874, %v870
  %v1239 = vpack.c.b16 %v879, %v875
  %v1240 = vpack.c.b16 %v880, %v876
  %v1241 = vpack.c.b16 %v881, %v877
  %v1242 = vpack.c.b16 %v882, %v878
  %v1243 = vpack.c.b16 %v887, %v883
  %v1244 = vpack.c.b16 %v888, %v884
  %v1245 = vpack.c.b16 %v889, %v885
  %v1246 = vpack.c.b16 %v890, %v886
  %v1247 = vpack.c.b16 %v895, %v891
  %v1248 = vpack.c.b16 %v896, %v892
  %v1249 = vpack.c.b16 %v897, %v893
  %v1250 = vpack.c.b16 %v898, %v894
  %v1251 = vpack.c.b16 %v903, %v899
  %v1252 = vpack.c.b16 %v904, %v900
  %v1253 = vpack.c.b16 %v905, %v901
  %v1254 = vpack.c.b16 %v906, %v902
  %v1255 = vpack.c.b16 %v911, %v907
  %v1256 = vpack.c.b16 %v912, %v908
  %v1257 = vpack.c.b16 %v913, %v909
  %v1258 = vpack.c.b16 %v914, %v910
  %v1259 = vpack.c.b16 %v919, %v915
  %v1260 = vpack.c.b16 %v920, %v916
  %v1261 = vpack.c.b16 %v921, %v917
  %v1262 = vpack.c.b16 %v922, %v918
  %v1263 = vpack.c.b16 %v927, %v923
  %v1264 = vpack.c.b16 %v928, %v924
  %v1265 = vpack.c.b16 %v929, %v925
  %v1266 = vpack.c.b16 %v930, %v926
  %v1267 = vpack.c.b16 %v935, %v931
  %v1268 = vpack.c.b16 %v936, %v932
  %v1269 = vpack.c.b16 %v937, %v933
  %v1270 = vpack.c.b16 %v938, %v934
  %v1271 = vpack.c.b16 %v943, %v939
  %v1272 = vpack.c.b16 %v944, %v940
  %v1273 = vpack.c.b16 %v945, %v941
  %v1274 = vpack.c.b16 %v946, %v942
  %v1275 = vpack.c.b16 %v951, %v947
  %v1276 = vpack.c.b16 %v952, %v948
  %v1277 = vpack.c.b16 %v953, %v949
  %v1278 = vpack.c.b16 %v954, %v950
  %v1279 = vpack.c.b16 %v959, %v955
  %v1280 = vpack.c.b16 %v960, %v956
  %v1281 = vpack.c.b16 %v961, %v957
  %v1282 = vpack.c.b16 %v962, %v958
  %v1283 = vpack.c.b16 %v967, %v963
  %v1284 = vpack.c.b16 %v968, %v964
  %v1285 = vpack.c.b16 %v969, %v965
  %v1286 = vpack.c.b16 %v970, %v966
  %v1287 = vpack.c.b16 %v975, %v971
  %v1288 = vpack.c.b16 %v976, %v972
  %v1289 = vpack.c.b16 %v977, %v973
  %v1290 = vpack.c.b16 %v978, %v974
  %v1291 = vpack.c.b16 %v983, %v979
  %v1292 = vpack.c.b16 %v984, %v980
  %v1293 = vpack.c.b16 %v985, %v981
  %v1294 = vpack.c.b16 %v986, %v982
  %v1295 = vpack.c.b16 %v991, %v987
  %v1296 = vpack.c.b16 %v992, %v988
  %v1297 = vpack.c.b16 %v993, %v989
  %v1298 = vpack.c.b16 %v994, %v990
  %v1299 = vpack.c.b16 %v999, %v995
  %v1300 = vpack.c.b16 %v1000, %v996
  %v1301 = vpack.c.b16 %v1001, %v997
  %v1302 = vpack.c.b16 %v1002, %v998
  %v1303 = vpack.c.b16 %v1007, %v1003
  %v1304 = vpack.c.b16 %v1008, %v1004
  %v1305 = vpack.c.b16 %v1009, %v1005
  %v1306 = vpack.c.b16 %v1010, %v1006
  %v1307 = vpack.c.b16 %v1015, %v1011
  %v1308 = vpack.c.b16 %v1016, %v1012
  %v1309 = vpack.c.b16 %v1017, %v1013
  %v1310 = vpack.c.b16 %v1018, %v1014
  %v1311 = vpack.c.b16 %v1023, %v1019
  %v1312 = vpack.c.b16 %v1024, %v1020
  %v1313 = vpack.c.b16 %v1025, %v1021
  %v1314 = vpack.c.b16 %v1026, %v1022
  %v1315 = vpack.c.b16 %v1031, %v1027
  %v1316 = vpack.c.b16 %v1032, %v1028
  %v1317 = vpack.c.b16 %v1033, %v1029
  %v1318 = vpack.c.b16 %v1034, %v1030
  %v1319 = vpack.c.b16 %v1039, %v1035
  %v1320 = vpack.c.b16 %v1040, %v1036
  %v1321 = vpack.c.b16 %v1041, %v1037
  %v1322 = vpack.c.b16 %v1042, %v1038
  %v1323 = vpack.c.b16 %v1047, %v1043
  %v1324 = vpack.c.b16 %v1048, %v1044
  %v1325 = vpack.c.b16 %v1049, %v1045
  %v1326 = vpack.c.b16 %v1050, %v1046
  %v1327 = vpack.c.b16 %v1055, %v1051
  %v1328 = vpack.c.b16 %v1056, %v1052
  %v1329 = vpack.c.b16 %v1057, %v1053
  %v1330 = vpack.c.b16 %v1058, %v1054
  %v1331 = vpack.c.b16 %v1063, %v1059
  %v1332 = vpack.c.b16 %v1064, %v1060
  %v1333 = vpack.c.b16 %v1065, %v1061
  %v1334 = vpack.c.b16 %v1066, %v1062
  %v1335 = vpack.c.b16 %v1071, %v1067
  %v1336 = vpack.c.b16 %v1072, %v1068
  %v1337 = vpack.c.b16 %v1073, %v1069
  %v1338 = vpack.c.b16 %v1074, %v1070
  %v1339 = vpack.c.b16 %v1079, %v1075
  %v1340 = vpack.c.b16 %v1080, %v1076
  %v1341 = vpack.c.b16 %v1081, %v1077
  %v1342 = vpack.c.b16 %v1082, %v1078
  %v1343 = vpack.c.b16 %v1087, %v1083
  %v1344 = vpack.c.b16 %v1088, %v1084
  %v1345 = vpack.c.b16 %v1089, %v1085
  %v1346 = vpack.c.b16 %v1090, %v1086
  %1603 = vmatpush.bf16.msra.mxu0 %v1119
  %1604 = vmatpush.bf16.msra.mxu0 %v1115
  %1605 = vmatpush.bf16.msra.mxu0 %v1111
  %1606 = vmatpush.bf16.msra.mxu0 %v1107
  %1607 = vmatpush.bf16.msra.mxu0 %v1103
  %1608 = vmatpush.bf16.msra.mxu0 %v1099
  %1609 = vmatpush.bf16.msra.mxu0 %v1095
  %1610 = vmatpush.bf16.msra.mxu0 %v1091
  %1611 = vmatmul.bf16.gmra.mxu0 %v49
  %v1612 = vpop.f32.mrf.mxu0
  %v1613 = vadd.f32 %v315, %v1612
  %v1614 = vpop.f32.mrf.mxu0
  %1615 = vdwg.mxu0
  %1616 = vmatpush.bf16.msra.mxu0 %v1151
  %1617 = vmatpush.bf16.msra.mxu0 %v1147
  %1618 = vmatpush.bf16.msra.mxu0 %v1143
  %1619 = vmatpush.bf16.msra.mxu0 %v1139
  %1620 = vmatpush.bf16.msra.mxu0 %v1135
  %1621 = vmatpush.bf16.msra.mxu0 %v1131
  %1622 = vmatpush.bf16.msra.mxu0 %v1127
  %1623 = vmatpush.bf16.msra.mxu0 %v1123
  %1624 = vmatmul.bf16.gmra.mxu0 %v50
  %v1625 = vpop.f32.mrf.mxu0
  %v1626 = vadd.f32 %v1613, %v1625
  %v1627 = vpop.f32.mrf.mxu0
  %1628 = vdwg.mxu0
  %1629 = vmatpush.bf16.msra.mxu0 %v1183
  %1630 = vmatpush.bf16.msra.mxu0 %v1179
  %1631 = vmatpush.bf16.msra.mxu0 %v1175
  %1632 = vmatpush.bf16.msra.mxu0 %v1171
  %1633 = vmatpush.bf16.msra.mxu0 %v1167
  %1634 = vmatpush.bf16.msra.mxu0 %v1163
  %1635 = vmatpush.bf16.msra.mxu0 %v1159
  %1636 = vmatpush.bf16.msra.mxu0 %v1155
  %1637 = vmatmul.bf16.gmra.mxu0 %v51
  %v1638 = vpop.f32.mrf.mxu0
  %v1639 = vadd.f32 %v1626, %v1638
  %v1640 = vpop.f32.mrf.mxu0
  %1641 = vdwg.mxu0
  %1642 = vmatpush.bf16.msra.mxu0 %v1215
  %1643 = vmatpush.bf16.msra.mxu0 %v1211
  %1644 = vmatpush.bf16.msra.mxu0 %v1207
  %1645 = vmatpush.bf16.msra.mxu0 %v1203
  %1646 = vmatpush.bf16.msra.mxu0 %v1199
  %1647 = vmatpush.bf16.msra.mxu0 %v1195
  %1648 = vmatpush.bf16.msra.mxu0 %v1191
  %1649 = vmatpush.bf16.msra.mxu0 %v1187
  %1650 = vmatmul.bf16.gmra.mxu0 %v52
  %v1651 = vpop.f32.mrf.mxu0
  %v1652 = vadd.f32 %v1639, %v1651
  %v1653 = vpop.f32.mrf.mxu0
  %1654 = vdwg.mxu0
  %1655 = vmatpush.bf16.msra.mxu0 %v1247
  %1656 = vmatpush.bf16.msra.mxu0 %v1243
  %1657 = vmatpush.bf16.msra.mxu0 %v1239
  %1658 = vmatpush.bf16.msra.mxu0 %v1235
  %1659 = vmatpush.bf16.msra.mxu0 %v1231
  %1660 = vmatpush.bf16.msra.mxu0 %v1227
  %1661 = vmatpush.bf16.msra.mxu0 %v1223
  %1662 = vmatpush.bf16.msra.mxu0 %v1219
  %1663 = vmatmul.bf16.gmra.mxu0 %v53
  %v1664 = vpop.f32.mrf.mxu0
  %v1665 = vadd.f32 %v1652, %v1664
  %v1666 = vpop.f32.mrf.mxu0
  %1667 = vdwg.mxu0
  %1668 = vmatpush.bf16.msra.mxu0 %v1279
  %1669 = vmatpush.bf16.msra.mxu0 %v1275
  %1670 = vmatpush.bf16.msra.mxu0 %v1271
  %1671 = vmatpush.bf16.msra.mxu0 %v1267
  %1672 = vmatpush.bf16.msra.mxu0 %v1263
  %1673 = vmatpush.bf16.msra.mxu0 %v1259
  %1674 = vmatpush.bf16.msra.mxu0 %v1255
  %1675 = vmatpush.bf16.msra.mxu0 %v1251
  %1676 = vmatmul.bf16.gmra.mxu0 %v54
  %v1677 = vpop.f32.mrf.mxu0
  %v1678 = vadd.f32 %v1665, %v1677
  %v1679 = vpop.f32.mrf.mxu0
  %1680 = vdwg.mxu0
  %1681 = vmatpush.bf16.msra.mxu0 %v1311
  %1682 = vmatpush.bf16.msra.mxu0 %v1307
  %1683 = vmatpush.bf16.msra.mxu0 %v1303
  %1684 = vmatpush.bf16.msra.mxu0 %v1299
  %1685 = vmatpush.bf16.msra.mxu0 %v1295
  %1686 = vmatpush.bf16.msra.mxu0 %v1291
  %1687 = vmatpush.bf16.msra.mxu0 %v1287
  %1688 = vmatpush.bf16.msra.mxu0 %v1283
  %1689 = vmatmul.bf16.gmra.mxu0 %v55
  %v1690 = vpop.f32.mrf.mxu0
  %v1691 = vadd.f32 %v1678, %v1690
  %v1692 = vpop.f32.mrf.mxu0
  %1693 = vdwg.mxu0
  %1694 = vmatpush.bf16.msra.mxu0 %v1343
  %1695 = vmatpush.bf16.msra.mxu0 %v1339
  %1696 = vmatpush.bf16.msra.mxu0 %v1335
  %1697 = vmatpush.bf16.msra.mxu0 %v1331
  %1698 = vmatpush.bf16.msra.mxu0 %v1327
  %1699 = vmatpush.bf16.msra.mxu0 %v1323
  %1700 = vmatpush.bf16.msra.mxu0 %v1319
  %1701 = vmatpush.bf16.msra.mxu0 %v1315
  %1702 = vmatmul.bf16.gmra.mxu0 %v56
  %v1703 = vpop.f32.mrf.mxu0
  %v1704 = vadd.f32 %v1691, %v1703
  %v1705 = vpop.f32.mrf.mxu0
  %1706 = vdwg.mxu0
  %1707 = vmatpush.bf16.msra.mxu0 %v1120
  %1708 = vmatpush.bf16.msra.mxu0 %v1116
  %1709 = vmatpush.bf16.msra.mxu0 %v1112
  %1710 = vmatpush.bf16.msra.mxu0 %v1108
  %1711 = vmatpush.bf16.msra.mxu0 %v1104
  %1712 = vmatpush.bf16.msra.mxu0 %v1100
  %1713 = vmatpush.bf16.msra.mxu0 %v1096
  %1714 = vmatpush.bf16.msra.mxu0 %v1092
  %1715 = vmatmul.bf16.gmra.mxu0 %v49
  %v1716 = vpop.f32.mrf.mxu0
  %v1717 = vadd.f32 %v316, %v1716
  %v1718 = vpop.f32.mrf.mxu0
  %1719 = vdwg.mxu0
  %1720 = vmatpush.bf16.msra.mxu0 %v1152
  %1721 = vmatpush.bf16.msra.mxu0 %v1148
  %1722 = vmatpush.bf16.msra.mxu0 %v1144
  %1723 = vmatpush.bf16.msra.mxu0 %v1140
  %1724 = vmatpush.bf16.msra.mxu0 %v1136
  %1725 = vmatpush.bf16.msra.mxu0 %v1132
  %1726 = vmatpush.bf16.msra.mxu0 %v1128
  %1727 = vmatpush.bf16.msra.mxu0 %v1124
  %1728 = vmatmul.bf16.gmra.mxu0 %v50
  %v1729 = vpop.f32.mrf.mxu0
  %v1730 = vadd.f32 %v1717, %v1729
  %v1731 = vpop.f32.mrf.mxu0
  %1732 = vdwg.mxu0
  %1733 = vmatpush.bf16.msra.mxu0 %v1184
  %1734 = vmatpush.bf16.msra.mxu0 %v1180
  %1735 = vmatpush.bf16.msra.mxu0 %v1176
  %1736 = vmatpush.bf16.msra.mxu0 %v1172
  %1737 = vmatpush.bf16.msra.mxu0 %v1168
  %1738 = vmatpush.bf16.msra.mxu0 %v1164
  %1739 = vmatpush.bf16.msra.mxu0 %v1160
  %1740 = vmatpush.bf16.msra.mxu0 %v1156
  %1741 = vmatmul.bf16.gmra.mxu0 %v51
  %v1742 = vpop.f32.mrf.mxu0
  %v1743 = vadd.f32 %v1730, %v1742
  %v1744 = vpop.f32.mrf.mxu0
  %1745 = vdwg.mxu0
  %1746 = vmatpush.bf16.msra.mxu0 %v1216
  %1747 = vmatpush.bf16.msra.mxu0 %v1212
  %1748 = vmatpush.bf16.msra.mxu0 %v1208
  %1749 = vmatpush.bf16.msra.mxu0 %v1204
  %1750 = vmatpush.bf16.msra.mxu0 %v1200
  %1751 = vmatpush.bf16.msra.mxu0 %v1196
  %1752 = vmatpush.bf16.msra.mxu0 %v1192
  %1753 = vmatpush.bf16.msra.mxu0 %v1188
  %1754 = vmatmul.bf16.gmra.mxu0 %v52
  %v1755 = vpop.f32.mrf.mxu0
  %v1756 = vadd.f32 %v1743, %v1755
  %v1757 = vpop.f32.mrf.mxu0
  %1758 = vdwg.mxu0
  %1759 = vmatpush.bf16.msra.mxu0 %v1248
  %1760 = vmatpush.bf16.msra.mxu0 %v1244
  %1761 = vmatpush.bf16.msra.mxu0 %v1240
  %1762 = vmatpush.bf16.msra.mxu0 %v1236
  %1763 = vmatpush.bf16.msra.mxu0 %v1232
  %1764 = vmatpush.bf16.msra.mxu0 %v1228
  %1765 = vmatpush.bf16.msra.mxu0 %v1224
  %1766 = vmatpush.bf16.msra.mxu0 %v1220
  %1767 = vmatmul.bf16.gmra.mxu0 %v53
  %v1768 = vpop.f32.mrf.mxu0
  %v1769 = vadd.f32 %v1756, %v1768
  %v1770 = vpop.f32.mrf.mxu0
  %1771 = vdwg.mxu0
  %1772 = vmatpush.bf16.msra.mxu0 %v1280
  %1773 = vmatpush.bf16.msra.mxu0 %v1276
  %1774 = vmatpush.bf16.msra.mxu0 %v1272
  %1775 = vmatpush.bf16.msra.mxu0 %v1268
  %1776 = vmatpush.bf16.msra.mxu0 %v1264
  %1777 = vmatpush.bf16.msra.mxu0 %v1260
  %1778 = vmatpush.bf16.msra.mxu0 %v1256
  %1779 = vmatpush.bf16.msra.mxu0 %v1252
  %1780 = vmatmul.bf16.gmra.mxu0 %v54
  %v1781 = vpop.f32.mrf.mxu0
  %v1782 = vadd.f32 %v1769, %v1781
  %v1783 = vpop.f32.mrf.mxu0
  %1784 = vdwg.mxu0
  %1785 = vmatpush.bf16.msra.mxu0 %v1312
  %1786 = vmatpush.bf16.msra.mxu0 %v1308
  %1787 = vmatpush.bf16.msra.mxu0 %v1304
  %1788 = vmatpush.bf16.msra.mxu0 %v1300
  %1789 = vmatpush.bf16.msra.mxu0 %v1296
  %1790 = vmatpush.bf16.msra.mxu0 %v1292
  %1791 = vmatpush.bf16.msra.mxu0 %v1288
  %1792 = vmatpush.bf16.msra.mxu0 %v1284
  %1793 = vmatmul.bf16.gmra.mxu0 %v55
  %v1794 = vpop.f32.mrf.mxu0
  %v1795 = vadd.f32 %v1782, %v1794
  %v1796 = vpop.f32.mrf.mxu0
  %1797 = vdwg.mxu0
  %1798 = vmatpush.bf16.msra.mxu0 %v1344
  %1799 = vmatpush.bf16.msra.mxu0 %v1340
  %1800 = vmatpush.bf16.msra.mxu0 %v1336
  %1801 = vmatpush.bf16.msra.mxu0 %v1332
  %1802 = vmatpush.bf16.msra.mxu0 %v1328
  %1803 = vmatpush.bf16.msra.mxu0 %v1324
  %1804 = vmatpush.bf16.msra.mxu0 %v1320
  %1805 = vmatpush.bf16.msra.mxu0 %v1316
  %1806 = vmatmul.bf16.gmra.mxu0 %v56
  %v1807 = vpop.f32.mrf.mxu0
  %v1808 = vadd.f32 %v1795, %v1807
  %v1809 = vpop.f32.mrf.mxu0
  %1810 = vdwg.mxu0
  %1811 = vmatpush.bf16.msra.mxu0 %v1121
  %1812 = vmatpush.bf16.msra.mxu0 %v1117
  %1813 = vmatpush.bf16.msra.mxu0 %v1113
  %1814 = vmatpush.bf16.msra.mxu0 %v1109
  %1815 = vmatpush.bf16.msra.mxu0 %v1105
  %1816 = vmatpush.bf16.msra.mxu0 %v1101
  %1817 = vmatpush.bf16.msra.mxu0 %v1097
  %1818 = vmatpush.bf16.msra.mxu0 %v1093
  %1819 = vmatmul.bf16.gmra.mxu0 %v49
  %v1820 = vpop.f32.mrf.mxu0
  %v1821 = vadd.f32 %v317, %v1820
  %v1822 = vpop.f32.mrf.mxu0
  %1823 = vdwg.mxu0
  %1824 = vmatpush.bf16.msra.mxu0 %v1153
  %1825 = vmatpush.bf16.msra.mxu0 %v1149
  %1826 = vmatpush.bf16.msra.mxu0 %v1145
  %1827 = vmatpush.bf16.msra.mxu0 %v1141
  %1828 = vmatpush.bf16.msra.mxu0 %v1137
  %1829 = vmatpush.bf16.msra.mxu0 %v1133
  %1830 = vmatpush.bf16.msra.mxu0 %v1129
  %1831 = vmatpush.bf16.msra.mxu0 %v1125
  %1832 = vmatmul.bf16.gmra.mxu0 %v50
  %v1833 = vpop.f32.mrf.mxu0
  %v1834 = vadd.f32 %v1821, %v1833
  %v1835 = vpop.f32.mrf.mxu0
  %1836 = vdwg.mxu0
  %1837 = vmatpush.bf16.msra.mxu0 %v1185
  %1838 = vmatpush.bf16.msra.mxu0 %v1181
  %1839 = vmatpush.bf16.msra.mxu0 %v1177
  %1840 = vmatpush.bf16.msra.mxu0 %v1173
  %1841 = vmatpush.bf16.msra.mxu0 %v1169
  %1842 = vmatpush.bf16.msra.mxu0 %v1165
  %1843 = vmatpush.bf16.msra.mxu0 %v1161
  %1844 = vmatpush.bf16.msra.mxu0 %v1157
  %1845 = vmatmul.bf16.gmra.mxu0 %v51
  %v1846 = vpop.f32.mrf.mxu0
  %v1847 = vadd.f32 %v1834, %v1846
  %v1848 = vpop.f32.mrf.mxu0
  %1849 = vdwg.mxu0
  %1850 = vmatpush.bf16.msra.mxu0 %v1217
  %1851 = vmatpush.bf16.msra.mxu0 %v1213
  %1852 = vmatpush.bf16.msra.mxu0 %v1209
  %1853 = vmatpush.bf16.msra.mxu0 %v1205
  %1854 = vmatpush.bf16.msra.mxu0 %v1201
  %1855 = vmatpush.bf16.msra.mxu0 %v1197
  %1856 = vmatpush.bf16.msra.mxu0 %v1193
  %1857 = vmatpush.bf16.msra.mxu0 %v1189
  %1858 = vmatmul.bf16.gmra.mxu0 %v52
  %v1859 = vpop.f32.mrf.mxu0
  %v1860 = vadd.f32 %v1847, %v1859
  %v1861 = vpop.f32.mrf.mxu0
  %1862 = vdwg.mxu0
  %1863 = vmatpush.bf16.msra.mxu0 %v1249
  %1864 = vmatpush.bf16.msra.mxu0 %v1245
  %1865 = vmatpush.bf16.msra.mxu0 %v1241
  %1866 = vmatpush.bf16.msra.mxu0 %v1237
  %1867 = vmatpush.bf16.msra.mxu0 %v1233
  %1868 = vmatpush.bf16.msra.mxu0 %v1229
  %1869 = vmatpush.bf16.msra.mxu0 %v1225
  %1870 = vmatpush.bf16.msra.mxu0 %v1221
  %1871 = vmatmul.bf16.gmra.mxu0 %v53
  %v1872 = vpop.f32.mrf.mxu0
  %v1873 = vadd.f32 %v1860, %v1872
  %v1874 = vpop.f32.mrf.mxu0
  %1875 = vdwg.mxu0
  %1876 = vmatpush.bf16.msra.mxu0 %v1281
  %1877 = vmatpush.bf16.msra.mxu0 %v1277
  %1878 = vmatpush.bf16.msra.mxu0 %v1273
  %1879 = vmatpush.bf16.msra.mxu0 %v1269
  %1880 = vmatpush.bf16.msra.mxu0 %v1265
  %1881 = vmatpush.bf16.msra.mxu0 %v1261
  %1882 = vmatpush.bf16.msra.mxu0 %v1257
  %1883 = vmatpush.bf16.msra.mxu0 %v1253
  %1884 = vmatmul.bf16.gmra.mxu0 %v54
  %v1885 = vpop.f32.mrf.mxu0
  %v1886 = vadd.f32 %v1873, %v1885
  %v1887 = vpop.f32.mrf.mxu0
  %1888 = vdwg.mxu0
  %1889 = vmatpush.bf16.msra.mxu0 %v1313
  %1890 = vmatpush.bf16.msra.mxu0 %v1309
  %1891 = vmatpush.bf16.msra.mxu0 %v1305
  %1892 = vmatpush.bf16.msra.mxu0 %v1301
  %1893 = vmatpush.bf16.msra.mxu0 %v1297
  %1894 = vmatpush.bf16.msra.mxu0 %v1293
  %1895 = vmatpush.bf16.msra.mxu0 %v1289
  %1896 = vmatpush.bf16.msra.mxu0 %v1285
  %1897 = vmatmul.bf16.gmra.mxu0 %v55
  %v1898 = vpop.f32.mrf.mxu0
  %v1899 = vadd.f32 %v1886, %v1898
  %v1900 = vpop.f32.mrf.mxu0
  %1901 = vdwg.mxu0
  %1902 = vmatpush.bf16.msra.mxu0 %v1345
  %1903 = vmatpush.bf16.msra.mxu0 %v1341
  %1904 = vmatpush.bf16.msra.mxu0 %v1337
  %1905 = vmatpush.bf16.msra.mxu0 %v1333
  %1906 = vmatpush.bf16.msra.mxu0 %v1329
  %1907 = vmatpush.bf16.msra.mxu0 %v1325
  %1908 = vmatpush.bf16.msra.mxu0 %v1321
  %1909 = vmatpush.bf16.msra.mxu0 %v1317
  %1910 = vmatmul.bf16.gmra.mxu0 %v56
  %v1911 = vpop.f32.mrf.mxu0
  %v1912 = vadd.f32 %v1899, %v1911
  %v1913 = vpop.f32.mrf.mxu0
  %1914 = vdwg.mxu0
  %1915 = vmatpush.bf16.msra.mxu0 %v1122
  %1916 = vmatpush.bf16.msra.mxu0 %v1118
  %1917 = vmatpush.bf16.msra.mxu0 %v1114
  %1918 = vmatpush.bf16.msra.mxu0 %v1110
  %1919 = vmatpush.bf16.msra.mxu0 %v1106
  %1920 = vmatpush.bf16.msra.mxu0 %v1102
  %1921 = vmatpush.bf16.msra.mxu0 %v1098
  %1922 = vmatpush.bf16.msra.mxu0 %v1094
  %1923 = vmatmul.bf16.gmra.mxu0 %v49
  %v1924 = vpop.f32.mrf.mxu0
  %v1925 = vadd.f32 %v318, %v1924
  %v1926 = vpop.f32.mrf.mxu0
  %1927 = vdwg.mxu0
  %1928 = vmatpush.bf16.msra.mxu0 %v1154
  %1929 = vmatpush.bf16.msra.mxu0 %v1150
  %1930 = vmatpush.bf16.msra.mxu0 %v1146
  %1931 = vmatpush.bf16.msra.mxu0 %v1142
  %1932 = vmatpush.bf16.msra.mxu0 %v1138
  %1933 = vmatpush.bf16.msra.mxu0 %v1134
  %1934 = vmatpush.bf16.msra.mxu0 %v1130
  %1935 = vmatpush.bf16.msra.mxu0 %v1126
  %1936 = vmatmul.bf16.gmra.mxu0 %v50
  %v1937 = vpop.f32.mrf.mxu0
  %v1938 = vadd.f32 %v1925, %v1937
  %v1939 = vpop.f32.mrf.mxu0
  %1940 = vdwg.mxu0
  %1941 = vmatpush.bf16.msra.mxu0 %v1186
  %1942 = vmatpush.bf16.msra.mxu0 %v1182
  %1943 = vmatpush.bf16.msra.mxu0 %v1178
  %1944 = vmatpush.bf16.msra.mxu0 %v1174
  %1945 = vmatpush.bf16.msra.mxu0 %v1170
  %1946 = vmatpush.bf16.msra.mxu0 %v1166
  %1947 = vmatpush.bf16.msra.mxu0 %v1162
  %1948 = vmatpush.bf16.msra.mxu0 %v1158
  %1949 = vmatmul.bf16.gmra.mxu0 %v51
  %v1950 = vpop.f32.mrf.mxu0
  %v1951 = vadd.f32 %v1938, %v1950
  %v1952 = vpop.f32.mrf.mxu0
  %1953 = vdwg.mxu0
  %1954 = vmatpush.bf16.msra.mxu0 %v1218
  %1955 = vmatpush.bf16.msra.mxu0 %v1214
  %1956 = vmatpush.bf16.msra.mxu0 %v1210
  %1957 = vmatpush.bf16.msra.mxu0 %v1206
  %1958 = vmatpush.bf16.msra.mxu0 %v1202
  %1959 = vmatpush.bf16.msra.mxu0 %v1198
  %1960 = vmatpush.bf16.msra.mxu0 %v1194
  %1961 = vmatpush.bf16.msra.mxu0 %v1190
  %1962 = vmatmul.bf16.gmra.mxu0 %v52
  %v1963 = vpop.f32.mrf.mxu0
  %v1964 = vadd.f32 %v1951, %v1963
  %v1965 = vpop.f32.mrf.mxu0
  %1966 = vdwg.mxu0
  %1967 = vmatpush.bf16.msra.mxu0 %v1250
  %1968 = vmatpush.bf16.msra.mxu0 %v1246
  %1969 = vmatpush.bf16.msra.mxu0 %v1242
  %1970 = vmatpush.bf16.msra.mxu0 %v1238
  %1971 = vmatpush.bf16.msra.mxu0 %v1234
  %1972 = vmatpush.bf16.msra.mxu0 %v1230
  %1973 = vmatpush.bf16.msra.mxu0 %v1226
  %1974 = vmatpush.bf16.msra.mxu0 %v1222
  %1975 = vmatmul.bf16.gmra.mxu0 %v53
  %v1976 = vpop.f32.mrf.mxu0
  %v1977 = vadd.f32 %v1964, %v1976
  %v1978 = vpop.f32.mrf.mxu0
  %1979 = vdwg.mxu0
  %1980 = vmatpush.bf16.msra.mxu0 %v1282
  %1981 = vmatpush.bf16.msra.mxu0 %v1278
  %1982 = vmatpush.bf16.msra.mxu0 %v1274
  %1983 = vmatpush.bf16.msra.mxu0 %v1270
  %1984 = vmatpush.bf16.msra.mxu0 %v1266
  %1985 = vmatpush.bf16.msra.mxu0 %v1262
  %1986 = vmatpush.bf16.msra.mxu0 %v1258
  %1987 = vmatpush.bf16.msra.mxu0 %v1254
  %1988 = vmatmul.bf16.gmra.mxu0 %v54
  %v1989 = vpop.f32.mrf.mxu0
  %v1990 = vadd.f32 %v1977, %v1989
  %v1991 = vpop.f32.mrf.mxu0
  %1992 = vdwg.mxu0
  %1993 = vmatpush.bf16.msra.mxu0 %v1314
  %1994 = vmatpush.bf16.msra.mxu0 %v1310
  %1995 = vmatpush.bf16.msra.mxu0 %v1306
  %1996 = vmatpush.bf16.msra.mxu0 %v1302
  %1997 = vmatpush.bf16.msra.mxu0 %v1298
  %1998 = vmatpush.bf16.msra.mxu0 %v1294
  %1999 = vmatpush.bf16.msra.mxu0 %v1290
  %2000 = vmatpush.bf16.msra.mxu0 %v1286
  %2001 = vmatmul.bf16.gmra.mxu0 %v55
  %v2002 = vpop.f32.mrf.mxu0
  %v2003 = vadd.f32 %v1990, %v2002
  %v2004 = vpop.f32.mrf.mxu0
  %2005 = vdwg.mxu0
  %2006 = vmatpush.bf16.msra.mxu0 %v1346
  %2007 = vmatpush.bf16.msra.mxu0 %v1342
  %2008 = vmatpush.bf16.msra.mxu0 %v1338
  %2009 = vmatpush.bf16.msra.mxu0 %v1334
  %2010 = vmatpush.bf16.msra.mxu0 %v1330
  %2011 = vmatpush.bf16.msra.mxu0 %v1326
  %2012 = vmatpush.bf16.msra.mxu0 %v1322
  %2013 = vmatpush.bf16.msra.mxu0 %v1318
  %2014 = vmatmul.bf16.gmra.mxu0 %v56
  %v2015 = vpop.f32.mrf.mxu0
  %v2016 = vadd.f32 %v2003, %v2015
  %v2017 = vpop.f32.mrf.mxu0
  %2018 = vdwg.mxu0
  %v2019 = vmax.f32 %v1704, 0.0
  %v2020 = vmax.f32 %v1808, 0.0
  %v2021 = vmax.f32 %v1912, 0.0
  %v2022 = vmax.f32 %v2016, 0.0
  %v2023 = vpack.c.bf16 %v2019, %v2019
  %v2024 = vpack.c.bf16 %v2020, %v2020
  %v2025 = vpack.c.bf16 %v2021, %v2021
  %v2026 = vpack.c.bf16 %v2022, %v2022
  %v2027 = vld [vmem:[%s3] sm:$0xff]
  %v2028 = vld [vmem:[%s3 + $0x8] sm:$0xff]
  %v2029 = vld [vmem:[%s3 + $0x10] sm:$0xff]
  %v2030 = vld [vmem:[%s3 + $0x18] sm:$0xff]
  %v2031 = vld [vmem:[%s3 + $0x20] sm:$0xff]
  %v2032 = vld [vmem:[%s3 + $0x28] sm:$0xff]
  %v2033 = vld [vmem:[%s3 + $0x30] sm:$0xff]
  %v2034 = vld [vmem:[%s3 + $0x38] sm:$0xff]
  %v2035 = vld [vmem:[%s3 + $0x40] sm:$0xff]
  %v2036 = vld [vmem:[%s3 + $0x48] sm:$0xff]
  %v2037 = vld [vmem:[%s3 + $0x50] sm:$0xff]
  %v2038 = vld [vmem:[%s3 + $0x58] sm:$0xff]
  %v2039 = vld [vmem:[%s3 + $0x60] sm:$0xff]
  %v2040 = vld [vmem:[%s3 + $0x68] sm:$0xff]
  %v2041 = vld [vmem:[%s3 + $0x70] sm:$0xff]
  %v2042 = vld [vmem:[%s3 + $0x78] sm:$0xff]
  %v2043 = vld [vmem:[%s3 + $0x80] sm:$0xff]
  %v2044 = vld [vmem:[%s3 + $0x88] sm:$0xff]
  %v2045 = vld [vmem:[%s3 + $0x90] sm:$0xff]
  %v2046 = vld [vmem:[%s3 + $0x98] sm:$0xff]
  %v2047 = vld [vmem:[%s3 + $0xa0] sm:$0xff]
  %v2048 = vld [vmem:[%s3 + $0xa8] sm:$0xff]
  %v2049 = vld [vmem:[%s3 + $0xb0] sm:$0xff]
  %v2050 = vld [vmem:[%s3 + $0xb8] sm:$0xff]
  %v2051 = vld [vmem:[%s3 + $0xc0] sm:$0xff]
  %v2052 = vld [vmem:[%s3 + $0xc8] sm:$0xff]
  %v2053 = vld [vmem:[%s3 + $0xd0] sm:$0xff]
  %v2054 = vld [vmem:[%s3 + $0xd8] sm:$0xff]
  %v2055 = vld [vmem:[%s3 + $0xe0] sm:$0xff]
  %v2056 = vld [vmem:[%s3 + $0xe8] sm:$0xff]
  %v2057 = vld [vmem:[%s3 + $0xf0] sm:$0xff]
  %v2058 = vld [vmem:[%s3 + $0xf8] sm:$0xff]
  %v2059 = vld [vmem:[%s3 + $0x100] sm:$0xff]
  %v2060 = vld [vmem:[%s3 + $0x108] sm:$0xff]
  %v2061 = vld [vmem:[%s3 + $0x110] sm:$0xff]
  %v2062 = vld [vmem:[%s3 + $0x118] sm:$0xff]
  %v2063 = vld [vmem:[%s3 + $0x120] sm:$0xff]
  %v2064 = vld [vmem:[%s3 + $0x128] sm:$0xff]
  %v2065 = vld [vmem:[%s3 + $0x130] sm:$0xff]
  %v2066 = vld [vmem:[%s3 + $0x138] sm:$0xff]
  %v2067 = vld [vmem:[%s3 + $0x140] sm:$0xff]
  %v2068 = vld [vmem:[%s3 + $0x148] sm:$0xff]
  %v2069 = vld [vmem:[%s3 + $0x150] sm:$0xff]
  %v2070 = vld [vmem:[%s3 + $0x158] sm:$0xff]
  %v2071 = vld [vmem:[%s3 + $0x160] sm:$0xff]
  %v2072 = vld [vmem:[%s3 + $0x168] sm:$0xff]
  %v2073 = vld [vmem:[%s3 + $0x170] sm:$0xff]
  %v2074 = vld [vmem:[%s3 + $0x178] sm:$0xff]
  %v2075 = vld [vmem:[%s3 + $0x180] sm:$0xff]
  %v2076 = vld [vmem:[%s3 + $0x188] sm:$0xff]
  %v2077 = vld [vmem:[%s3 + $0x190] sm:$0xff]
  %v2078 = vld [vmem:[%s3 + $0x198] sm:$0xff]
  %v2079 = vld [vmem:[%s3 + $0x1a0] sm:$0xff]
  %v2080 = vld [vmem:[%s3 + $0x1a8] sm:$0xff]
  %v2081 = vld [vmem:[%s3 + $0x1b0] sm:$0xff]
  %v2082 = vld [vmem:[%s3 + $0x1b8] sm:$0xff]
  %v2083 = vld [vmem:[%s3 + $0x1c0] sm:$0xff]
  %v2084 = vld [vmem:[%s3 + $0x1c8] sm:$0xff]
  %v2085 = vld [vmem:[%s3 + $0x1d0] sm:$0xff]
  %v2086 = vld [vmem:[%s3 + $0x1d8] sm:$0xff]
  %v2087 = vld [vmem:[%s3 + $0x1e0] sm:$0xff]
  %v2088 = vld [vmem:[%s3 + $0x1e8] sm:$0xff]
  %v2089 = vld [vmem:[%s3 + $0x1f0] sm:$0xff]
  %v2090 = vld [vmem:[%s3 + $0x1f8] sm:$0xff]
  %v2091 = vld [vmem:[%s4] sm:$0x3]
  %v2093 = vperm.slane %v2091, 0
  %v2094 = vperm.slane %v2091, 1
  %v2161 = vunpack.c.l.b16 %v2027
  %v2162 = vunpack.c.h.b16 %v2027
  %v2163 = vunpack.c.l.b16 %v2028
  %v2164 = vunpack.c.h.b16 %v2028
  %v2165 = vunpack.c.l.b16 %v2029
  %v2166 = vunpack.c.h.b16 %v2029
  %v2167 = vunpack.c.l.b16 %v2030
  %v2168 = vunpack.c.h.b16 %v2030
  %v2169 = vunpack.c.l.b16 %v2031
  %v2170 = vunpack.c.h.b16 %v2031
  %v2171 = vunpack.c.l.b16 %v2032
  %v2172 = vunpack.c.h.b16 %v2032
  %v2173 = vunpack.c.l.b16 %v2033
  %v2174 = vunpack.c.h.b16 %v2033
  %v2175 = vunpack.c.l.b16 %v2034
  %v2176 = vunpack.c.h.b16 %v2034
  %v2177 = vunpack.c.l.b16 %v2035
  %v2178 = vunpack.c.h.b16 %v2035
  %v2179 = vunpack.c.l.b16 %v2036
  %v2180 = vunpack.c.h.b16 %v2036
  %v2181 = vunpack.c.l.b16 %v2037
  %v2182 = vunpack.c.h.b16 %v2037
  %v2183 = vunpack.c.l.b16 %v2038
  %v2184 = vunpack.c.h.b16 %v2038
  %v2185 = vunpack.c.l.b16 %v2039
  %v2186 = vunpack.c.h.b16 %v2039
  %v2187 = vunpack.c.l.b16 %v2040
  %v2188 = vunpack.c.h.b16 %v2040
  %v2189 = vunpack.c.l.b16 %v2041
  %v2190 = vunpack.c.h.b16 %v2041
  %v2191 = vunpack.c.l.b16 %v2042
  %v2192 = vunpack.c.h.b16 %v2042
  %v2193 = vunpack.c.l.b16 %v2043
  %v2194 = vunpack.c.h.b16 %v2043
  %v2195 = vunpack.c.l.b16 %v2044
  %v2196 = vunpack.c.h.b16 %v2044
  %v2197 = vunpack.c.l.b16 %v2045
  %v2198 = vunpack.c.h.b16 %v2045
  %v2199 = vunpack.c.l.b16 %v2046
  %v2200 = vunpack.c.h.b16 %v2046
  %v2201 = vunpack.c.l.b16 %v2047
  %v2202 = vunpack.c.h.b16 %v2047
  %v2203 = vunpack.c.l.b16 %v2048
  %v2204 = vunpack.c.h.b16 %v2048
  %v2205 = vunpack.c.l.b16 %v2049
  %v2206 = vunpack.c.h.b16 %v2049
  %v2207 = vunpack.c.l.b16 %v2050
  %v2208 = vunpack.c.h.b16 %v2050
  %v2209 = vunpack.c.l.b16 %v2051
  %v2210 = vunpack.c.h.b16 %v2051
  %v2211 = vunpack.c.l.b16 %v2052
  %v2212 = vunpack.c.h.b16 %v2052
  %v2213 = vunpack.c.l.b16 %v2053
  %v2214 = vunpack.c.h.b16 %v2053
  %v2215 = vunpack.c.l.b16 %v2054
  %v2216 = vunpack.c.h.b16 %v2054
  %v2217 = vunpack.c.l.b16 %v2055
  %v2218 = vunpack.c.h.b16 %v2055
  %v2219 = vunpack.c.l.b16 %v2056
  %v2220 = vunpack.c.h.b16 %v2056
  %v2221 = vunpack.c.l.b16 %v2057
  %v2222 = vunpack.c.h.b16 %v2057
  %v2223 = vunpack.c.l.b16 %v2058
  %v2224 = vunpack.c.h.b16 %v2058
  %v2225 = vunpack.c.l.b16 %v2059
  %v2226 = vunpack.c.h.b16 %v2059
  %v2227 = vunpack.c.l.b16 %v2060
  %v2228 = vunpack.c.h.b16 %v2060
  %v2229 = vunpack.c.l.b16 %v2061
  %v2230 = vunpack.c.h.b16 %v2061
  %v2231 = vunpack.c.l.b16 %v2062
  %v2232 = vunpack.c.h.b16 %v2062
  %v2233 = vunpack.c.l.b16 %v2063
  %v2234 = vunpack.c.h.b16 %v2063
  %v2235 = vunpack.c.l.b16 %v2064
  %v2236 = vunpack.c.h.b16 %v2064
  %v2237 = vunpack.c.l.b16 %v2065
  %v2238 = vunpack.c.h.b16 %v2065
  %v2239 = vunpack.c.l.b16 %v2066
  %v2240 = vunpack.c.h.b16 %v2066
  %v2241 = vunpack.c.l.b16 %v2067
  %v2242 = vunpack.c.h.b16 %v2067
  %v2243 = vunpack.c.l.b16 %v2068
  %v2244 = vunpack.c.h.b16 %v2068
  %v2245 = vunpack.c.l.b16 %v2069
  %v2246 = vunpack.c.h.b16 %v2069
  %v2247 = vunpack.c.l.b16 %v2070
  %v2248 = vunpack.c.h.b16 %v2070
  %v2249 = vunpack.c.l.b16 %v2071
  %v2250 = vunpack.c.h.b16 %v2071
  %v2251 = vunpack.c.l.b16 %v2072
  %v2252 = vunpack.c.h.b16 %v2072
  %v2253 = vunpack.c.l.b16 %v2073
  %v2254 = vunpack.c.h.b16 %v2073
  %v2255 = vunpack.c.l.b16 %v2074
  %v2256 = vunpack.c.h.b16 %v2074
  %v2257 = vunpack.c.l.b16 %v2075
  %v2258 = vunpack.c.h.b16 %v2075
  %v2259 = vunpack.c.l.b16 %v2076
  %v2260 = vunpack.c.h.b16 %v2076
  %v2261 = vunpack.c.l.b16 %v2077
  %v2262 = vunpack.c.h.b16 %v2077
  %v2263 = vunpack.c.l.b16 %v2078
  %v2264 = vunpack.c.h.b16 %v2078
  %v2265 = vunpack.c.l.b16 %v2079
  %v2266 = vunpack.c.h.b16 %v2079
  %v2267 = vunpack.c.l.b16 %v2080
  %v2268 = vunpack.c.h.b16 %v2080
  %v2269 = vunpack.c.l.b16 %v2081
  %v2270 = vunpack.c.h.b16 %v2081
  %v2271 = vunpack.c.l.b16 %v2082
  %v2272 = vunpack.c.h.b16 %v2082
  %v2273 = vunpack.c.l.b16 %v2083
  %v2274 = vunpack.c.h.b16 %v2083
  %v2275 = vunpack.c.l.b16 %v2084
  %v2276 = vunpack.c.h.b16 %v2084
  %v2277 = vunpack.c.l.b16 %v2085
  %v2278 = vunpack.c.h.b16 %v2085
  %v2279 = vunpack.c.l.b16 %v2086
  %v2280 = vunpack.c.h.b16 %v2086
  %v2281 = vunpack.c.l.b16 %v2087
  %v2282 = vunpack.c.h.b16 %v2087
  %v2283 = vunpack.c.l.b16 %v2088
  %v2284 = vunpack.c.h.b16 %v2088
  %v2285 = vunpack.c.l.b16 %v2089
  %v2286 = vunpack.c.h.b16 %v2089
  %v2287 = vunpack.c.l.b16 %v2090
  %v2288 = vunpack.c.h.b16 %v2090
  %v2289 = vpack.c.b16 %v2163, %v2161
  %v2290 = vpack.c.b16 %v2164, %v2162
  %v2291 = vpack.c.b16 %v2167, %v2165
  %v2292 = vpack.c.b16 %v2168, %v2166
  %v2293 = vpack.c.b16 %v2171, %v2169
  %v2294 = vpack.c.b16 %v2172, %v2170
  %v2295 = vpack.c.b16 %v2175, %v2173
  %v2296 = vpack.c.b16 %v2176, %v2174
  %v2297 = vpack.c.b16 %v2179, %v2177
  %v2298 = vpack.c.b16 %v2180, %v2178
  %v2299 = vpack.c.b16 %v2183, %v2181
  %v2300 = vpack.c.b16 %v2184, %v2182
  %v2301 = vpack.c.b16 %v2187, %v2185
  %v2302 = vpack.c.b16 %v2188, %v2186
  %v2303 = vpack.c.b16 %v2191, %v2189
  %v2304 = vpack.c.b16 %v2192, %v2190
  %v2305 = vpack.c.b16 %v2195, %v2193
  %v2306 = vpack.c.b16 %v2196, %v2194
  %v2307 = vpack.c.b16 %v2199, %v2197
  %v2308 = vpack.c.b16 %v2200, %v2198
  %v2309 = vpack.c.b16 %v2203, %v2201
  %v2310 = vpack.c.b16 %v2204, %v2202
  %v2311 = vpack.c.b16 %v2207, %v2205
  %v2312 = vpack.c.b16 %v2208, %v2206
  %v2313 = vpack.c.b16 %v2211, %v2209
  %v2314 = vpack.c.b16 %v2212, %v2210
  %v2315 = vpack.c.b16 %v2215, %v2213
  %v2316 = vpack.c.b16 %v2216, %v2214
  %v2317 = vpack.c.b16 %v2219, %v2217
  %v2318 = vpack.c.b16 %v2220, %v2218
  %v2319 = vpack.c.b16 %v2223, %v2221
  %v2320 = vpack.c.b16 %v2224, %v2222
  %v2321 = vpack.c.b16 %v2227, %v2225
  %v2322 = vpack.c.b16 %v2228, %v2226
  %v2323 = vpack.c.b16 %v2231, %v2229
  %v2324 = vpack.c.b16 %v2232, %v2230
  %v2325 = vpack.c.b16 %v2235, %v2233
  %v2326 = vpack.c.b16 %v2236, %v2234
  %v2327 = vpack.c.b16 %v2239, %v2237
  %v2328 = vpack.c.b16 %v2240, %v2238
  %v2329 = vpack.c.b16 %v2243, %v2241
  %v2330 = vpack.c.b16 %v2244, %v2242
  %v2331 = vpack.c.b16 %v2247, %v2245
  %v2332 = vpack.c.b16 %v2248, %v2246
  %v2333 = vpack.c.b16 %v2251, %v2249
  %v2334 = vpack.c.b16 %v2252, %v2250
  %v2335 = vpack.c.b16 %v2255, %v2253
  %v2336 = vpack.c.b16 %v2256, %v2254
  %v2337 = vpack.c.b16 %v2259, %v2257
  %v2338 = vpack.c.b16 %v2260, %v2258
  %v2339 = vpack.c.b16 %v2263, %v2261
  %v2340 = vpack.c.b16 %v2264, %v2262
  %v2341 = vpack.c.b16 %v2267, %v2265
  %v2342 = vpack.c.b16 %v2268, %v2266
  %v2343 = vpack.c.b16 %v2271, %v2269
  %v2344 = vpack.c.b16 %v2272, %v2270
  %v2345 = vpack.c.b16 %v2275, %v2273
  %v2346 = vpack.c.b16 %v2276, %v2274
  %v2347 = vpack.c.b16 %v2279, %v2277
  %v2348 = vpack.c.b16 %v2280, %v2278
  %v2349 = vpack.c.b16 %v2283, %v2281
  %v2350 = vpack.c.b16 %v2284, %v2282
  %v2351 = vpack.c.b16 %v2287, %v2285
  %v2352 = vpack.c.b16 %v2288, %v2286
  %2417 = vmatpush.bf16.msra.mxu0 %v2303
  %2418 = vmatpush.bf16.msra.mxu0 %v2301
  %2419 = vmatpush.bf16.msra.mxu0 %v2299
  %2420 = vmatpush.bf16.msra.mxu0 %v2297
  %2421 = vmatpush.bf16.msra.mxu0 %v2295
  %2422 = vmatpush.bf16.msra.mxu0 %v2293
  %2423 = vmatpush.bf16.msra.mxu0 %v2291
  %2424 = vmatpush.bf16.msra.mxu0 %v2289
  %2425 = vmatmul.bf16.gmra.mxu0 %v2023
  %v2426 = vpop.f32.mrf.mxu0
  %v2427 = vadd.f32 %v2093, %v2426
  %v2428 = vpop.f32.mrf.mxu0
  %2429 = vdwg.mxu0
  %2430 = vmatpush.bf16.msra.mxu0 %v2319
  %2431 = vmatpush.bf16.msra.mxu0 %v2317
  %2432 = vmatpush.bf16.msra.mxu0 %v2315
  %2433 = vmatpush.bf16.msra.mxu0 %v2313
  %2434 = vmatpush.bf16.msra.mxu0 %v2311
  %2435 = vmatpush.bf16.msra.mxu0 %v2309
  %2436 = vmatpush.bf16.msra.mxu0 %v2307
  %2437 = vmatpush.bf16.msra.mxu0 %v2305
  %2438 = vmatmul.bf16.gmra.mxu0 %v2024
  %v2439 = vpop.f32.mrf.mxu0
  %v2440 = vadd.f32 %v2427, %v2439
  %v2441 = vpop.f32.mrf.mxu0
  %2442 = vdwg.mxu0
  %2443 = vmatpush.bf16.msra.mxu0 %v2335
  %2444 = vmatpush.bf16.msra.mxu0 %v2333
  %2445 = vmatpush.bf16.msra.mxu0 %v2331
  %2446 = vmatpush.bf16.msra.mxu0 %v2329
  %2447 = vmatpush.bf16.msra.mxu0 %v2327
  %2448 = vmatpush.bf16.msra.mxu0 %v2325
  %2449 = vmatpush.bf16.msra.mxu0 %v2323
  %2450 = vmatpush.bf16.msra.mxu0 %v2321
  %2451 = vmatmul.bf16.gmra.mxu0 %v2025
  %v2452 = vpop.f32.mrf.mxu0
  %v2453 = vadd.f32 %v2440, %v2452
  %v2454 = vpop.f32.mrf.mxu0
  %2455 = vdwg.mxu0
  %2456 = vmatpush.bf16.msra.mxu0 %v2351
  %2457 = vmatpush.bf16.msra.mxu0 %v2349
  %2458 = vmatpush.bf16.msra.mxu0 %v2347
  %2459 = vmatpush.bf16.msra.mxu0 %v2345
  %2460 = vmatpush.bf16.msra.mxu0 %v2343
  %2461 = vmatpush.bf16.msra.mxu0 %v2341
  %2462 = vmatpush.bf16.msra.mxu0 %v2339
  %2463 = vmatpush.bf16.msra.mxu0 %v2337
  %2464 = vmatmul.bf16.gmra.mxu0 %v2026
  %v2465 = vpop.f32.mrf.mxu0
  %v2466 = vadd.f32 %v2453, %v2465
  %v2467 = vpop.f32.mrf.mxu0
  %2468 = vdwg.mxu0
  %2469 = vmatpush.bf16.msra.mxu0 %v2304
  %2470 = vmatpush.bf16.msra.mxu0 %v2302
  %2471 = vmatpush.bf16.msra.mxu0 %v2300
  %2472 = vmatpush.bf16.msra.mxu0 %v2298
  %2473 = vmatpush.bf16.msra.mxu0 %v2296
  %2474 = vmatpush.bf16.msra.mxu0 %v2294
  %2475 = vmatpush.bf16.msra.mxu0 %v2292
  %2476 = vmatpush.bf16.msra.mxu0 %v2290
  %2477 = vmatmul.bf16.gmra.mxu0 %v2023
  %v2478 = vpop.f32.mrf.mxu0
  %v2479 = vadd.f32 %v2094, %v2478
  %v2480 = vpop.f32.mrf.mxu0
  %2481 = vdwg.mxu0
  %2482 = vmatpush.bf16.msra.mxu0 %v2320
  %2483 = vmatpush.bf16.msra.mxu0 %v2318
  %2484 = vmatpush.bf16.msra.mxu0 %v2316
  %2485 = vmatpush.bf16.msra.mxu0 %v2314
  %2486 = vmatpush.bf16.msra.mxu0 %v2312
  %2487 = vmatpush.bf16.msra.mxu0 %v2310
  %2488 = vmatpush.bf16.msra.mxu0 %v2308
  %2489 = vmatpush.bf16.msra.mxu0 %v2306
  %2490 = vmatmul.bf16.gmra.mxu0 %v2024
  %v2491 = vpop.f32.mrf.mxu0
  %v2492 = vadd.f32 %v2479, %v2491
  %v2493 = vpop.f32.mrf.mxu0
  %2494 = vdwg.mxu0
  %2495 = vmatpush.bf16.msra.mxu0 %v2336
  %2496 = vmatpush.bf16.msra.mxu0 %v2334
  %2497 = vmatpush.bf16.msra.mxu0 %v2332
  %2498 = vmatpush.bf16.msra.mxu0 %v2330
  %2499 = vmatpush.bf16.msra.mxu0 %v2328
  %2500 = vmatpush.bf16.msra.mxu0 %v2326
  %2501 = vmatpush.bf16.msra.mxu0 %v2324
  %2502 = vmatpush.bf16.msra.mxu0 %v2322
  %2503 = vmatmul.bf16.gmra.mxu0 %v2025
  %v2504 = vpop.f32.mrf.mxu0
  %v2505 = vadd.f32 %v2492, %v2504
  %v2506 = vpop.f32.mrf.mxu0
  %2507 = vdwg.mxu0
  %2508 = vmatpush.bf16.msra.mxu0 %v2352
  %2509 = vmatpush.bf16.msra.mxu0 %v2350
  %2510 = vmatpush.bf16.msra.mxu0 %v2348
  %2511 = vmatpush.bf16.msra.mxu0 %v2346
  %2512 = vmatpush.bf16.msra.mxu0 %v2344
  %2513 = vmatpush.bf16.msra.mxu0 %v2342
  %2514 = vmatpush.bf16.msra.mxu0 %v2340
  %2515 = vmatpush.bf16.msra.mxu0 %v2338
  %2516 = vmatmul.bf16.gmra.mxu0 %v2026
  %v2517 = vpop.f32.mrf.mxu0
  %v2518 = vadd.f32 %v2505, %v2517
  %v2519 = vpop.f32.mrf.mxu0
  %2520 = vdwg.mxu0
  %v2521 = vmax.f32 %v2466, 0.0
  %v2522 = vmax.f32 %v2518, 0.0
  %v2523 = vpack.c.bf16 %v2521, %v2521
  %v2524 = vpack.c.bf16 %v2522, %v2522
  %v2525 = vld [vmem:[%s5] sm:$0xf]
  %v2526 = vld [vmem:[%s5 + $0x4] sm:$0xf]
  %v2527 = vld [vmem:[%s5 + $0x8] sm:$0xf]
  %v2528 = vld [vmem:[%s5 + $0xc] sm:$0xf]
  %v2529 = vld [vmem:[%s5 + $0x10] sm:$0xf]
  %v2530 = vld [vmem:[%s5 + $0x14] sm:$0xf]
  %v2531 = vld [vmem:[%s5 + $0x18] sm:$0xf]
  %v2532 = vld [vmem:[%s5 + $0x1c] sm:$0xf]
  %v2533 = vld [vmem:[%s5 + $0x20] sm:$0xf]
  %v2534 = vld [vmem:[%s5 + $0x24] sm:$0xf]
  %v2535 = vld [vmem:[%s5 + $0x28] sm:$0xf]
  %v2536 = vld [vmem:[%s5 + $0x2c] sm:$0xf]
  %v2537 = vld [vmem:[%s5 + $0x30] sm:$0xf]
  %v2538 = vld [vmem:[%s5 + $0x34] sm:$0xf]
  %v2539 = vld [vmem:[%s5 + $0x38] sm:$0xf]
  %v2540 = vld [vmem:[%s5 + $0x3c] sm:$0xf]
  %v2541 = vld [vmem:[%s5 + $0x40] sm:$0xf]
  %v2542 = vld [vmem:[%s5 + $0x44] sm:$0xf]
  %v2543 = vld [vmem:[%s5 + $0x48] sm:$0xf]
  %v2544 = vld [vmem:[%s5 + $0x4c] sm:$0xf]
  %v2545 = vld [vmem:[%s5 + $0x50] sm:$0xf]
  %v2546 = vld [vmem:[%s5 + $0x54] sm:$0xf]
  %v2547 = vld [vmem:[%s5 + $0x58] sm:$0xf]
  %v2548 = vld [vmem:[%s5 + $0x5c] sm:$0xf]
  %v2549 = vld [vmem:[%s5 + $0x60] sm:$0xf]
  %v2550 = vld [vmem:[%s5 + $0x64] sm:$0xf]
  %v2551 = vld [vmem:[%s5 + $0x68] sm:$0xf]
  %v2552 = vld [vmem:[%s5 + $0x6c] sm:$0xf]
  %v2553 = vld [vmem:[%s5 + $0x70] sm:$0xf]
  %v2554 = vld [vmem:[%s5 + $0x74] sm:$0xf]
  %v2555 = vld [vmem:[%s5 + $0x78] sm:$0xf]
  %v2556 = vld [vmem:[%s5 + $0x7c] sm:$0xf]
  %v2557 = vld [vmem:[%s6] sm:$0x1]
  %v2559 = vperm.slane %v2557, 0
  %v2593 = vunpack.c.l.b16 %v2525
  %v2594 = vunpack.c.l.b16 %v2526
  %v2595 = vunpack.c.l.b16 %v2527
  %v2596 = vunpack.c.l.b16 %v2528
  %v2597 = vunpack.c.l.b16 %v2529
  %v2598 = vunpack.c.l.b16 %v2530
  %v2599 = vunpack.c.l.b16 %v2531
  %v2600 = vunpack.c.l.b16 %v2532
  %v2601 = vunpack.c.l.b16 %v2533
  %v2602 = vunpack.c.l.b16 %v2534
  %v2603 = vunpack.c.l.b16 %v2535
  %v2604 = vunpack.c.l.b16 %v2536
  %v2605 = vunpack.c.l.b16 %v2537
  %v2606 = vunpack.c.l.b16 %v2538
  %v2607 = vunpack.c.l.b16 %v2539
  %v2608 = vunpack.c.l.b16 %v2540
  %v2609 = vunpack.c.l.b16 %v2541
  %v2610 = vunpack.c.l.b16 %v2542
  %v2611 = vunpack.c.l.b16 %v2543
  %v2612 = vunpack.c.l.b16 %v2544
  %v2613 = vunpack.c.l.b16 %v2545
  %v2614 = vunpack.c.l.b16 %v2546
  %v2615 = vunpack.c.l.b16 %v2547
  %v2616 = vunpack.c.l.b16 %v2548
  %v2617 = vunpack.c.l.b16 %v2549
  %v2618 = vunpack.c.l.b16 %v2550
  %v2619 = vunpack.c.l.b16 %v2551
  %v2620 = vunpack.c.l.b16 %v2552
  %v2621 = vunpack.c.l.b16 %v2553
  %v2622 = vunpack.c.l.b16 %v2554
  %v2623 = vunpack.c.l.b16 %v2555
  %v2624 = vunpack.c.l.b16 %v2556
  %v2625 = vpack.c.b16 %v2594, %v2593
  %v2626 = vpack.c.b16 %v2596, %v2595
  %v2627 = vpack.c.b16 %v2598, %v2597
  %v2628 = vpack.c.b16 %v2600, %v2599
  %v2629 = vpack.c.b16 %v2602, %v2601
  %v2630 = vpack.c.b16 %v2604, %v2603
  %v2631 = vpack.c.b16 %v2606, %v2605
  %v2632 = vpack.c.b16 %v2608, %v2607
  %v2633 = vpack.c.b16 %v2610, %v2609
  %v2634 = vpack.c.b16 %v2612, %v2611
  %v2635 = vpack.c.b16 %v2614, %v2613
  %v2636 = vpack.c.b16 %v2616, %v2615
  %v2637 = vpack.c.b16 %v2618, %v2617
  %v2638 = vpack.c.b16 %v2620, %v2619
  %v2639 = vpack.c.b16 %v2622, %v2621
  %v2640 = vpack.c.b16 %v2624, %v2623
  %2657 = vmatpush.bf16.msra.mxu0 %v2632
  %2658 = vmatpush.bf16.msra.mxu0 %v2631
  %2659 = vmatpush.bf16.msra.mxu0 %v2630
  %2660 = vmatpush.bf16.msra.mxu0 %v2629
  %2661 = vmatpush.bf16.msra.mxu0 %v2628
  %2662 = vmatpush.bf16.msra.mxu0 %v2627
  %2663 = vmatpush.bf16.msra.mxu0 %v2626
  %2664 = vmatpush.bf16.msra.mxu0 %v2625
  %2665 = vmatmul.bf16.gmra.mxu0 %v2523
  %v2666 = vpop.f32.mrf.mxu0
  %v2667 = vadd.f32 %v2559, %v2666
  %v2668 = vpop.f32.mrf.mxu0
  %2669 = vdwg.mxu0
  %2670 = vmatpush.bf16.msra.mxu0 %v2640
  %2671 = vmatpush.bf16.msra.mxu0 %v2639
  %2672 = vmatpush.bf16.msra.mxu0 %v2638
  %2673 = vmatpush.bf16.msra.mxu0 %v2637
  %2674 = vmatpush.bf16.msra.mxu0 %v2636
  %2675 = vmatpush.bf16.msra.mxu0 %v2635
  %2676 = vmatpush.bf16.msra.mxu0 %v2634
  %2677 = vmatpush.bf16.msra.mxu0 %v2633
  %2678 = vmatmul.bf16.gmra.mxu0 %v2524
  %v2679 = vpop.f32.mrf.mxu0
  %v2680 = vadd.f32 %v2667, %v2679
  %v2681 = vpop.f32.mrf.mxu0
  %2682 = vdwg.mxu0
  %vm2683 = vcmask 25600
  %2684 = vst.msk [vmem:[%s7] sm:$0x3] %vm2683, %v2680
  // Predicated region
  $region30: #{pointnet_encoder.4} parent=0 // pred_check
    _
  $region31: #{pointnet_encoder.4} parent=0 // pred_check_branch
    %2686 = sbr.rel (0) target = $region33
  $region32: #{pointnet_encoder.4} parent=0 // pred_region
    _
  $region33: #{pointnet_encoder.4} parent=0 // pred_fallthru
    _
  // Predicated region
  $region34: #{pointnet_encoder.4} parent=0 // pred_check
    _
  $region35: #{pointnet_encoder.4} parent=0 // pred_check_branch
    %2688 = sbr.rel (0) target = $region37
  $region36: #{pointnet_encoder.4} parent=0 // pred_region
    _
  $region37: #{pointnet_encoder.4} parent=0 // pred_fallthru
    _

</llo_original>
